<compile_context>
chip_gen: v6e
topology: v6e:2x2x1
jax: 0.10.0
libtpu: 0.0.40
codegen_flags: <defaults>
</compile_context>

<pallas_src>
import functools

import jax
import jax.numpy as jnp
from jax.experimental import pallas as pl
from jax.experimental.pallas import tpu as pltpu

_COMPUTE_DTYPE = jnp.bfloat16
_VMEM_LIMIT = 48 * 1024 * 1024   # <= v7x's 64 MiB physical; fine on v5e/v6e.


def _pick_row_tile(n_rows, n_batch, bytes_per_row, *, vmem_budget=8 << 20,
                   min_steps=8):
    """Largest even divisor of n_rows whose double-buffered tile fits the VMEM
    budget while still yielding >= min_steps grid steps (2 TCs on v7x)."""
    divs = [d for d in range(2, n_rows + 1, 2) if n_rows % d == 0]
    if not divs:
        return n_rows
    fits = [d for d in divs if 2 * d * bytes_per_row <= vmem_budget] or [divs[0]]
    good = [d for d in fits if n_batch * (n_rows // d) >= min_steps]
    return max(good) if good else max(fits)


# ----------------------------------------------------------------------------
# Kernel 1: fused Conv2d(3x3, pad=1) + folded BatchNorm affine + ELU
#           (9 in-kernel shifted dots — no HBM im2col)
# ----------------------------------------------------------------------------
def _conv3x3_affine_elu_kernel(xm_ref, xh_ref, w_ref, scale_ref, shift_ref,
                               o_ref, *, rows, width):
    # xm_ref: (1, rows, W+2, Cin)  body rows of the zero-padded input tile
    # xh_ref: (1, 2,    W+2, Cin)  2-row bottom halo for the 3x3 stencil
    # w_ref : (9, Cin, Cout)       taps, index = kh*3 + kw
    # scale/shift: (1, Cout) f32   conv-bias + BatchNorm(eval) folded affine
    # o_ref : (1, rows, W, Cout)
    x = jnp.concatenate([xm_ref[0], xh_ref[0]], axis=0)     # (rows+2, W+2, Cin)
    cin = x.shape[-1]
    cout = o_ref.shape[-1]
    acc = jnp.zeros((rows * width, cout), jnp.float32)
    for kh in range(3):                                      # in-kernel 3x3
        for kw in range(3):                                  # tap reduction
            xs = x[kh:kh + rows, kw:kw + width, :].reshape(rows * width, cin)
            acc += jnp.dot(xs, w_ref[kh * 3 + kw],
                           preferred_element_type=jnp.float32)
    y = acc * scale_ref[...] + shift_ref[...]
    # ELU(alpha=1); keep the minimum() guard so exp never overflows.
    y = jnp.where(y > 0.0, y, jnp.exp(jnp.minimum(y, 0.0)) - 1.0)
    o_ref[0] = y.reshape(rows, width, cout).astype(o_ref.dtype)


def conv3x3_bn_elu(xp, w_oihw, bias, gamma, beta, mean, var, *, eps=1e-5,
                   out_dtype=_COMPUTE_DTYPE):
    """Fused Conv2d(3x3, pad=1) + BatchNorm(eval) + ELU.
    xp: zero-padded NHWC input, shape (N, H+2, W+2, Cin)."""
    n, hp, wp, cin = xp.shape
    h, w = hp - 2, wp - 2
    cout = w_oihw.shape[0]
    xp = xp.astype(_COMPUTE_DTYPE)
    # (Cout, Cin, 3, 3) -> (kh, kw, Cin, Cout) -> (9, Cin, Cout), bf16 for MXU.
    w_taps = jnp.transpose(w_oihw, (2, 3, 1, 0)).reshape(9, cin, cout)
    w_taps = w_taps.astype(_COMPUTE_DTYPE)
    s = gamma / jnp.sqrt(var + eps)
    scale = s[None, :].astype(jnp.float32)
    shift = ((bias - mean) * s + beta)[None, :].astype(jnp.float32)

    bytes_per_row = 2 * (wp * cin + w * cout)                # bf16 in + out
    rows = _pick_row_tile(h, n, bytes_per_row)
    half = rows // 2
    kernel = functools.partial(_conv3x3_affine_elu_kernel, rows=rows, width=w)
    return pl.pallas_call(
        kernel,
        out_shape=jax.ShapeDtypeStruct((n, h, w, cout), out_dtype),
        grid=(n, h // rows),
        in_specs=[
            # body rows [t*rows, t*rows+rows) of the padded input
            pl.BlockSpec((1, rows, wp, cin), lambda b, t: (b, t, 0, 0)),
            # 2-row halo [t*rows+rows, t*rows+rows+2)
            pl.BlockSpec((1, 2, wp, cin), lambda b, t: (b, (t + 1) * half, 0, 0)),
            pl.BlockSpec((9, cin, cout), lambda b, t: (0, 0, 0)),
            pl.BlockSpec((1, cout), lambda b, t: (0, 0)),
            pl.BlockSpec((1, cout), lambda b, t: (0, 0)),
        ],
        out_specs=pl.BlockSpec((1, rows, w, cout), lambda b, t: (b, t, 0, 0)),
        compiler_params=pltpu.CompilerParams(
            dimension_semantics=("parallel", "parallel"),
            vmem_limit_bytes=_VMEM_LIMIT),
    )(xp, xp, w_taps, scale, shift)


# ----------------------------------------------------------------------------
# Kernel 2: ConvTranspose2d(kernel=2, stride=2) as a lane-packed matmul
# ----------------------------------------------------------------------------
def _conv_transpose_kernel(x_ref, w_ref, b_ref, o_ref, *, rows, width):
    # x_ref: (1, rows, W, Cin); w_ref: (Cin, 4*Cout) bf16; b_ref: (1, 4*Cout) f32
    # o_ref: (1, rows, W, 4*Cout)  — (kh, kw, co) phase-packed, lane-dense.
    x = x_ref[0].reshape(rows * width, x_ref.shape[-1])
    y = jnp.dot(x, w_ref[...], preferred_element_type=jnp.float32) + b_ref[...]
    o_ref[0] = y.reshape(rows, width, w_ref.shape[-1]).astype(o_ref.dtype)


def conv_transpose_2x2_s2(x, w_iohw, bias, *, out_dtype=_COMPUTE_DTYPE):
    """ConvTranspose2d(2, stride=2). The kernel emits a phase-packed
    (N, H, W, 4*Cout) slab; the stride-2 interleave to (N, 2H, 2W, Cout) is a
    cheap reshape/transpose fused by XLA into the following concat/pad pass."""
    n, h, w, cin = x.shape
    cout = w_iohw.shape[1]
    x = x.astype(_COMPUTE_DTYPE)
    # (Cin, Cout, 2, 2) -> (Cin, kh, kw, Cout) -> (Cin, 4*Cout)
    w_mat = jnp.transpose(w_iohw, (0, 2, 3, 1)).reshape(cin, 4 * cout)
    w_mat = w_mat.astype(_COMPUTE_DTYPE)
    b_packed = jnp.tile(bias, 4)[None, :].astype(jnp.float32)

    bytes_per_row = 2 * (w * cin + w * 4 * cout)
    rows = _pick_row_tile(h, n, bytes_per_row)
    kernel = functools.partial(_conv_transpose_kernel, rows=rows, width=w)
    y = pl.pallas_call(
        kernel,
        out_shape=jax.ShapeDtypeStruct((n, h, w, 4 * cout), out_dtype),
        grid=(n, h // rows),
        in_specs=[
            pl.BlockSpec((1, rows, w, cin), lambda b, t: (b, t, 0, 0)),
            pl.BlockSpec((cin, 4 * cout), lambda b, t: (0, 0)),
            pl.BlockSpec((1, 4 * cout), lambda b, t: (0, 0)),
        ],
        out_specs=pl.BlockSpec((1, rows, w, 4 * cout), lambda b, t: (b, t, 0, 0)),
        compiler_params=pltpu.CompilerParams(
            dimension_semantics=("parallel", "parallel"),
            vmem_limit_bytes=_VMEM_LIMIT),
    )(x, w_mat, b_packed)
    # phase-packed -> interleaved 2x upsample (pure layout; fused by XLA).
    y = y.reshape(n, h, w, 2, 2, cout).transpose(0, 1, 3, 2, 4, 5)
    return y.reshape(n, 2 * h, 2 * w, cout)


# ----------------------------------------------------------------------------
# The Up module (Pallas version)
# ----------------------------------------------------------------------------
class UpPallas:
    def __init__(self, in_channel, out_channel, dropout, key):
        self.in_c, self.out_c, self.dropout = in_channel, out_channel, dropout
        ks = jax.random.split(key, 14)
        f32 = jnp.float32

        def rnd(k, shp, s):
            return (jax.random.normal(k, shp) * s).astype(f32)

        # ConvTranspose2d(in_c, out_c, 2, stride=2): weight (Cin, Cout, 2, 2)
        self.wT = rnd(ks[0], (in_channel, out_channel, 2, 2), 0.1)
        self.bT = rnd(ks[1], (out_channel,), 0.05)
        # DoubleConv3 block 1: Conv2d(in_c, out_c, 3, pad=1) + BN
        self.wA = rnd(ks[2], (out_channel, in_channel, 3, 3), 0.1)
        self.bA = rnd(ks[3], (out_channel,), 0.05)
        self.gA = 1.0 + rnd(ks[4], (out_channel,), 0.1)
        self.btA = rnd(ks[5], (out_channel,), 0.05)
        self.mA = rnd(ks[6], (out_channel,), 0.05)
        self.vA = 1.0 + jnp.abs(rnd(ks[7], (out_channel,), 0.1))
        # DoubleConv3 block 2: Conv2d(out_c, out_c, 3, pad=1) + BN
        self.wB = rnd(ks[8], (out_channel, out_channel, 3, 3), 0.1)
        self.bB = rnd(ks[9], (out_channel,), 0.05)
        self.gB = 1.0 + rnd(ks[10], (out_channel,), 0.1)
        self.btB = rnd(ks[11], (out_channel,), 0.05)
        self.mB = rnd(ks[12], (out_channel,), 0.05)
        self.vB = 1.0 + jnp.abs(rnd(ks[13], (out_channel,), 0.1))

        self._fwd = jax.jit(self._forward)

    def _forward(self, x1, x2):
        # 1) 2x transposed-conv upsample of x1 (Pallas kernel + layout glue).
        up = conv_transpose_2x2_s2(x1, self.wT, self.bT)          # bf16
        n, h2, w2, cout = up.shape
        # 2+3) center-crop x2, concat [x2, up] on channels and zero-pad H/W by
        #      1 — folded into one XLA pass that writes the padded conv input.
        xy1 = (x2.shape[1] - h2) // 2
        x2c = x2[:, xy1:xy1 + h2, xy1:xy1 + h2, :].astype(_COMPUTE_DTYPE)
        c2 = x2c.shape[-1]
        xcat = jnp.zeros((n, h2 + 2, w2 + 2, c2 + cout), _COMPUTE_DTYPE)
        xcat = xcat.at[:, 1:h2 + 1, 1:w2 + 1, :c2].set(x2c)
        xcat = xcat.at[:, 1:h2 + 1, 1:w2 + 1, c2:].set(up)
        # 4) DoubleConv3: two fused conv+BN+ELU kernels (Dropout2d = identity
        #    in eval mode).
        y = conv3x3_bn_elu(xcat, self.wA, self.bA, self.gA, self.btA,
                           self.mA, self.vA, out_dtype=_COMPUTE_DTYPE)
        yp = jnp.pad(y, ((0, 0), (1, 1), (1, 1), (0, 0)))
        return conv3x3_bn_elu(yp, self.wB, self.bB, self.gB, self.btB,
                              self.mB, self.vB, out_dtype=jnp.float32)

    def __call__(self, x1, x2):
        return self._fwd(x1, x2)


# ----------------------------------------------------------------------------
# Pure-JAX references (independent of the kernel path)
# ----------------------------------------------------------------------------
def _elu(x):
    return jnp.where(x > 0.0, x, jnp.exp(jnp.minimum(x, 0.0)) - 1.0)


def _ref_forward(m, x1, x2, compute_dtype=jnp.float32):
    """With compute_dtype=float32: exact module semantics.
    With bfloat16: mirrors the kernel path's operand dtypes (bf16 operands,
    f32 accumulation) for a tight structural check."""
    cd = compute_dtype
    n, h, w, _ = x1.shape
    cout = m.out_c
    up = jnp.einsum('nijc,cokl->nikjlo', x1.astype(cd), m.wT.astype(cd),
                    preferred_element_type=jnp.float32)
    up = (up.reshape(n, 2 * h, 2 * w, cout) + m.bT).astype(cd)
    ts = up.shape[1]
    xy1 = (x2.shape[1] - ts) // 2
    x2c = x2[:, xy1:xy1 + ts, xy1:xy1 + ts, :].astype(cd)
    x = jnp.concatenate([x2c, up], axis=-1)

    def block(x, wgt, b, g, bt, mu, var, out_dtype):
        y = jax.lax.conv_general_dilated(
            x, jnp.transpose(wgt, (2, 3, 1, 0)).astype(cd),
            window_strides=(1, 1), padding=((1, 1), (1, 1)),
            dimension_numbers=('NHWC', 'HWIO', 'NHWC'),
            preferred_element_type=jnp.float32) + b
        y = (y - mu) / jnp.sqrt(var + 1e-5) * g + bt
        return _elu(y).astype(out_dtype)

    x = block(x, m.wA, m.bA, m.gA, m.btA, m.mA, m.vA, cd)
    return block(x, m.wB, m.bB, m.gB, m.btB, m.mB, m.vB, jnp.float32)


if __name__ == "__main__":
    key = jax.random.PRNGKey(0)
    k1, k2, kp = jax.random.split(key, 3)

    in_channel, out_channel, dropout = 8, 4, 0.1
    n, h1 = 2, 8                       # x1 spatial 8 -> upsampled to 16
    x1 = jax.random.normal(k1, (n, h1, h1, in_channel), jnp.float32)
    x2 = jax.random.normal(
        k2, (n, 2 * h1 + 2, 2 * h1 + 2, in_channel - out_channel), jnp.float32)

    up_mod = UpPallas(in_channel, out_channel, dropout, kp)
    out = jax.block_until_ready(up_mod(x1, x2))
    assert out.shape == (n, 2 * h1, 2 * h1, out_channel), out.shape

    # Tight structural check vs a dtype-matched (bf16-operand) reference.
    ref_bf16 = _ref_forward(up_mod, x1, x2, jnp.bfloat16)
    err_bf16 = float(jnp.max(jnp.abs(out - ref_bf16)))
    assert err_bf16 < 5e-3, f"kernel vs dtype-matched reference: {err_bf16}"

    # End-to-end check vs exact f32 semantics (tolerance limited by bf16 ops).
    ref_f32 = _ref_forward(up_mod, x1, x2, jnp.float32)
    err_f32 = float(jnp.max(jnp.abs(out - ref_f32)))
    assert err_f32 < 5e-2, f"kernel vs f32 reference: {err_f32}"

    print("KERNEL_OK")
</pallas_src>

<mosaic_0001>
module attributes {stable_mosaic.version = 11 : i64} {
  func.func @_conv_transpose_kernel(%arg0: i32, %arg1: i32, %arg2: memref<1x2x8x8xbf16, #tpu.memory_space<vmem>>, %arg3: memref<8x16xbf16, #tpu.memory_space<vmem>>, %arg4: memref<1x16xf32, #tpu.memory_space<vmem>>, %arg5: memref<1x2x8x16xbf16, #tpu.memory_space<vmem>>) attributes {dimension_semantics = [#tpu.dimension_semantics<parallel>, #tpu.dimension_semantics<parallel>], iteration_bounds = array<i64: 2, 4>, scalar_prefetch = 0 : i64, scratch_operands = 0 : i64, tpu.core_type = #tpu.core_type<tc>, window_params = [{transform_indices = @transform_0, window_bounds = array<i64: 1, 2, 8, 8>}, {pipeline_mode = #tpu.pipeline_mode<synchronous>, transform_indices = @transform_1, window_bounds = array<i64: 8, 16>}, {pipeline_mode = #tpu.pipeline_mode<synchronous>, transform_indices = @transform_2, window_bounds = array<i64: 1, 16>}, {transform_indices = @transform_3, window_bounds = array<i64: 1, 2, 8, 16>}]} {
    %c0 = arith.constant 0 : index
    %c0_0 = arith.constant 0 : index
    %c0_1 = arith.constant 0 : index
    %c0_2 = arith.constant 0 : index
    %0 = vector.load %arg2[%c0, %c0_0, %c0_1, %c0_2] : memref<1x2x8x8xbf16, #tpu.memory_space<vmem>>, vector<1x2x8x8xbf16>
    %1 = vector.shape_cast %0 : vector<1x2x8x8xbf16> to vector<2x8x8xbf16>
    %2 = vector.shape_cast %1 : vector<2x8x8xbf16> to vector<16x8xbf16>
    %c0_3 = arith.constant 0 : index
    %c0_4 = arith.constant 0 : index
    %3 = vector.load %arg3[%c0_3, %c0_4] : memref<8x16xbf16, #tpu.memory_space<vmem>>, vector<8x16xbf16>
    %cst = arith.constant dense<0.000000e+00> : vector<16x16xf32>
    %4 = tpu.matmul %2, %3, %cst {dimension_numbers = #tpu.dot_dimension_numbers<[1], [0], [0], [1], [0, 0, 1, 1], [], []>} : vector<16x8xbf16>, vector<8x16xbf16>, vector<16x16xf32> -> vector<16x16xf32>
    %c0_5 = arith.constant 0 : index
    %c0_6 = arith.constant 0 : index
    %5 = vector.load %arg4[%c0_5, %c0_6] : memref<1x16xf32, #tpu.memory_space<vmem>>, vector<1x16xf32>
    %6 = vector.broadcast %5 : vector<1x16xf32> to vector<16x16xf32>
    %7 = arith.addf %4, %6 : vector<16x16xf32>
    %8 = vector.shape_cast %7 : vector<16x16xf32> to vector<2x8x16xf32>
    %9 = arith.truncf %8 : vector<2x8x16xf32> to vector<2x8x16xbf16>
    %c0_7 = arith.constant 0 : index
    %c0_8 = arith.constant 0 : index
    %c0_9 = arith.constant 0 : index
    %c0_10 = arith.constant 0 : index
    %10 = vector.load %arg5[%c0_7, %c0_8, %c0_9, %c0_10] : memref<1x2x8x16xbf16, #tpu.memory_space<vmem>>, vector<1x2x8x16xbf16>
    %11 = vector.shape_cast %10 : vector<1x2x8x16xbf16> to vector<2x8x16xbf16>
    %12 = vector.shape_cast %9 : vector<2x8x16xbf16> to vector<1x2x8x16xbf16>
    tpu.vector_store %arg5[%c0_7, %c0_8, %c0_9, %c0_10], %12 {strides = array<i32>} : memref<1x2x8x16xbf16, #tpu.memory_space<vmem>>, vector<1x2x8x16xbf16>,
    return
  }
  func.func @transform_0(%arg0: i32, %arg1: i32) -> (i32, i32, i32, i32) {
    %c0_i32 = arith.constant 0 : i32
    %c0_i32_0 = arith.constant 0 : i32
    %c0_i32_1 = arith.constant 0 : i32
    return %arg0, %arg1, %c0_i32, %c0_i32_0 : i32, i32, i32, i32
  }
  func.func @transform_1(%arg0: i32, %arg1: i32) -> (i32, i32) {
    %c0_i32 = arith.constant 0 : i32
    %c0_i32_0 = arith.constant 0 : i32
    %c0_i32_1 = arith.constant 0 : i32
    return %c0_i32, %c0_i32_0 : i32, i32
  }
  func.func @transform_2(%arg0: i32, %arg1: i32) -> (i32, i32) {
    %c0_i32 = arith.constant 0 : i32
    %c0_i32_0 = arith.constant 0 : i32
    %c0_i32_1 = arith.constant 0 : i32
    return %c0_i32, %c0_i32_0 : i32, i32
  }
  func.func @transform_3(%arg0: i32, %arg1: i32) -> (i32, i32, i32, i32) {
    %c0_i32 = arith.constant 0 : i32
    %c0_i32_0 = arith.constant 0 : i32
    %c0_i32_1 = arith.constant 0 : i32
    return %arg0, %arg1, %c0_i32, %c0_i32_0 : i32, i32, i32, i32
  }
}

module attributes {stable_mosaic.version = 11 : i64} {
  func.func @_conv3x3_affine_elu_kernel(%arg0: i32, %arg1: i32, %arg2: memref<1x4x18x8xbf16, #tpu.memory_space<vmem>>, %arg3: memref<1x2x18x8xbf16, #tpu.memory_space<vmem>>, %arg4: memref<9x8x4xbf16, #tpu.memory_space<vmem>>, %arg5: memref<1x4xf32, #tpu.memory_space<vmem>>, %arg6: memref<1x4xf32, #tpu.memory_space<vmem>>, %arg7: memref<1x4x16x4xbf16, #tpu.memory_space<vmem>>) attributes {dimension_semantics = [#tpu.dimension_semantics<parallel>, #tpu.dimension_semantics<parallel>], iteration_bounds = array<i64: 2, 4>, scalar_prefetch = 0 : i64, scratch_operands = 0 : i64, tpu.core_type = #tpu.core_type<tc>, window_params = [{transform_indices = @transform_0, window_bounds = array<i64: 1, 4, 18, 8>}, {transform_indices = @transform_1, window_bounds = array<i64: 1, 2, 18, 8>}, {pipeline_mode = #tpu.pipeline_mode<synchronous>, transform_indices = @transform_2, window_bounds = array<i64: 9, 8, 4>}, {pipeline_mode = #tpu.pipeline_mode<synchronous>, transform_indices = @transform_3, window_bounds = array<i64: 1, 4>}, {pipeline_mode = #tpu.pipeline_mode<synchronous>, transform_indices = @transform_4, window_bounds = array<i64: 1, 4>}, {transform_indices = @transform_5, window_bounds = array<i64: 1, 4, 16, 4>}]} {
    %c0 = arith.constant 0 : index
    %c0_0 = arith.constant 0 : index
    %c0_1 = arith.constant 0 : index
    %c0_2 = arith.constant 0 : index
    %0 = vector.load %arg2[%c0, %c0_0, %c0_1, %c0_2] : memref<1x4x18x8xbf16, #tpu.memory_space<vmem>>, vector<1x4x18x8xbf16>
    %1 = vector.shape_cast %0 : vector<1x4x18x8xbf16> to vector<4x18x8xbf16>
    %c0_3 = arith.constant 0 : index
    %c0_4 = arith.constant 0 : index
    %c0_5 = arith.constant 0 : index
    %c0_6 = arith.constant 0 : index
    %2 = vector.load %arg3[%c0_3, %c0_4, %c0_5, %c0_6] : memref<1x2x18x8xbf16, #tpu.memory_space<vmem>>, vector<1x2x18x8xbf16>
    %3 = vector.shape_cast %2 : vector<1x2x18x8xbf16> to vector<2x18x8xbf16>
    %4 = tpu.concatenate %1, %3 in 0 : vector<4x18x8xbf16>, vector<2x18x8xbf16> -> vector<6x18x8xbf16>
    %cst = arith.constant 0.000000e+00 : f32
    %5 = vector.broadcast %cst : f32 to vector<64x4xf32>
    %6 = vector.extract_strided_slice %4 {offsets = [0, 0, 0], sizes = [4, 16, 8], strides = [1, 1, 1]} : vector<6x18x8xbf16> to vector<4x16x8xbf16>
    %7 = vector.shape_cast %6 : vector<4x16x8xbf16> to vector<64x8xbf16>
    %c0_7 = arith.constant 0 : index
    %c0_8 = arith.constant 0 : index
    %c0_9 = arith.constant 0 : index
    %8 = vector.load %arg4[%c0_7, %c0_8, %c0_9] : memref<9x8x4xbf16, #tpu.memory_space<vmem>>, vector<1x8x4xbf16>
    %9 = vector.shape_cast %8 : vector<1x8x4xbf16> to vector<8x4xbf16>
    %cst_10 = arith.constant dense<0.000000e+00> : vector<64x4xf32>
    %10 = tpu.matmul %7, %9, %cst_10 {dimension_numbers = #tpu.dot_dimension_numbers<[1], [0], [0], [1], [0, 0, 1, 1], [], []>} : vector<64x8xbf16>, vector<8x4xbf16>, vector<64x4xf32> -> vector<64x4xf32>
    %11 = arith.addf %5, %10 : vector<64x4xf32>
    %12 = vector.extract_strided_slice %4 {offsets = [0, 1, 0], sizes = [4, 16, 8], strides = [1, 1, 1]} : vector<6x18x8xbf16> to vector<4x16x8xbf16>
    %13 = vector.shape_cast %12 : vector<4x16x8xbf16> to vector<64x8xbf16>
    %c1 = arith.constant 1 : index
    %c0_11 = arith.constant 0 : index
    %c0_12 = arith.constant 0 : index
    %14 = vector.load %arg4[%c1, %c0_11, %c0_12] : memref<9x8x4xbf16, #tpu.memory_space<vmem>>, vector<1x8x4xbf16>
    %15 = vector.shape_cast %14 : vector<1x8x4xbf16> to vector<8x4xbf16>
    %cst_13 = arith.constant dense<0.000000e+00> : vector<64x4xf32>
    %16 = tpu.matmul %13, %15, %cst_13 {dimension_numbers = #tpu.dot_dimension_numbers<[1], [0], [0], [1], [0, 0, 1, 1], [], []>} : vector<64x8xbf16>, vector<8x4xbf16>, vector<64x4xf32> -> vector<64x4xf32>
    %17 = arith.addf %11, %16 : vector<64x4xf32>
    %18 = vector.extract_strided_slice %4 {offsets = [0, 2, 0], sizes = [4, 16, 8], strides = [1, 1, 1]} : vector<6x18x8xbf16> to vector<4x16x8xbf16>
    %19 = vector.shape_cast %18 : vector<4x16x8xbf16> to vector<64x8xbf16>
    %c2 = arith.constant 2 : index
    %c0_14 = arith.constant 0 : index
    %c0_15 = arith.constant 0 : index
    %20 = vector.load %arg4[%c2, %c0_14, %c0_15] : memref<9x8x4xbf16, #tpu.memory_space<vmem>>, vector<1x8x4xbf16>
    %21 = vector.shape_cast %20 : vector<1x8x4xbf16> to vector<8x4xbf16>
    %cst_16 = arith.constant dense<0.000000e+00> : vector<64x4xf32>
    %22 = tpu.matmul %19, %21, %cst_16 {dimension_numbers = #tpu.dot_dimension_numbers<[1], [0], [0], [1], [0, 0, 1, 1], [], []>} : vector<64x8xbf16>, vector<8x4xbf16>, vector<64x4xf32> -> vector<64x4xf32>
    %23 = arith.addf %17, %22 : vector<64x4xf32>
    %24 = vector.extract_strided_slice %4 {offsets = [1, 0, 0], sizes = [4, 16, 8], strides = [1, 1, 1]} : vector<6x18x8xbf16> to vector<4x16x8xbf16>
    %25 = vector.shape_cast %24 : vector<4x16x8xbf16> to vector<64x8xbf16>
    %c3 = arith.constant 3 : index
    %c0_17 = arith.constant 0 : index
    %c0_18 = arith.constant 0 : index
    %26 = vector.load %arg4[%c3, %c0_17, %c0_18] : memref<9x8x4xbf16, #tpu.memory_space<vmem>>, vector<1x8x4xbf16>
    %27 = vector.shape_cast %26 : vector<1x8x4xbf16> to vector<8x4xbf16>
    %cst_19 = arith.constant dense<0.000000e+00> : vector<64x4xf32>
    %28 = tpu.matmul %25, %27, %cst_19 {dimension_numbers = #tpu.dot_dimension_numbers<[1], [0], [0], [1], [0, 0, 1, 1], [], []>} : vector<64x8xbf16>, vector<8x4xbf16>, vector<64x4xf32> -> vector<64x4xf32>
    %29 = arith.addf %23, %28 : vector<64x4xf32>
    %30 = vector.extract_strided_slice %4 {offsets = [1, 1, 0], sizes = [4, 16, 8], strides = [1, 1, 1]} : vector<6x18x8xbf16> to vector<4x16x8xbf16>
    %31 = vector.shape_cast %30 : vector<4x16x8xbf16> to vector<64x8xbf16>
    %c4 = arith.constant 4 : index
    %c0_20 = arith.constant 0 : index
    %c0_21 = arith.constant 0 : index
    %32 = vector.load %arg4[%c4, %c0_20, %c0_21] : memref<9x8x4xbf16, #tpu.memory_space<vmem>>, vector<1x8x4xbf16>
    %33 = vector.shape_cast %32 : vector<1x8x4xbf16> to vector<8x4xbf16>
    %cst_22 = arith.constant dense<0.000000e+00> : vector<64x4xf32>
    %34 = tpu.matmul %31, %33, %cst_22 {dimension_numbers = #tpu.dot_dimension_numbers<[1], [0], [0], [1], [0, 0, 1, 1], [], []>} : vector<64x8xbf16>, vector<8x4xbf16>, vector<64x4xf32> -> vector<64x4xf32>
    %35 = arith.addf %29, %34 : vector<64x4xf32>
    %36 = vector.extract_strided_slice %4 {offsets = [1, 2, 0], sizes = [4, 16, 8], strides = [1, 1, 1]} : vector<6x18x8xbf16> to vector<4x16x8xbf16>
    %37 = vector.shape_cast %36 : vector<4x16x8xbf16> to vector<64x8xbf16>
    %c5 = arith.constant 5 : index
    %c0_23 = arith.constant 0 : index
    %c0_24 = arith.constant 0 : index
    %38 = vector.load %arg4[%c5, %c0_23, %c0_24] : memref<9x8x4xbf16, #tpu.memory_space<vmem>>, vector<1x8x4xbf16>
    %39 = vector.shape_cast %38 : vector<1x8x4xbf16> to vector<8x4xbf16>
    %cst_25 = arith.constant dense<0.000000e+00> : vector<64x4xf32>
    %40 = tpu.matmul %37, %39, %cst_25 {dimension_numbers = #tpu.dot_dimension_numbers<[1], [0], [0], [1], [0, 0, 1, 1], [], []>} : vector<64x8xbf16>, vector<8x4xbf16>, vector<64x4xf32> -> vector<64x4xf32>
    %41 = arith.addf %35, %40 : vector<64x4xf32>
    %42 = vector.extract_strided_slice %4 {offsets = [2, 0, 0], sizes = [4, 16, 8], strides = [1, 1, 1]} : vector<6x18x8xbf16> to vector<4x16x8xbf16>
    %43 = vector.shape_cast %42 : vector<4x16x8xbf16> to vector<64x8xbf16>
    %c6 = arith.constant 6 : index
    %c0_26 = arith.constant 0 : index
    %c0_27 = arith.constant 0 : index
    %44 = vector.load %arg4[%c6, %c0_26, %c0_27] : memref<9x8x4xbf16, #tpu.memory_space<vmem>>, vector<1x8x4xbf16>
    %45 = vector.shape_cast %44 : vector<1x8x4xbf16> to vector<8x4xbf16>
    %cst_28 = arith.constant dense<0.000000e+00> : vector<64x4xf32>
    %46 = tpu.matmul %43, %45, %cst_28 {dimension_numbers = #tpu.dot_dimension_numbers<[1], [0], [0], [1], [0, 0, 1, 1], [], []>} : vector<64x8xbf16>, vector<8x4xbf16>, vector<64x4xf32> -> vector<64x4xf32>
    %47 = arith.addf %41, %46 : vector<64x4xf32>
    %48 = vector.extract_strided_slice %4 {offsets = [2, 1, 0], sizes = [4, 16, 8], strides = [1, 1, 1]} : vector<6x18x8xbf16> to vector<4x16x8xbf16>
    %49 = vector.shape_cast %48 : vector<4x16x8xbf16> to vector<64x8xbf16>
    %c7 = arith.constant 7 : index
    %c0_29 = arith.constant 0 : index
    %c0_30 = arith.constant 0 : index
    %50 = vector.load %arg4[%c7, %c0_29, %c0_30] : memref<9x8x4xbf16, #tpu.memory_space<vmem>>, vector<1x8x4xbf16>
    %51 = vector.shape_cast %50 : vector<1x8x4xbf16> to vector<8x4xbf16>
    %cst_31 = arith.constant dense<0.000000e+00> : vector<64x4xf32>
    %52 = tpu.matmul %49, %51, %cst_31 {dimension_numbers = #tpu.dot_dimension_numbers<[1], [0], [0], [1], [0, 0, 1, 1], [], []>} : vector<64x8xbf16>, vector<8x4xbf16>, vector<64x4xf32> -> vector<64x4xf32>
    %53 = arith.addf %47, %52 : vector<64x4xf32>
    %54 = vector.extract_strided_slice %4 {offsets = [2, 2, 0], sizes = [4, 16, 8], strides = [1, 1, 1]} : vector<6x18x8xbf16> to vector<4x16x8xbf16>
    %55 = vector.shape_cast %54 : vector<4x16x8xbf16> to vector<64x8xbf16>
    %c8 = arith.constant 8 : index
    %c0_32 = arith.constant 0 : index
    %c0_33 = arith.constant 0 : index
    %56 = vector.load %arg4[%c8, %c0_32, %c0_33] : memref<9x8x4xbf16, #tpu.memory_space<vmem>>, vector<1x8x4xbf16>
    %57 = vector.shape_cast %56 : vector<1x8x4xbf16> to vector<8x4xbf16>
    %cst_34 = arith.constant dense<0.000000e+00> : vector<64x4xf32>
    %58 = tpu.matmul %55, %57, %cst_34 {dimension_numbers = #tpu.dot_dimension_numbers<[1], [0], [0], [1], [0, 0, 1, 1], [], []>} : vector<64x8xbf16>, vector<8x4xbf16>, vector<64x4xf32> -> vector<64x4xf32>
    %59 = arith.addf %53, %58 : vector<64x4xf32>
    %c0_35 = arith.constant 0 : index
    %c0_36 = arith.constant 0 : index
    %60 = vector.load %arg5[%c0_35, %c0_36] : memref<1x4xf32, #tpu.memory_space<vmem>>, vector<1x4xf32>
    %61 = vector.broadcast %60 : vector<1x4xf32> to vector<64x4xf32>
    %62 = arith.mulf %59, %61 : vector<64x4xf32>
    %c0_37 = arith.constant 0 : index
    %c0_38 = arith.constant 0 : index
    %63 = vector.load %arg6[%c0_37, %c0_38] : memref<1x4xf32, #tpu.memory_space<vmem>>, vector<1x4xf32>
    %64 = vector.broadcast %63 : vector<1x4xf32> to vector<64x4xf32>
    %65 = arith.addf %62, %64 : vector<64x4xf32>
    %cst_39 = arith.constant 0.000000e+00 : f32
    %66 = vector.broadcast %cst_39 : f32 to vector<64x4xf32>
    %67 = arith.cmpf ogt, %65, %66 : vector<64x4xf32>
    %cst_40 = arith.constant 0.000000e+00 : f32
    %68 = vector.broadcast %cst_40 : f32 to vector<64x4xf32>
    %69 = arith.minimumf %65, %68 : vector<64x4xf32>
    %70 = math.exp %69 : vector<64x4xf32>
    %cst_41 = arith.constant 1.000000e+00 : f32
    %71 = vector.broadcast %cst_41 : f32 to vector<64x4xf32>
    %72 = arith.subf %70, %71 : vector<64x4xf32>
    %73 = arith.select %67, %65, %72 : vector<64x4xi1>, vector<64x4xf32>
    %74 = vector.shape_cast %73 : vector<64x4xf32> to vector<4x16x4xf32>
    %75 = arith.truncf %74 : vector<4x16x4xf32> to vector<4x16x4xbf16>
    %c0_42 = arith.constant 0 : index
    %c0_43 = arith.constant 0 : index
    %c0_44 = arith.constant 0 : index
    %c0_45 = arith.constant 0 : index
    %76 = vector.load %arg7[%c0_42, %c0_43, %c0_44, %c0_45] : memref<1x4x16x4xbf16, #tpu.memory_space<vmem>>, vector<1x4x16x4xbf16>
    %77 = vector.shape_cast %76 : vector<1x4x16x4xbf16> to vector<4x16x4xbf16>
    %78 = vector.shape_cast %75 : vector<4x16x4xbf16> to vector<1x4x16x4xbf16>
    tpu.vector_store %arg7[%c0_42, %c0_43, %c0_44, %c0_45], %78 {strides = array<i32>} : memref<1x4x16x4xbf16, #tpu.memory_space<vmem>>, vector<1x4x16x4xbf16>,
    return
  }
  func.func @transform_0(%arg0: i32, %arg1: i32) -> (i32, i32, i32, i32) {
    %c0_i32 = arith.constant 0 : i32
    %c0_i32_0 = arith.constant 0 : i32
    %c0_i32_1 = arith.constant 0 : i32
    return %arg0, %arg1, %c0_i32, %c0_i32_0 : i32, i32, i32, i32
  }
  func.func @transform_1(%arg0: i32, %arg1: i32) -> (i32, i32, i32, i32) {
    %c1_i32 = arith.constant 1 : i32
    %0 = arith.addi %arg1, %c1_i32 : i32
    %c2_i32 = arith.constant 2 : i32
    %1 = arith.muli %0, %c2_i32 : i32
    %c0_i32 = arith.constant 0 : i32
    %c0_i32_0 = arith.constant 0 : i32
    %c0_i32_1 = arith.constant 0 : i32
    return %arg0, %1, %c0_i32, %c0_i32_0 : i32, i32, i32, i32
  }
  func.func @transform_2(%arg0: i32, %arg1: i32) -> (i32, i32, i32) {
    %c0_i32 = arith.constant 0 : i32
    %c0_i32_0 = arith.constant 0 : i32
    %c0_i32_1 = arith.constant 0 : i32
    %c0_i32_2 = arith.constant 0 : i32
    return %c0_i32, %c0_i32_0, %c0_i32_1 : i32, i32, i32
  }
  func.func @transform_3(%arg0: i32, %arg1: i32) -> (i32, i32) {
    %c0_i32 = arith.constant 0 : i32
    %c0_i32_0 = arith.constant 0 : i32
    %c0_i32_1 = arith.constant 0 : i32
    return %c0_i32, %c0_i32_0 : i32, i32
  }
  func.func @transform_4(%arg0: i32, %arg1: i32) -> (i32, i32) {
    %c0_i32 = arith.constant 0 : i32
    %c0_i32_0 = arith.constant 0 : i32
    %c0_i32_1 = arith.constant 0 : i32
    return %c0_i32, %c0_i32_0 : i32, i32
  }
  func.func @transform_5(%arg0: i32, %arg1: i32) -> (i32, i32, i32, i32) {
    %c0_i32 = arith.constant 0 : i32
    %c0_i32_0 = arith.constant 0 : i32
    %c0_i32_1 = arith.constant 0 : i32
    return %arg0, %arg1, %c0_i32, %c0_i32_0 : i32, i32, i32, i32
  }
}

module attributes {stable_mosaic.version = 11 : i64} {
  func.func @_conv3x3_affine_elu_kernel(%arg0: i32, %arg1: i32, %arg2: memref<1x4x18x4xbf16, #tpu.memory_space<vmem>>, %arg3: memref<1x2x18x4xbf16, #tpu.memory_space<vmem>>, %arg4: memref<9x4x4xbf16, #tpu.memory_space<vmem>>, %arg5: memref<1x4xf32, #tpu.memory_space<vmem>>, %arg6: memref<1x4xf32, #tpu.memory_space<vmem>>, %arg7: memref<1x4x16x4xf32, #tpu.memory_space<vmem>>) attributes {dimension_semantics = [#tpu.dimension_semantics<parallel>, #tpu.dimension_semantics<parallel>], iteration_bounds = array<i64: 2, 4>, scalar_prefetch = 0 : i64, scratch_operands = 0 : i64, tpu.core_type = #tpu.core_type<tc>, window_params = [{transform_indices = @transform_0, window_bounds = array<i64: 1, 4, 18, 4>}, {transform_indices = @transform_1, window_bounds = array<i64: 1, 2, 18, 4>}, {pipeline_mode = #tpu.pipeline_mode<synchronous>, transform_indices = @transform_2, window_bounds = array<i64: 9, 4, 4>}, {pipeline_mode = #tpu.pipeline_mode<synchronous>, transform_indices = @transform_3, window_bounds = array<i64: 1, 4>}, {pipeline_mode = #tpu.pipeline_mode<synchronous>, transform_indices = @transform_4, window_bounds = array<i64: 1, 4>}, {transform_indices = @transform_5, window_bounds = array<i64: 1, 4, 16, 4>}]} {
    %c0 = arith.constant 0 : index
    %c0_0 = arith.constant 0 : index
    %c0_1 = arith.constant 0 : index
    %c0_2 = arith.constant 0 : index
    %0 = vector.load %arg2[%c0, %c0_0, %c0_1, %c0_2] : memref<1x4x18x4xbf16, #tpu.memory_space<vmem>>, vector<1x4x18x4xbf16>
    %1 = vector.shape_cast %0 : vector<1x4x18x4xbf16> to vector<4x18x4xbf16>
    %c0_3 = arith.constant 0 : index
    %c0_4 = arith.constant 0 : index
    %c0_5 = arith.constant 0 : index
    %c0_6 = arith.constant 0 : index
    %2 = vector.load %arg3[%c0_3, %c0_4, %c0_5, %c0_6] : memref<1x2x18x4xbf16, #tpu.memory_space<vmem>>, vector<1x2x18x4xbf16>
    %3 = vector.shape_cast %2 : vector<1x2x18x4xbf16> to vector<2x18x4xbf16>
    %4 = tpu.concatenate %1, %3 in 0 : vector<4x18x4xbf16>, vector<2x18x4xbf16> -> vector<6x18x4xbf16>
    %cst = arith.constant 0.000000e+00 : f32
    %5 = vector.broadcast %cst : f32 to vector<64x4xf32>
    %6 = vector.extract_strided_slice %4 {offsets = [0, 0, 0], sizes = [4, 16, 4], strides = [1, 1, 1]} : vector<6x18x4xbf16> to vector<4x16x4xbf16>
    %7 = vector.shape_cast %6 : vector<4x16x4xbf16> to vector<64x4xbf16>
    %c0_7 = arith.constant 0 : index
    %c0_8 = arith.constant 0 : index
    %c0_9 = arith.constant 0 : index
    %8 = vector.load %arg4[%c0_7, %c0_8, %c0_9] : memref<9x4x4xbf16, #tpu.memory_space<vmem>>, vector<1x4x4xbf16>
    %9 = vector.shape_cast %8 : vector<1x4x4xbf16> to vector<4x4xbf16>
    %cst_10 = arith.constant dense<0.000000e+00> : vector<64x4xf32>
    %10 = tpu.matmul %7, %9, %cst_10 {dimension_numbers = #tpu.dot_dimension_numbers<[1], [0], [0], [1], [0, 0, 1, 1], [], []>} : vector<64x4xbf16>, vector<4x4xbf16>, vector<64x4xf32> -> vector<64x4xf32>
    %11 = arith.addf %5, %10 : vector<64x4xf32>
    %12 = vector.extract_strided_slice %4 {offsets = [0, 1, 0], sizes = [4, 16, 4], strides = [1, 1, 1]} : vector<6x18x4xbf16> to vector<4x16x4xbf16>
    %13 = vector.shape_cast %12 : vector<4x16x4xbf16> to vector<64x4xbf16>
    %c1 = arith.constant 1 : index
    %c0_11 = arith.constant 0 : index
    %c0_12 = arith.constant 0 : index
    %14 = vector.load %arg4[%c1, %c0_11, %c0_12] : memref<9x4x4xbf16, #tpu.memory_space<vmem>>, vector<1x4x4xbf16>
    %15 = vector.shape_cast %14 : vector<1x4x4xbf16> to vector<4x4xbf16>
    %cst_13 = arith.constant dense<0.000000e+00> : vector<64x4xf32>
    %16 = tpu.matmul %13, %15, %cst_13 {dimension_numbers = #tpu.dot_dimension_numbers<[1], [0], [0], [1], [0, 0, 1, 1], [], []>} : vector<64x4xbf16>, vector<4x4xbf16>, vector<64x4xf32> -> vector<64x4xf32>
    %17 = arith.addf %11, %16 : vector<64x4xf32>
    %18 = vector.extract_strided_slice %4 {offsets = [0, 2, 0], sizes = [4, 16, 4], strides = [1, 1, 1]} : vector<6x18x4xbf16> to vector<4x16x4xbf16>
    %19 = vector.shape_cast %18 : vector<4x16x4xbf16> to vector<64x4xbf16>
    %c2 = arith.constant 2 : index
    %c0_14 = arith.constant 0 : index
    %c0_15 = arith.constant 0 : index
    %20 = vector.load %arg4[%c2, %c0_14, %c0_15] : memref<9x4x4xbf16, #tpu.memory_space<vmem>>, vector<1x4x4xbf16>
    %21 = vector.shape_cast %20 : vector<1x4x4xbf16> to vector<4x4xbf16>
    %cst_16 = arith.constant dense<0.000000e+00> : vector<64x4xf32>
    %22 = tpu.matmul %19, %21, %cst_16 {dimension_numbers = #tpu.dot_dimension_numbers<[1], [0], [0], [1], [0, 0, 1, 1], [], []>} : vector<64x4xbf16>, vector<4x4xbf16>, vector<64x4xf32> -> vector<64x4xf32>
    %23 = arith.addf %17, %22 : vector<64x4xf32>
    %24 = vector.extract_strided_slice %4 {offsets = [1, 0, 0], sizes = [4, 16, 4], strides = [1, 1, 1]} : vector<6x18x4xbf16> to vector<4x16x4xbf16>
    %25 = vector.shape_cast %24 : vector<4x16x4xbf16> to vector<64x4xbf16>
    %c3 = arith.constant 3 : index
    %c0_17 = arith.constant 0 : index
    %c0_18 = arith.constant 0 : index
    %26 = vector.load %arg4[%c3, %c0_17, %c0_18] : memref<9x4x4xbf16, #tpu.memory_space<vmem>>, vector<1x4x4xbf16>
    %27 = vector.shape_cast %26 : vector<1x4x4xbf16> to vector<4x4xbf16>
    %cst_19 = arith.constant dense<0.000000e+00> : vector<64x4xf32>
    %28 = tpu.matmul %25, %27, %cst_19 {dimension_numbers = #tpu.dot_dimension_numbers<[1], [0], [0], [1], [0, 0, 1, 1], [], []>} : vector<64x4xbf16>, vector<4x4xbf16>, vector<64x4xf32> -> vector<64x4xf32>
    %29 = arith.addf %23, %28 : vector<64x4xf32>
    %30 = vector.extract_strided_slice %4 {offsets = [1, 1, 0], sizes = [4, 16, 4], strides = [1, 1, 1]} : vector<6x18x4xbf16> to vector<4x16x4xbf16>
    %31 = vector.shape_cast %30 : vector<4x16x4xbf16> to vector<64x4xbf16>
    %c4 = arith.constant 4 : index
    %c0_20 = arith.constant 0 : index
    %c0_21 = arith.constant 0 : index
    %32 = vector.load %arg4[%c4, %c0_20, %c0_21] : memref<9x4x4xbf16, #tpu.memory_space<vmem>>, vector<1x4x4xbf16>
    %33 = vector.shape_cast %32 : vector<1x4x4xbf16> to vector<4x4xbf16>
    %cst_22 = arith.constant dense<0.000000e+00> : vector<64x4xf32>
    %34 = tpu.matmul %31, %33, %cst_22 {dimension_numbers = #tpu.dot_dimension_numbers<[1], [0], [0], [1], [0, 0, 1, 1], [], []>} : vector<64x4xbf16>, vector<4x4xbf16>, vector<64x4xf32> -> vector<64x4xf32>
    %35 = arith.addf %29, %34 : vector<64x4xf32>
    %36 = vector.extract_strided_slice %4 {offsets = [1, 2, 0], sizes = [4, 16, 4], strides = [1, 1, 1]} : vector<6x18x4xbf16> to vector<4x16x4xbf16>
    %37 = vector.shape_cast %36 : vector<4x16x4xbf16> to vector<64x4xbf16>
    %c5 = arith.constant 5 : index
    %c0_23 = arith.constant 0 : index
    %c0_24 = arith.constant 0 : index
    %38 = vector.load %arg4[%c5, %c0_23, %c0_24] : memref<9x4x4xbf16, #tpu.memory_space<vmem>>, vector<1x4x4xbf16>
    %39 = vector.shape_cast %38 : vector<1x4x4xbf16> to vector<4x4xbf16>
    %cst_25 = arith.constant dense<0.000000e+00> : vector<64x4xf32>
    %40 = tpu.matmul %37, %39, %cst_25 {dimension_numbers = #tpu.dot_dimension_numbers<[1], [0], [0], [1], [0, 0, 1, 1], [], []>} : vector<64x4xbf16>, vector<4x4xbf16>, vector<64x4xf32> -> vector<64x4xf32>
    %41 = arith.addf %35, %40 : vector<64x4xf32>
    %42 = vector.extract_strided_slice %4 {offsets = [2, 0, 0], sizes = [4, 16, 4], strides = [1, 1, 1]} : vector<6x18x4xbf16> to vector<4x16x4xbf16>
    %43 = vector.shape_cast %42 : vector<4x16x4xbf16> to vector<64x4xbf16>
    %c6 = arith.constant 6 : index
    %c0_26 = arith.constant 0 : index
    %c0_27 = arith.constant 0 : index
    %44 = vector.load %arg4[%c6, %c0_26, %c0_27] : memref<9x4x4xbf16, #tpu.memory_space<vmem>>, vector<1x4x4xbf16>
    %45 = vector.shape_cast %44 : vector<1x4x4xbf16> to vector<4x4xbf16>
    %cst_28 = arith.constant dense<0.000000e+00> : vector<64x4xf32>
    %46 = tpu.matmul %43, %45, %cst_28 {dimension_numbers = #tpu.dot_dimension_numbers<[1], [0], [0], [1], [0, 0, 1, 1], [], []>} : vector<64x4xbf16>, vector<4x4xbf16>, vector<64x4xf32> -> vector<64x4xf32>
    %47 = arith.addf %41, %46 : vector<64x4xf32>
    %48 = vector.extract_strided_slice %4 {offsets = [2, 1, 0], sizes = [4, 16, 4], strides = [1, 1, 1]} : vector<6x18x4xbf16> to vector<4x16x4xbf16>
    %49 = vector.shape_cast %48 : vector<4x16x4xbf16> to vector<64x4xbf16>
    %c7 = arith.constant 7 : index
    %c0_29 = arith.constant 0 : index
    %c0_30 = arith.constant 0 : index
    %50 = vector.load %arg4[%c7, %c0_29, %c0_30] : memref<9x4x4xbf16, #tpu.memory_space<vmem>>, vector<1x4x4xbf16>
    %51 = vector.shape_cast %50 : vector<1x4x4xbf16> to vector<4x4xbf16>
    %cst_31 = arith.constant dense<0.000000e+00> : vector<64x4xf32>
    %52 = tpu.matmul %49, %51, %cst_31 {dimension_numbers = #tpu.dot_dimension_numbers<[1], [0], [0], [1], [0, 0, 1, 1], [], []>} : vector<64x4xbf16>, vector<4x4xbf16>, vector<64x4xf32> -> vector<64x4xf32>
    %53 = arith.addf %47, %52 : vector<64x4xf32>
    %54 = vector.extract_strided_slice %4 {offsets = [2, 2, 0], sizes = [4, 16, 4], strides = [1, 1, 1]} : vector<6x18x4xbf16> to vector<4x16x4xbf16>
    %55 = vector.shape_cast %54 : vector<4x16x4xbf16> to vector<64x4xbf16>
    %c8 = arith.constant 8 : index
    %c0_32 = arith.constant 0 : index
    %c0_33 = arith.constant 0 : index
    %56 = vector.load %arg4[%c8, %c0_32, %c0_33] : memref<9x4x4xbf16, #tpu.memory_space<vmem>>, vector<1x4x4xbf16>
    %57 = vector.shape_cast %56 : vector<1x4x4xbf16> to vector<4x4xbf16>
    %cst_34 = arith.constant dense<0.000000e+00> : vector<64x4xf32>
    %58 = tpu.matmul %55, %57, %cst_34 {dimension_numbers = #tpu.dot_dimension_numbers<[1], [0], [0], [1], [0, 0, 1, 1], [], []>} : vector<64x4xbf16>, vector<4x4xbf16>, vector<64x4xf32> -> vector<64x4xf32>
    %59 = arith.addf %53, %58 : vector<64x4xf32>
    %c0_35 = arith.constant 0 : index
    %c0_36 = arith.constant 0 : index
    %60 = vector.load %arg5[%c0_35, %c0_36] : memref<1x4xf32, #tpu.memory_space<vmem>>, vector<1x4xf32>
    %61 = vector.broadcast %60 : vector<1x4xf32> to vector<64x4xf32>
    %62 = arith.mulf %59, %61 : vector<64x4xf32>
    %c0_37 = arith.constant 0 : index
    %c0_38 = arith.constant 0 : index
    %63 = vector.load %arg6[%c0_37, %c0_38] : memref<1x4xf32, #tpu.memory_space<vmem>>, vector<1x4xf32>
    %64 = vector.broadcast %63 : vector<1x4xf32> to vector<64x4xf32>
    %65 = arith.addf %62, %64 : vector<64x4xf32>
    %cst_39 = arith.constant 0.000000e+00 : f32
    %66 = vector.broadcast %cst_39 : f32 to vector<64x4xf32>
    %67 = arith.cmpf ogt, %65, %66 : vector<64x4xf32>
    %cst_40 = arith.constant 0.000000e+00 : f32
    %68 = vector.broadcast %cst_40 : f32 to vector<64x4xf32>
    %69 = arith.minimumf %65, %68 : vector<64x4xf32>
    %70 = math.exp %69 : vector<64x4xf32>
    %cst_41 = arith.constant 1.000000e+00 : f32
    %71 = vector.broadcast %cst_41 : f32 to vector<64x4xf32>
    %72 = arith.subf %70, %71 : vector<64x4xf32>
    %73 = arith.select %67, %65, %72 : vector<64x4xi1>, vector<64x4xf32>
    %74 = vector.shape_cast %73 : vector<64x4xf32> to vector<4x16x4xf32>
    %c0_42 = arith.constant 0 : index
    %c0_43 = arith.constant 0 : index
    %c0_44 = arith.constant 0 : index
    %c0_45 = arith.constant 0 : index
    %75 = vector.load %arg7[%c0_42, %c0_43, %c0_44, %c0_45] : memref<1x4x16x4xf32, #tpu.memory_space<vmem>>, vector<1x4x16x4xf32>
    %76 = vector.shape_cast %75 : vector<1x4x16x4xf32> to vector<4x16x4xf32>
    %77 = vector.shape_cast %74 : vector<4x16x4xf32> to vector<1x4x16x4xf32>
    tpu.vector_store %arg7[%c0_42, %c0_43, %c0_44, %c0_45], %77 {strides = array<i32>} : memref<1x4x16x4xf32, #tpu.memory_space<vmem>>, vector<1x4x16x4xf32>,
    return
  }
  func.func @transform_0(%arg0: i32, %arg1: i32) -> (i32, i32, i32, i32) {
    %c0_i32 = arith.constant 0 : i32
    %c0_i32_0 = arith.constant 0 : i32
    %c0_i32_1 = arith.constant 0 : i32
    return %arg0, %arg1, %c0_i32, %c0_i32_0 : i32, i32, i32, i32
  }
  func.func @transform_1(%arg0: i32, %arg1: i32) -> (i32, i32, i32, i32) {
    %c1_i32 = arith.constant 1 : i32
    %0 = arith.addi %arg1, %c1_i32 : i32
    %c2_i32 = arith.constant 2 : i32
    %1 = arith.muli %0, %c2_i32 : i32
    %c0_i32 = arith.constant 0 : i32
    %c0_i32_0 = arith.constant 0 : i32
    %c0_i32_1 = arith.constant 0 : i32
    return %arg0, %1, %c0_i32, %c0_i32_0 : i32, i32, i32, i32
  }
  func.func @transform_2(%arg0: i32, %arg1: i32) -> (i32, i32, i32) {
    %c0_i32 = arith.constant 0 : i32
    %c0_i32_0 = arith.constant 0 : i32
    %c0_i32_1 = arith.constant 0 : i32
    %c0_i32_2 = arith.constant 0 : i32
    return %c0_i32, %c0_i32_0, %c0_i32_1 : i32, i32, i32
  }
  func.func @transform_3(%arg0: i32, %arg1: i32) -> (i32, i32) {
    %c0_i32 = arith.constant 0 : i32
    %c0_i32_0 = arith.constant 0 : i32
    %c0_i32_1 = arith.constant 0 : i32
    return %c0_i32, %c0_i32_0 : i32, i32
  }
  func.func @transform_4(%arg0: i32, %arg1: i32) -> (i32, i32) {
    %c0_i32 = arith.constant 0 : i32
    %c0_i32_0 = arith.constant 0 : i32
    %c0_i32_1 = arith.constant 0 : i32
    return %c0_i32, %c0_i32_0 : i32, i32
  }
  func.func @transform_5(%arg0: i32, %arg1: i32) -> (i32, i32, i32, i32) {
    %c0_i32 = arith.constant 0 : i32
    %c0_i32_0 = arith.constant 0 : i32
    %c0_i32_1 = arith.constant 0 : i32
    return %arg0, %arg1, %c0_i32, %c0_i32_0 : i32, i32, i32, i32
  }
}

</mosaic_0001>

<llo_original>
// kernel: tile.6
$region0: #{tile.6}
  #allocation0 [shape = 's32[1]{0}', space=sflag, size = 0x4, scoped, tag = 'scoped memory for tile.6']
  %s0 = inlined_call_operand.vmem [shape: f32[4], index: 0, kind: input, shape index: {}]
  %s1 = inlined_call_operand.vmem [shape: f32[4,4], index: 1, kind: output, shape index: {}]
  // Predicated region
  $region2: #{tile.6} parent=0 // pred_check
    _
  $region3: #{tile.6} parent=0 // pred_check_branch
    %3 = sbr.rel (0) target = $region5
  $region4: #{tile.6} parent=0 // pred_region
    _
  $region5: #{tile.6} parent=0 // pred_fallthru
    _
  %v4 = vld [vmem:[%s0] ss:$0 sm:$0xff]
  %5 = vst [vmem:[%s1] sm:$0xf] %v4

// kernel: tile.7
$region0: #{tile.7}
  %s0 = inlined_call_operand.vmem [shape: f32[4,4], index: 0, kind: input, shape index: {}]
  %s1 = inlined_call_operand.vmem [shape: f32[1,16], index: 1, kind: output, shape index: {}]
  $region1: #{tile.7} parent=0
    #allocation0 [shape = 'u8[4096]{0}', space=vmem, size = 0x1000, scoped, tag = 'scoped mem for output reshape']
    #allocation1 [shape = 'u8[4096]{0}', space=vmem, size = 0x1000, scoped, tag = 'scoped mem for input reshape']
    %s3 = sshll.u32 1, 4
    %s4 = ssub.s32 %s3, 1
    %v5 = vld [vmem:[%s0] sm:%s4]
    %6 = vst [vmem:[#allocation1] sm:%s4] %v5
    %v7 = vld [vmem:[#allocation1] sm:$0x1]
    %vm8 = vcmask 31744
    %9 = vst.msk [vmem:[#allocation0] sm:$0x1] %vm8, %v7
    %s10 = scalar_lea.vmem [#allocation1], 3
    %v11 = vld [vmem:[%s10] sm:$0x1]
    %12 = vrot.lane.b32.xlu0 %v11, 12
    %v13 = vpop.permute.xlu0 %12
    %vm14 = vcmask 130144
    %15 = vst.msk [vmem:[#allocation0] sm:$0x1] %vm14, %v13
    %s16 = scalar_lea.vmem [#allocation1], 2
    %v17 = vld [vmem:[%s16] sm:$0x1]
    %18 = vrot.lane.b32.xlu0 %v17, 8
    %v19 = vpop.permute.xlu0 %18
    %vm20 = vcmask 97344
    %21 = vst.msk [vmem:[#allocation0] sm:$0x1] %vm20, %v19
    %s22 = scalar_lea.vmem [#allocation1], 1
    %v23 = vld [vmem:[%s22] sm:$0x1]
    %24 = vrot.lane.b32.xlu0 %v23, 4
    %v25 = vpop.permute.xlu0 %24
    %vm26 = vcmask 64544
    %27 = vst.msk [vmem:[#allocation0] sm:$0x1] %vm26, %v25
    %s29 = sshll.u32 1, 1
    %s30 = ssub.s32 %s29, 1
    %v32 = vld [vmem:[#allocation0] sm:%s30]
    %s33 = sshll.u32 1, 1
    %s34 = ssub.s32 %s33, 1
    %35 = vst [vmem:[%s1] sm:%s34] %v32

// kernel: _forward.3
$region0: #{_forward.3}
  #allocation0 [shape = 'u32[]', space=smem, size = 0x4, offset = 0x4, fixed_abs, tag = 'smem constant byte address 0x4 - core index']
  #allocation1 [shape = 'u32[144,128]{1,0:T(1,128)}', space=vmem, size = 0x12000, scoped, tag = 'internal scratch']
  %s0 = inlined_call_operand.vmem [shape: bf16[2,8,8,8], index: 0, kind: input, shape index: {}]
  %s1 = inlined_call_operand.vmem [shape: bf16[8,16], index: 1, kind: input, shape index: {}]
  %s2 = inlined_call_operand.vmem [shape: f32[1,16], index: 2, kind: input, shape index: {}]
  %s3 = inlined_call_operand.vmem [shape: bf16[2,8,8,16], index: 3, kind: output, shape index: {}]
  %s4 = sld [smem:[#allocation0]]
  $region45: #{_forward.3} parent=0
    _
  %s6 = ssub.s32 1, %s4
  %s7 = scalar_select 0, %s6, %s4
  loop: start=0, step=1, limit=10
  $region2: #{_forward.3} parent=0 // loop_pre_header
    _
  $region3: #{_forward.3} parent=0 // loop_header
    %s9 = sphi 0, %s13
    %p10 = scmp.ge.s32.totalorder %s9, 10
    %s16 = sphi 0, %s28
    %s17 = sphi 0, %s24
    %s18 = sphi 0, %s16
    %s19 = sphi 0, %s17
    %s20 = sphi 0, %s18
    %s21 = sphi 0, %s19
    %s33 = sphi 0, %s35
    %s36 = sphi 0, %s33
    %s37 = sphi 0, %s36
    %s53 = sphi 0, %s37
    %s57 = sphi 0, %s57
    %s59 = sphi 0, %s57
    %s60 = sphi 0, %s59
    %s74 = sphi 0, %s60
    %s78 = sphi 0, %s78
    %s80 = sphi 0, %s78
    %s81 = sphi 0, %s80
    %s95 = sphi 0, %s81
    %s103 = sphi 0, %s105
    %s106 = sphi 0, %s103
    %s107 = sphi 0, %s106
    %s123 = sphi 0, %s107
  $region4: #{_forward.3} parent=0 // loop_header_branch
    %12 = sbr.rel (%p10) target = $region8
  $region5: #{_forward.3} parent=0 // loop_body
    %s14 = ssub.s32 %s9, 1
    %s15 = ssub.s32 %s9, 2
    %s22 = sadd.s32 1, %s17
    %p23 = scmp.ge.s32.totalorder %s22, 4
    %s24 = scalar_select %p23, 0, %s22
    %s25 = sadd.s32 1, %s16
    %s26 = scalar_select %p23, %s25, %s16
    %p27 = scmp.ge.s32.totalorder %s26, 2
    %s28 = scalar_select %p27, 0, %s26
    %s29 = ssub.s32 %s16, %s28
    %s30 = ssub.s32 %s17, %s24
    %s31 = sor.u32 %s29, %s30
    %p32 = scmp.eq.s32.totalorder %s31, 0
    %s34 = sadd.s32 %s33, 1
    %s35 = scalar_select %p32, %s33, %s34
    %p38 = pneg %p32
    %p39 = scmp.eq.s32.totalorder %s9, 7
    %p40 = por %p38, %p39
    %p41 = scmp.ne.s32.totalorder %s33, %s36
    %p42 = scmp.eq.s32.totalorder %s9, 0
    %p43 = por %p41, %p42
    %p44 = scmp.ne.s32.totalorder %s33, %s36
    %p45 = scmp.eq.s32.totalorder %s14, 7
    %p46 = por %p44, %p45
    %p47 = scmp.ne.s32.totalorder %s36, %s37
    %p48 = scmp.eq.s32.totalorder %s14, 0
    %p49 = por %p47, %p48
    %p50 = scmp.ne.s32.totalorder %s36, %s37
    %p51 = scmp.eq.s32.totalorder %s15, 7
    %p52 = por %p50, %p51
    %p54 = scmp.ne.s32.totalorder %s37, %s53
    %p55 = scmp.eq.s32.totalorder %s15, 0
    %p56 = por %p54, %p55
    %s58 = sadd.s32 %s57, 1
    %p61 = scmp.eq.s32.totalorder %s9, 7
    %p62 = scmp.ne.s32.totalorder %s57, %s59
    %p63 = scmp.eq.s32.totalorder %s9, 0
    %p64 = por %p62, %p63
    %p65 = scmp.ne.s32.totalorder %s57, %s59
    %p66 = scmp.eq.s32.totalorder %s14, 7
    %p67 = por %p65, %p66
    %p68 = scmp.ne.s32.totalorder %s59, %s60
    %p69 = scmp.eq.s32.totalorder %s14, 0
    %p70 = por %p68, %p69
    %p71 = scmp.ne.s32.totalorder %s59, %s60
    %p72 = scmp.eq.s32.totalorder %s15, 7
    %p73 = por %p71, %p72
    %p75 = scmp.ne.s32.totalorder %s60, %s74
    %p76 = scmp.eq.s32.totalorder %s15, 0
    %p77 = por %p75, %p76
    %s79 = sadd.s32 %s78, 1
    %p82 = scmp.eq.s32.totalorder %s9, 7
    %p83 = scmp.ne.s32.totalorder %s78, %s80
    %p84 = scmp.eq.s32.totalorder %s9, 0
    %p85 = por %p83, %p84
    %p86 = scmp.ne.s32.totalorder %s78, %s80
    %p87 = scmp.eq.s32.totalorder %s14, 7
    %p88 = por %p86, %p87
    %p89 = scmp.ne.s32.totalorder %s80, %s81
    %p90 = scmp.eq.s32.totalorder %s14, 0
    %p91 = por %p89, %p90
    %p92 = scmp.ne.s32.totalorder %s80, %s81
    %p93 = scmp.eq.s32.totalorder %s15, 7
    %p94 = por %p92, %p93
    %p96 = scmp.ne.s32.totalorder %s81, %s95
    %p97 = scmp.eq.s32.totalorder %s15, 0
    %p98 = por %p96, %p97
    %s99 = ssub.s32 %s16, %s28
    %s100 = ssub.s32 %s17, %s24
    %s101 = sor.u32 %s99, %s100
    %p102 = scmp.eq.s32.totalorder %s101, 0
    %s104 = sadd.s32 %s103, 1
    %s105 = scalar_select %p102, %s103, %s104
    %p108 = pneg %p102
    %p109 = scmp.eq.s32.totalorder %s9, 7
    %p110 = por %p108, %p109
    %p111 = scmp.ne.s32.totalorder %s103, %s106
    %p112 = scmp.eq.s32.totalorder %s9, 0
    %p113 = por %p111, %p112
    %p114 = scmp.ne.s32.totalorder %s103, %s106
    %p115 = scmp.eq.s32.totalorder %s14, 7
    %p116 = por %p114, %p115
    %p117 = scmp.ne.s32.totalorder %s106, %s107
    %p118 = scmp.eq.s32.totalorder %s14, 0
    %p119 = por %p117, %p118
    %p120 = scmp.ne.s32.totalorder %s106, %s107
    %p121 = scmp.eq.s32.totalorder %s15, 7
    %p122 = por %p120, %p121
    %p124 = scmp.ne.s32.totalorder %s107, %s123
    %p125 = scmp.eq.s32.totalorder %s15, 0
    %p126 = por %p124, %p125
    %p127 = scmp.le.s32.totalorder 1, %s9
    %p128 = scmp.lt.s32.totalorder %s9, 9
    %p129 = pnand %p127, %p128
    %p130 = pneg %p129
    // Predicated region
    $region9: #{_forward.3} parent=5 // pred_check
      _
    $region10: #{_forward.3} parent=5 // pred_check_branch
      %132 = sbr.rel (%p129) target = $region12
    $region11: #{_forward.3} parent=5 // pred_region
      %s133 = ssub.s32 %s9, 1
      // Predicated region
      $region13: #{_forward.3} parent=11 // pred_check
        %p134 = pneg %p70
      $region14: #{_forward.3} parent=11 // pred_check_branch
        %136 = sbr.rel (%p134) target = $region16
      $region15: #{_forward.3} parent=11 // pred_region
        _
      $region16: #{_forward.3} parent=11 // pred_fallthru
        _
      // Predicated region
      $region17: #{_forward.3} parent=11 // pred_check
        %p137 = pneg %p91
      $region18: #{_forward.3} parent=11 // pred_check_branch
        %139 = sbr.rel (%p137) target = $region20
      $region19: #{_forward.3} parent=11 // pred_region
        _
      $region20: #{_forward.3} parent=11 // pred_fallthru
        _
    $region12: #{_forward.3} parent=5 // pred_fallthru
      _
    %p140 = scmp.lt.s32.totalorder %s9, 8
    // Predicated region
    $region21: #{_forward.3} parent=5 // pred_check
      %p141 = pneg %p140
    $region22: #{_forward.3} parent=5 // pred_check_branch
      %143 = sbr.rel (%p141) target = $region24
    $region23: #{_forward.3} parent=5 // pred_region
      // Predicated region
      $region25: #{_forward.3} parent=23 // pred_check
        %p144 = pneg %p43
      $region26: #{_forward.3} parent=23 // pred_check_branch
        %146 = sbr.rel (%p144) target = $region28
      $region27: #{_forward.3} parent=23 // pred_region
        %s147 = smul.u32 2, %s17
        %p148 = scmp.lt.s32.totalorder %s16, 1
        %s149 = scalar_select %p148, %s16, 1
        %p150 = scmp.lt.s32.totalorder %s147, 7
        %s151 = scalar_select %p150, %s147, 7
        %s152 = smul.addr %s149, 8
        %s153 = sadd.s32 %s151, %s152
        %s154 = smul.addr %s153, 4
        %s155 = scalar_lea.vmem %s0, %s154
        %s156 = smul.u32 2, %s17
      $region28: #{_forward.3} parent=23 // pred_fallthru
        _
    $region24: #{_forward.3} parent=5 // pred_fallthru
      _
    %p157 = scmp.le.s32.totalorder 1, %s9
    %p158 = scmp.lt.s32.totalorder %s9, 9
    %p159 = pnand %p157, %p158
    %p160 = pneg %p159
    // Predicated region
    $region29: #{_forward.3} parent=5 // pred_check
      _
    $region30: #{_forward.3} parent=5 // pred_check_branch
      %162 = sbr.rel (%p159) target = $region32
    $region31: #{_forward.3} parent=5 // pred_region
      %s163 = ssub.s32 %s9, 1
      %s164 = smul.u32 2, %s19
      %p165 = scmp.lt.s32.totalorder %s18, 1
      %s166 = scalar_select %p165, %s18, 1
      %p167 = scmp.lt.s32.totalorder %s164, 7
      %s168 = scalar_select %p167, %s164, 7
      %s169 = smul.addr %s166, 8
      %s170 = sadd.s32 %s168, %s169
      %s171 = smul.addr %s170, 4
      %s172 = scalar_lea.vmem %s0, %s171
      %p173 = pneg %p49
      %p174 = pneg %p46
      %p175 = pneg %p70
      %p176 = pneg %p67
      %p177 = pneg %p91
      %p178 = pneg %p88
      %p179 = pneg %p119
      %p180 = pneg %p116
      %s181 = smul.u32 2, %s19
      %p182 = scmp.lt.s32.totalorder %s18, 1
      %s183 = scalar_select %p182, %s18, 1
      %p184 = scmp.lt.s32.totalorder %s181, 7
      %s185 = scalar_select %p184, %s181, 7
      %s186 = smul.addr %s183, 8
      %s187 = sadd.s32 %s185, %s186
      %s188 = smul.addr %s187, 4
      %s189 = scalar_lea.vmem %s3, %s188
      %s190 = smul.u32 2, %s19
      %p191 = scmp.lt.s32.totalorder %s18, 1
      %s192 = scalar_select %p191, %s18, 1
      %p193 = scmp.lt.s32.totalorder %s190, 7
      %s194 = scalar_select %p193, %s190, 7
      %s195 = smul.addr %s192, 8
      %s196 = sadd.s32 %s194, %s195
      %s197 = smul.addr %s196, 4
      %s198 = scalar_lea.vmem %s0, %s197
      %s199 = smul.u32 2, %s19
      %s200 = smul.u32 2, %s19
      %p201 = scmp.lt.s32.totalorder %s18, 1
      %s202 = scalar_select %p201, %s18, 1
      %p203 = scmp.lt.s32.totalorder %s200, 7
      %s204 = scalar_select %p203, %s200, 7
      %s205 = smul.addr %s202, 8
      %s206 = sadd.s32 %s204, %s205
      %s207 = smul.addr %s206, 4
      %s208 = scalar_lea.vmem %s3, %s207
      %s209 = smul.u32 2, %s19
      %v211 = vld [vmem:[%s198] sm:$0xf]
      %v212 = vld [vmem:[%s198 + $0x4] sm:$0xf]
      %v213 = vld [vmem:[%s1] sm:$0xf]
      %v214 = vld [vmem:[%s2] sm:$0x1]
      %v216 = vlaneseq
      %v217 = vshrl.u32 %v216, 7
      %v218 = vsub.s32 0, %v217
      %v219 = vrot.slane %v214, %v218
      %v223 = vunpack.c.l.b16 %v211
      %v224 = vunpack.c.l.b16 %v212
      %v225 = vpack.c.b16 %v224, %v223
      %vm226 = vcmask 64512
      %v228 = vsel %vm226, %v225, 0
      %vm230 = vcmask 1043456
      %v232 = vsel %vm230, %v213, 0
      %234 = vmatprep.subr.bf16.mxu0 0
      %235 = vmatpush1.bf16.msra.mxu0 0
      %236 = vmatprep.subr.bf16.mxu0 0
      %237 = vmatpush1.bf16.msra.mxu0 0
      %238 = vmatprep.subr.bf16.mxu0 0
      %239 = vmatpush1.bf16.msra.mxu0 0
      %240 = vmatprep.subr.bf16.mxu0 0
      %241 = vmatpush1.bf16.msra.mxu0 0
      %242 = vmatprep.subr.bf16.mxu0 0
      %243 = vmatpush1.bf16.msra.mxu0 0
      %244 = vmatprep.subr.bf16.mxu0 0
      %245 = vmatpush1.bf16.msra.mxu0 0
      %246 = vmatprep.subr.bf16.mxu0 0
      %247 = vmatpush1.bf16.msra.mxu0 0
      %248 = vmatprep.subr.bf16.mxu0 0
      %249 = vmatpush1.bf16.msra.mxu0 %v232
      %250 = vmatprep.subr.bf16.mxu0 0
      %251 = vmatpush2.bf16.msra.mxu0 0
      %252 = vmatprep.subr.bf16.mxu0 0
      %253 = vmatpush2.bf16.msra.mxu0 0
      %254 = vmatprep.subr.bf16.mxu0 0
      %255 = vmatpush2.bf16.msra.mxu0 0
      %256 = vmatprep.subr.bf16.mxu0 0
      %257 = vmatpush2.bf16.msra.mxu0 0
      %258 = vmatprep.subr.bf16.mxu0 0
      %259 = vmatpush2.bf16.msra.mxu0 0
      %260 = vmatprep.subr.bf16.mxu0 0
      %261 = vmatpush2.bf16.msra.mxu0 0
      %262 = vmatprep.subr.bf16.mxu0 0
      %263 = vmatpush2.bf16.msra.mxu0 0
      %264 = vmatprep.subr.bf16.mxu0 0
      %265 = vmatpush2.bf16.msra.mxu0 0
      %266 = vmatprep.mubr.bf16.mxu0 0
      %267 = vmatmul.mubr.bf16.gmra.mxu0 %v228
      %v268 = vpop.f32.mrf.mxu0
      %v269 = vadd.f32 %v219, %v268
      %v270 = vpop.f32.mrf.mxu0
      %v271 = vpop.f32.mrf.mxu0
      %v272 = vadd.f32 %v219, %v271
      %v273 = vpop.f32.mrf.mxu0
      %274 = vdwg.mxu0
      %v275 = vpack.c.bf16 %v269, %v269
      %v276 = vpack.c.bf16 %v272, %v272
      %vm277 = vcmask 125952
      %278 = vst.msk [vmem:[%s208] sm:$0xf] %vm277, %v275
      %279 = vst.msk [vmem:[%s208 + $0x4] sm:$0xf] %vm277, %v276
      %s280 = smul.u32 2, %s19
      %p281 = scmp.lt.s32.totalorder %s18, 1
      %s282 = scalar_select %p281, %s18, 1
      %p283 = scmp.lt.s32.totalorder %s280, 7
      %s284 = scalar_select %p283, %s280, 7
      %s285 = smul.addr %s282, 8
      %s286 = sadd.s32 %s284, %s285
      %s287 = smul.addr %s286, 4
      %s288 = scalar_lea.vmem %s3, %s287
      // Predicated region
      $region33: #{_forward.3} parent=31 // pred_check
        %p289 = pneg %p116
      $region34: #{_forward.3} parent=31 // pred_check_branch
        %291 = sbr.rel (%p289) target = $region36
      $region35: #{_forward.3} parent=31 // pred_region
        %s292 = smul.u32 2, %s19
      $region36: #{_forward.3} parent=31 // pred_fallthru
        _
    $region32: #{_forward.3} parent=5 // pred_fallthru
      _
    %p293 = scmp.le.s32.totalorder 2, %s9
    // Predicated region
    $region37: #{_forward.3} parent=5 // pred_check
      %p294 = pneg %p293
    $region38: #{_forward.3} parent=5 // pred_check_branch
      %296 = sbr.rel (%p294) target = $region40
    $region39: #{_forward.3} parent=5 // pred_region
      %s297 = ssub.s32 %s9, 2
      // Predicated region
      $region41: #{_forward.3} parent=39 // pred_check
        %p298 = pneg %p122
      $region42: #{_forward.3} parent=39 // pred_check_branch
        %300 = sbr.rel (%p298) target = $region44
      $region43: #{_forward.3} parent=39 // pred_region
        %s301 = smul.u32 2, %s21
        %p302 = scmp.lt.s32.totalorder %s20, 1
        %s303 = scalar_select %p302, %s20, 1
        %p304 = scmp.lt.s32.totalorder %s301, 7
        %s305 = scalar_select %p304, %s301, 7
        %s306 = smul.addr %s303, 8
        %s307 = sadd.s32 %s305, %s306
        %s308 = smul.addr %s307, 4
        %s309 = scalar_lea.vmem %s3, %s308
      $region44: #{_forward.3} parent=39 // pred_fallthru
        _
    $region40: #{_forward.3} parent=5 // pred_fallthru
      _
  $region6: #{_forward.3} parent=0 // loop_footer
    %s13 = sadd.s32 1, %s9
  $region7: #{_forward.3} parent=0 // loop_footer_branch
    %8 = sbr.rel target = $region3
  $region8: #{_forward.3} parent=0 // loop_exit
    _

// kernel: _forward.4
$region0: #{_forward.4}
  #allocation0 [shape = 'u32[]', space=smem, size = 0x4, offset = 0x4, fixed_abs, tag = 'smem constant byte address 0x4 - core index']
  #allocation1 [shape = 'u32[144,128]{1,0:T(1,128)}', space=vmem, size = 0x12000, scoped, tag = 'internal scratch']
  %s0 = inlined_call_operand.vmem [shape: bf16[2,18,18,8], index: 0, kind: input, shape index: {}, may-alias: {0,1}]
  %s1 = inlined_call_operand.vmem [shape: bf16[2,18,18,8], index: 1, kind: input, shape index: {}, may-alias: {0,1}]
  %s2 = inlined_call_operand.vmem [shape: bf16[9,8,4], index: 2, kind: input, shape index: {}]
  %s3 = inlined_call_operand.vmem [shape: f32[1,4], index: 3, kind: input, shape index: {}]
  %s4 = inlined_call_operand.vmem [shape: f32[1,4], index: 4, kind: input, shape index: {}]
  %s5 = inlined_call_operand.vmem [shape: bf16[2,16,16,4], index: 5, kind: output, shape index: {}]
  %s6 = sld [smem:[#allocation0]]
  $region53: #{_forward.4} parent=0
    _
  %s8 = ssub.s32 1, %s6
  %s9 = scalar_select 0, %s8, %s6
  loop: start=0, step=1, limit=10
  $region2: #{_forward.4} parent=0 // loop_pre_header
    _
  $region3: #{_forward.4} parent=0 // loop_header
    %s11 = sphi 0, %s15
    %p12 = scmp.ge.s32.totalorder %s11, 10
    %s18 = sphi 0, %s30
    %s19 = sphi 0, %s26
    %s20 = sphi 0, %s18
    %s21 = sphi 0, %s19
    %s22 = sphi 0, %s20
    %s23 = sphi 0, %s21
    %s35 = sphi 0, %s37
    %s38 = sphi 0, %s35
    %s39 = sphi 0, %s38
    %s55 = sphi 0, %s39
    %s67 = sphi 0, %s69
    %s70 = sphi 0, %s67
    %s71 = sphi 0, %s70
    %s87 = sphi 0, %s71
    %s91 = sphi 0, %s91
    %s93 = sphi 0, %s91
    %s94 = sphi 0, %s93
    %s108 = sphi 0, %s94
    %s112 = sphi 0, %s112
    %s114 = sphi 0, %s112
    %s115 = sphi 0, %s114
    %s129 = sphi 0, %s115
    %s133 = sphi 0, %s133
    %s135 = sphi 0, %s133
    %s136 = sphi 0, %s135
    %s150 = sphi 0, %s136
    %s158 = sphi 0, %s160
    %s161 = sphi 0, %s158
    %s162 = sphi 0, %s161
    %s178 = sphi 0, %s162
  $region4: #{_forward.4} parent=0 // loop_header_branch
    %14 = sbr.rel (%p12) target = $region8
  $region5: #{_forward.4} parent=0 // loop_body
    %s16 = ssub.s32 %s11, 1
    %s17 = ssub.s32 %s11, 2
    %s24 = sadd.s32 1, %s19
    %p25 = scmp.ge.s32.totalorder %s24, 4
    %s26 = scalar_select %p25, 0, %s24
    %s27 = sadd.s32 1, %s18
    %s28 = scalar_select %p25, %s27, %s18
    %p29 = scmp.ge.s32.totalorder %s28, 2
    %s30 = scalar_select %p29, 0, %s28
    %s31 = ssub.s32 %s18, %s30
    %s32 = ssub.s32 %s19, %s26
    %s33 = sor.u32 %s31, %s32
    %p34 = scmp.eq.s32.totalorder %s33, 0
    %s36 = sadd.s32 %s35, 1
    %s37 = scalar_select %p34, %s35, %s36
    %p40 = pneg %p34
    %p41 = scmp.eq.s32.totalorder %s11, 7
    %p42 = por %p40, %p41
    %p43 = scmp.ne.s32.totalorder %s35, %s38
    %p44 = scmp.eq.s32.totalorder %s11, 0
    %p45 = por %p43, %p44
    %p46 = scmp.ne.s32.totalorder %s35, %s38
    %p47 = scmp.eq.s32.totalorder %s16, 7
    %p48 = por %p46, %p47
    %p49 = scmp.ne.s32.totalorder %s38, %s39
    %p50 = scmp.eq.s32.totalorder %s16, 0
    %p51 = por %p49, %p50
    %p52 = scmp.ne.s32.totalorder %s38, %s39
    %p53 = scmp.eq.s32.totalorder %s17, 7
    %p54 = por %p52, %p53
    %p56 = scmp.ne.s32.totalorder %s39, %s55
    %p57 = scmp.eq.s32.totalorder %s17, 0
    %p58 = por %p56, %p57
    %s59 = sadd.s32 %s19, 1
    %s60 = smul.u32 %s59, 2
    %s61 = sadd.s32 %s26, 1
    %s62 = smul.u32 %s61, 2
    %s63 = ssub.s32 %s18, %s30
    %s64 = ssub.s32 %s60, %s62
    %s65 = sor.u32 %s63, %s64
    %p66 = scmp.eq.s32.totalorder %s65, 0
    %s68 = sadd.s32 %s67, 1
    %s69 = scalar_select %p66, %s67, %s68
    %p72 = pneg %p66
    %p73 = scmp.eq.s32.totalorder %s11, 7
    %p74 = por %p72, %p73
    %p75 = scmp.ne.s32.totalorder %s67, %s70
    %p76 = scmp.eq.s32.totalorder %s11, 0
    %p77 = por %p75, %p76
    %p78 = scmp.ne.s32.totalorder %s67, %s70
    %p79 = scmp.eq.s32.totalorder %s16, 7
    %p80 = por %p78, %p79
    %p81 = scmp.ne.s32.totalorder %s70, %s71
    %p82 = scmp.eq.s32.totalorder %s16, 0
    %p83 = por %p81, %p82
    %p84 = scmp.ne.s32.totalorder %s70, %s71
    %p85 = scmp.eq.s32.totalorder %s17, 7
    %p86 = por %p84, %p85
    %p88 = scmp.ne.s32.totalorder %s71, %s87
    %p89 = scmp.eq.s32.totalorder %s17, 0
    %p90 = por %p88, %p89
    %s92 = sadd.s32 %s91, 1
    %p95 = scmp.eq.s32.totalorder %s11, 7
    %p96 = scmp.ne.s32.totalorder %s91, %s93
    %p97 = scmp.eq.s32.totalorder %s11, 0
    %p98 = por %p96, %p97
    %p99 = scmp.ne.s32.totalorder %s91, %s93
    %p100 = scmp.eq.s32.totalorder %s16, 7
    %p101 = por %p99, %p100
    %p102 = scmp.ne.s32.totalorder %s93, %s94
    %p103 = scmp.eq.s32.totalorder %s16, 0
    %p104 = por %p102, %p103
    %p105 = scmp.ne.s32.totalorder %s93, %s94
    %p106 = scmp.eq.s32.totalorder %s17, 7
    %p107 = por %p105, %p106
    %p109 = scmp.ne.s32.totalorder %s94, %s108
    %p110 = scmp.eq.s32.totalorder %s17, 0
    %p111 = por %p109, %p110
    %s113 = sadd.s32 %s112, 1
    %p116 = scmp.eq.s32.totalorder %s11, 7
    %p117 = scmp.ne.s32.totalorder %s112, %s114
    %p118 = scmp.eq.s32.totalorder %s11, 0
    %p119 = por %p117, %p118
    %p120 = scmp.ne.s32.totalorder %s112, %s114
    %p121 = scmp.eq.s32.totalorder %s16, 7
    %p122 = por %p120, %p121
    %p123 = scmp.ne.s32.totalorder %s114, %s115
    %p124 = scmp.eq.s32.totalorder %s16, 0
    %p125 = por %p123, %p124
    %p126 = scmp.ne.s32.totalorder %s114, %s115
    %p127 = scmp.eq.s32.totalorder %s17, 7
    %p128 = por %p126, %p127
    %p130 = scmp.ne.s32.totalorder %s115, %s129
    %p131 = scmp.eq.s32.totalorder %s17, 0
    %p132 = por %p130, %p131
    %s134 = sadd.s32 %s133, 1
    %p137 = scmp.eq.s32.totalorder %s11, 7
    %p138 = scmp.ne.s32.totalorder %s133, %s135
    %p139 = scmp.eq.s32.totalorder %s11, 0
    %p140 = por %p138, %p139
    %p141 = scmp.ne.s32.totalorder %s133, %s135
    %p142 = scmp.eq.s32.totalorder %s16, 7
    %p143 = por %p141, %p142
    %p144 = scmp.ne.s32.totalorder %s135, %s136
    %p145 = scmp.eq.s32.totalorder %s16, 0
    %p146 = por %p144, %p145
    %p147 = scmp.ne.s32.totalorder %s135, %s136
    %p148 = scmp.eq.s32.totalorder %s17, 7
    %p149 = por %p147, %p148
    %p151 = scmp.ne.s32.totalorder %s136, %s150
    %p152 = scmp.eq.s32.totalorder %s17, 0
    %p153 = por %p151, %p152
    %s154 = ssub.s32 %s18, %s30
    %s155 = ssub.s32 %s19, %s26
    %s156 = sor.u32 %s154, %s155
    %p157 = scmp.eq.s32.totalorder %s156, 0
    %s159 = sadd.s32 %s158, 1
    %s160 = scalar_select %p157, %s158, %s159
    %p163 = pneg %p157
    %p164 = scmp.eq.s32.totalorder %s11, 7
    %p165 = por %p163, %p164
    %p166 = scmp.ne.s32.totalorder %s158, %s161
    %p167 = scmp.eq.s32.totalorder %s11, 0
    %p168 = por %p166, %p167
    %p169 = scmp.ne.s32.totalorder %s158, %s161
    %p170 = scmp.eq.s32.totalorder %s16, 7
    %p171 = por %p169, %p170
    %p172 = scmp.ne.s32.totalorder %s161, %s162
    %p173 = scmp.eq.s32.totalorder %s16, 0
    %p174 = por %p172, %p173
    %p175 = scmp.ne.s32.totalorder %s161, %s162
    %p176 = scmp.eq.s32.totalorder %s17, 7
    %p177 = por %p175, %p176
    %p179 = scmp.ne.s32.totalorder %s162, %s178
    %p180 = scmp.eq.s32.totalorder %s17, 0
    %p181 = por %p179, %p180
    %p182 = scmp.le.s32.totalorder 1, %s11
    %p183 = scmp.lt.s32.totalorder %s11, 9
    %p184 = pnand %p182, %p183
    %p185 = pneg %p184
    // Predicated region
    $region9: #{_forward.4} parent=5 // pred_check
      _
    $region10: #{_forward.4} parent=5 // pred_check_branch
      %187 = sbr.rel (%p184) target = $region12
    $region11: #{_forward.4} parent=5 // pred_region
      %s188 = ssub.s32 %s11, 1
      // Predicated region
      $region13: #{_forward.4} parent=11 // pred_check
        %p189 = pneg %p104
      $region14: #{_forward.4} parent=11 // pred_check_branch
        %191 = sbr.rel (%p189) target = $region16
      $region15: #{_forward.4} parent=11 // pred_region
        _
      $region16: #{_forward.4} parent=11 // pred_fallthru
        _
      // Predicated region
      $region17: #{_forward.4} parent=11 // pred_check
        %p192 = pneg %p125
      $region18: #{_forward.4} parent=11 // pred_check_branch
        %194 = sbr.rel (%p192) target = $region20
      $region19: #{_forward.4} parent=11 // pred_region
        _
      $region20: #{_forward.4} parent=11 // pred_fallthru
        _
      // Predicated region
      $region21: #{_forward.4} parent=11 // pred_check
        %p195 = pneg %p146
      $region22: #{_forward.4} parent=11 // pred_check_branch
        %197 = sbr.rel (%p195) target = $region24
      $region23: #{_forward.4} parent=11 // pred_region
        _
      $region24: #{_forward.4} parent=11 // pred_fallthru
        _
    $region12: #{_forward.4} parent=5 // pred_fallthru
      _
    %p198 = scmp.lt.s32.totalorder %s11, 8
    // Predicated region
    $region25: #{_forward.4} parent=5 // pred_check
      %p199 = pneg %p198
    $region26: #{_forward.4} parent=5 // pred_check_branch
      %201 = sbr.rel (%p199) target = $region28
    $region27: #{_forward.4} parent=5 // pred_region
      // Predicated region
      $region29: #{_forward.4} parent=27 // pred_check
        %p202 = pneg %p45
      $region30: #{_forward.4} parent=27 // pred_check_branch
        %204 = sbr.rel (%p202) target = $region32
      $region31: #{_forward.4} parent=27 // pred_region
        %s205 = smul.u32 4, %s19
        %s206 = ssub.s32 18, %s205
        %p207 = scmp.lt.s32.totalorder %s206, 4
        %s208 = scalar_select %p207, %s206, 4
        %s209 = smul.u32 64, %s208
        %s210 = smul.u32 %s209, 3
        %p211 = scmp.lt.s32.totalorder %s18, 1
        %s212 = scalar_select %p211, %s18, 1
        %p213 = scmp.lt.s32.totalorder %s205, 17
        %s214 = scalar_select %p213, %s205, 17
        %s215 = smul.addr %s214, 3
        %s216 = smul.addr %s212, 54
        %s217 = sadd.s32 %s215, %s216
        %s218 = smul.addr %s217, 4
        %s219 = scalar_lea.vmem %s0, %s218
        %s220 = smul.u32 4, %s19
        %s221 = ssub.s32 18, %s220
        %p222 = scmp.lt.s32.totalorder %s221, 4
        %s223 = scalar_select %p222, %s221, 4
        %s224 = smul.u32 64, %s223
        %s225 = smul.u32 %s224, 3
      $region32: #{_forward.4} parent=27 // pred_fallthru
        _
      // Predicated region
      $region33: #{_forward.4} parent=27 // pred_check
        %p226 = pneg %p77
      $region34: #{_forward.4} parent=27 // pred_check_branch
        %228 = sbr.rel (%p226) target = $region36
      $region35: #{_forward.4} parent=27 // pred_region
        %s229 = sadd.s32 %s19, 1
        %s230 = smul.u32 %s229, 2
        %s231 = smul.u32 2, %s230
        %p232 = scmp.lt.s32.totalorder %s18, 1
        %s233 = scalar_select %p232, %s18, 1
        %p234 = scmp.lt.s32.totalorder %s231, 17
        %s235 = scalar_select %p234, %s231, 17
        %s236 = smul.addr %s235, 3
        %s237 = smul.addr %s233, 54
        %s238 = sadd.s32 %s236, %s237
        %s239 = smul.addr %s238, 4
        %s240 = scalar_lea.vmem %s1, %s239
        %s241 = sadd.s32 %s19, 1
        %s242 = smul.u32 %s241, 2
        %s243 = smul.u32 2, %s242
      $region36: #{_forward.4} parent=27 // pred_fallthru
        _
    $region28: #{_forward.4} parent=5 // pred_fallthru
      _
    %p244 = scmp.le.s32.totalorder 1, %s11
    %p245 = scmp.lt.s32.totalorder %s11, 9
    %p246 = pnand %p244, %p245
    %p247 = pneg %p246
    // Predicated region
    $region37: #{_forward.4} parent=5 // pred_check
      _
    $region38: #{_forward.4} parent=5 // pred_check_branch
      %249 = sbr.rel (%p246) target = $region40
    $region39: #{_forward.4} parent=5 // pred_region
      %s250 = ssub.s32 %s11, 1
      %s251 = smul.u32 4, %s21
      %s252 = ssub.s32 18, %s251
      %p253 = scmp.lt.s32.totalorder %s252, 4
      %s254 = scalar_select %p253, %s252, 4
      %s255 = smul.u32 64, %s254
      %s256 = smul.u32 %s255, 3
      %p257 = scmp.lt.s32.totalorder %s20, 1
      %s258 = scalar_select %p257, %s20, 1
      %p259 = scmp.lt.s32.totalorder %s251, 17
      %s260 = scalar_select %p259, %s251, 17
      %s261 = smul.addr %s260, 3
      %s262 = smul.addr %s258, 54
      %s263 = sadd.s32 %s261, %s262
      %s264 = smul.addr %s263, 4
      %s265 = scalar_lea.vmem %s0, %s264
      %p266 = pneg %p51
      %p267 = pneg %p48
      %s268 = sadd.s32 %s21, 1
      %s269 = smul.u32 %s268, 2
      %s270 = smul.u32 2, %s269
      %p271 = scmp.lt.s32.totalorder %s20, 1
      %s272 = scalar_select %p271, %s20, 1
      %p273 = scmp.lt.s32.totalorder %s270, 17
      %s274 = scalar_select %p273, %s270, 17
      %s275 = smul.addr %s274, 3
      %s276 = smul.addr %s272, 54
      %s277 = sadd.s32 %s275, %s276
      %s278 = smul.addr %s277, 4
      %s279 = scalar_lea.vmem %s1, %s278
      %p280 = pneg %p83
      %p281 = pneg %p80
      %p282 = pneg %p104
      %p283 = pneg %p101
      %p284 = pneg %p125
      %p285 = pneg %p122
      %p286 = pneg %p146
      %p287 = pneg %p143
      %p288 = pneg %p174
      %p289 = pneg %p171
      %s290 = smul.u32 4, %s21
      %p291 = scmp.lt.s32.totalorder %s20, 1
      %s292 = scalar_select %p291, %s20, 1
      %p293 = scmp.lt.s32.totalorder %s290, 15
      %s294 = scalar_select %p293, %s290, 15
      %s295 = smul.addr %s294, 2
      %s296 = smul.addr %s292, 32
      %s297 = sadd.s32 %s295, %s296
      %s298 = smul.addr %s297, 4
      %s299 = scalar_lea.vmem %s5, %s298
      %s300 = smul.u32 4, %s21
      %s301 = ssub.s32 18, %s300
      %p302 = scmp.lt.s32.totalorder %s301, 4
      %s303 = scalar_select %p302, %s301, 4
      %s304 = smul.u32 64, %s303
      %s305 = smul.u32 %s304, 3
      %p306 = scmp.lt.s32.totalorder %s20, 1
      %s307 = scalar_select %p306, %s20, 1
      %p308 = scmp.lt.s32.totalorder %s300, 17
      %s309 = scalar_select %p308, %s300, 17
      %s310 = smul.addr %s309, 3
      %s311 = smul.addr %s307, 54
      %s312 = sadd.s32 %s310, %s311
      %s313 = smul.addr %s312, 4
      %s314 = scalar_lea.vmem %s0, %s313
      %s315 = smul.u32 4, %s21
      %s316 = ssub.s32 18, %s315
      %p317 = scmp.lt.s32.totalorder %s316, 4
      %s318 = scalar_select %p317, %s316, 4
      %s319 = smul.u32 64, %s318
      %s320 = smul.u32 %s319, 3
      %s321 = sadd.s32 %s21, 1
      %s322 = smul.u32 %s321, 2
      %s323 = smul.u32 2, %s322
      %p324 = scmp.lt.s32.totalorder %s20, 1
      %s325 = scalar_select %p324, %s20, 1
      %p326 = scmp.lt.s32.totalorder %s323, 17
      %s327 = scalar_select %p326, %s323, 17
      %s328 = smul.addr %s327, 3
      %s329 = smul.addr %s325, 54
      %s330 = sadd.s32 %s328, %s329
      %s331 = smul.addr %s330, 4
      %s332 = scalar_lea.vmem %s1, %s331
      %s333 = sadd.s32 %s21, 1
      %s334 = smul.u32 %s333, 2
      %s335 = smul.u32 2, %s334
      %s336 = smul.u32 4, %s21
      %p337 = scmp.lt.s32.totalorder %s20, 1
      %s338 = scalar_select %p337, %s20, 1
      %p339 = scmp.lt.s32.totalorder %s336, 15
      %s340 = scalar_select %p339, %s336, 15
      %s341 = smul.addr %s340, 2
      %s342 = smul.addr %s338, 32
      %s343 = sadd.s32 %s341, %s342
      %s344 = smul.addr %s343, 4
      %s345 = scalar_lea.vmem %s5, %s344
      %s346 = smul.u32 4, %s21
      %v348 = vld [vmem:[%s314] sm:$0xf]
      %v349 = vld [vmem:[%s314 + $0x4] sm:$0xf]
      %v350 = vld [vmem:[%s314 + $0x8] sm:$0x1]
      %v351 = vld [vmem:[%s314 + $0xc] sm:$0xf]
      %v352 = vld [vmem:[%s314 + $0x10] sm:$0xf]
      %v353 = vld [vmem:[%s314 + $0x14] sm:$0x1]
      %v354 = vld [vmem:[%s314 + $0x18] sm:$0xf]
      %v355 = vld [vmem:[%s314 + $0x1c] sm:$0xf]
      %v356 = vld [vmem:[%s314 + $0x20] sm:$0x1]
      %v357 = vld [vmem:[%s314 + $0x24] sm:$0xf]
      %v358 = vld [vmem:[%s314 + $0x28] sm:$0xf]
      %v359 = vld [vmem:[%s314 + $0x2c] sm:$0x1]
      %v360 = vld [vmem:[%s332] sm:$0xf]
      %v361 = vld [vmem:[%s332 + $0x4] sm:$0xf]
      %v362 = vld [vmem:[%s332 + $0x8] sm:$0x1]
      %v363 = vld [vmem:[%s332 + $0xc] sm:$0xf]
      %v364 = vld [vmem:[%s332 + $0x10] sm:$0xf]
      %v365 = vld [vmem:[%s332 + $0x14] sm:$0x1]
      %v366 = vld [vmem:[%s2] sm:$0xf]
      %vm367 = vsmask.f32 3328
      %vm368 = vsmask.f32 7440
      %vm369 = vmor %vm367, %vm368
      %v371 = vshrl.u32 %v348, 16
      %v373 = vrot.slane %v371, 4
      %v374 = vshll.u32 %v348, 16
      %v376 = vrot.slane %v374, 5
      %v377 = vor.u32 %v373, %v376
      %v378 = vrot.slane %v377, 4
      %v380 = vshll.u32 %v349, 16
      %v382 = vrot.slane %v380, 5
      %v383 = vsel %vm369, %v378, %v382
      %v384 = vshrl.u32 %v349, 16
      %v386 = vrot.slane %v384, 4
      %v387 = vor.u32 %v386, %v382
      %v388 = vrot.slane %v387, 4
      %v390 = vshll.u32 %v350, 16
      %v392 = vrot.slane %v390, 5
      %v393 = vsel %vm369, %v388, %v392
      %v395 = vshrl.u32 %v351, 16
      %v397 = vrot.slane %v395, 4
      %v398 = vshll.u32 %v351, 16
      %v400 = vrot.slane %v398, 5
      %v401 = vor.u32 %v397, %v400
      %v402 = vrot.slane %v401, 4
      %v404 = vshll.u32 %v352, 16
      %v406 = vrot.slane %v404, 5
      %v407 = vsel %vm369, %v402, %v406
      %v408 = vshrl.u32 %v352, 16
      %v410 = vrot.slane %v408, 4
      %v411 = vor.u32 %v410, %v406
      %v412 = vrot.slane %v411, 4
      %v414 = vshll.u32 %v353, 16
      %v416 = vrot.slane %v414, 5
      %v417 = vsel %vm369, %v412, %v416
      %v419 = vshrl.u32 %v354, 16
      %v421 = vrot.slane %v419, 4
      %v422 = vshll.u32 %v354, 16
      %v424 = vrot.slane %v422, 5
      %v425 = vor.u32 %v421, %v424
      %v426 = vrot.slane %v425, 4
      %v428 = vshll.u32 %v355, 16
      %v430 = vrot.slane %v428, 5
      %v431 = vsel %vm369, %v426, %v430
      %v432 = vshrl.u32 %v355, 16
      %v434 = vrot.slane %v432, 4
      %v435 = vor.u32 %v434, %v430
      %v436 = vrot.slane %v435, 4
      %v438 = vshll.u32 %v356, 16
      %v440 = vrot.slane %v438, 5
      %v441 = vsel %vm369, %v436, %v440
      %v443 = vshrl.u32 %v357, 16
      %v445 = vrot.slane %v443, 4
      %v446 = vshll.u32 %v357, 16
      %v448 = vrot.slane %v446, 5
      %v449 = vor.u32 %v445, %v448
      %v450 = vrot.slane %v449, 4
      %v452 = vshll.u32 %v358, 16
      %v454 = vrot.slane %v452, 5
      %v455 = vsel %vm369, %v450, %v454
      %v456 = vshrl.u32 %v358, 16
      %v458 = vrot.slane %v456, 4
      %v459 = vor.u32 %v458, %v454
      %v460 = vrot.slane %v459, 4
      %v462 = vshll.u32 %v359, 16
      %v464 = vrot.slane %v462, 5
      %v465 = vsel %vm369, %v460, %v464
      %s466 = scalar_lea.vmem %s2, 4
      %v467 = vld [vmem:[%s466] sm:$0xf]
      %v468 = vunpack.c.l.b16 %v383
      %v469 = vunpack.c.l.b16 %v393
      %v470 = vunpack.c.l.b16 %v407
      %v471 = vunpack.c.l.b16 %v417
      %v472 = vunpack.c.l.b16 %v431
      %v473 = vunpack.c.l.b16 %v441
      %v474 = vunpack.c.l.b16 %v455
      %v475 = vunpack.c.l.b16 %v465
      %v476 = vpack.c.b16 %v469, %v468
      %v477 = vpack.c.b16 %v471, %v470
      %v478 = vpack.c.b16 %v473, %v472
      %v479 = vpack.c.b16 %v475, %v474
      %vm480 = vcmask 64512
      %v482 = vsel %vm480, %v476, 0
      %v485 = vsel %vm480, %v477, 0
      %v488 = vsel %vm480, %v478, 0
      %v491 = vsel %vm480, %v479, 0
      %vm493 = vcmask 1043456
      %v495 = vsel %vm493, %v467, 0
      %497 = vmatprep.subr.bf16.mxu0 0
      %498 = vmatpush1.bf16.msra.mxu0 0
      %499 = vmatprep.subr.bf16.mxu0 0
      %500 = vmatpush1.bf16.msra.mxu0 0
      %501 = vmatprep.subr.bf16.mxu0 0
      %502 = vmatpush1.bf16.msra.mxu0 0
      %503 = vmatprep.subr.bf16.mxu0 0
      %504 = vmatpush1.bf16.msra.mxu0 0
      %505 = vmatprep.subr.bf16.mxu0 0
      %506 = vmatpush1.bf16.msra.mxu0 0
      %507 = vmatprep.subr.bf16.mxu0 0
      %508 = vmatpush1.bf16.msra.mxu0 0
      %509 = vmatprep.subr.bf16.mxu0 0
      %510 = vmatpush1.bf16.msra.mxu0 0
      %511 = vmatprep.subr.bf16.mxu0 0
      %512 = vmatpush1.bf16.msra.mxu0 %v495
      %513 = vmatprep.subr.bf16.mxu0 0
      %514 = vmatpush2.bf16.msra.mxu0 0
      %515 = vmatprep.subr.bf16.mxu0 0
      %516 = vmatpush2.bf16.msra.mxu0 0
      %517 = vmatprep.subr.bf16.mxu0 0
      %518 = vmatpush2.bf16.msra.mxu0 0
      %519 = vmatprep.subr.bf16.mxu0 0
      %520 = vmatpush2.bf16.msra.mxu0 0
      %521 = vmatprep.subr.bf16.mxu0 0
      %522 = vmatpush2.bf16.msra.mxu0 0
      %523 = vmatprep.subr.bf16.mxu0 0
      %524 = vmatpush2.bf16.msra.mxu0 0
      %525 = vmatprep.subr.bf16.mxu0 0
      %526 = vmatpush2.bf16.msra.mxu0 0
      %527 = vmatprep.subr.bf16.mxu0 0
      %528 = vmatpush2.bf16.msra.mxu0 0
      %529 = vmatprep.mubr.bf16.mxu0 0
      %530 = vmatmul.mubr.bf16.gmra.mxu0 %v482
      %v531 = vpop.f32.mrf.mxu0
      %v532 = vadd.f32 0.0, %v531
      %v533 = vpop.f32.mrf.mxu0
      %v534 = vpop.f32.mrf.mxu0
      %v535 = vadd.f32 0.0, %v534
      %v536 = vpop.f32.mrf.mxu0
      %537 = vmatprep.mubr.bf16.mxu0 0
      %538 = vmatmul.mubr.bf16.gmra.mxu0 %v485
      %v539 = vpop.f32.mrf.mxu0
      %v540 = vadd.f32 0.0, %v539
      %v541 = vpop.f32.mrf.mxu0
      %v542 = vpop.f32.mrf.mxu0
      %v543 = vadd.f32 0.0, %v542
      %v544 = vpop.f32.mrf.mxu0
      %545 = vmatprep.mubr.bf16.mxu0 0
      %546 = vmatmul.mubr.bf16.gmra.mxu0 %v488
      %v547 = vpop.f32.mrf.mxu0
      %v548 = vadd.f32 0.0, %v547
      %v549 = vpop.f32.mrf.mxu0
      %v550 = vpop.f32.mrf.mxu0
      %v551 = vadd.f32 0.0, %v550
      %v552 = vpop.f32.mrf.mxu0
      %553 = vmatprep.mubr.bf16.mxu0 0
      %554 = vmatmul.mubr.bf16.gmra.mxu0 %v491
      %v555 = vpop.f32.mrf.mxu0
      %v556 = vadd.f32 0.0, %v555
      %v557 = vpop.f32.mrf.mxu0
      %v558 = vpop.f32.mrf.mxu0
      %v559 = vadd.f32 0.0, %v558
      %v560 = vpop.f32.mrf.mxu0
      %561 = vdwg.mxu0
      %v570 = vunpack.c.l.b16 %v348
      %v571 = vunpack.c.l.b16 %v349
      %v572 = vunpack.c.l.b16 %v351
      %v573 = vunpack.c.l.b16 %v352
      %v574 = vunpack.c.l.b16 %v354
      %v575 = vunpack.c.l.b16 %v355
      %v576 = vunpack.c.l.b16 %v357
      %v577 = vunpack.c.l.b16 %v358
      %v578 = vpack.c.b16 %v571, %v570
      %v579 = vpack.c.b16 %v573, %v572
      %v580 = vpack.c.b16 %v575, %v574
      %v581 = vpack.c.b16 %v577, %v576
      %v583 = vsel %vm480, %v578, 0
      %v586 = vsel %vm480, %v579, 0
      %v589 = vsel %vm480, %v580, 0
      %v592 = vsel %vm480, %v581, 0
      %v595 = vsel %vm493, %v366, 0
      %597 = vmatprep.subr.bf16.mxu0 0
      %598 = vmatpush1.bf16.msra.mxu0 0
      %599 = vmatprep.subr.bf16.mxu0 0
      %600 = vmatpush1.bf16.msra.mxu0 0
      %601 = vmatprep.subr.bf16.mxu0 0
      %602 = vmatpush1.bf16.msra.mxu0 0
      %603 = vmatprep.subr.bf16.mxu0 0
      %604 = vmatpush1.bf16.msra.mxu0 0
      %605 = vmatprep.subr.bf16.mxu0 0
      %606 = vmatpush1.bf16.msra.mxu0 0
      %607 = vmatprep.subr.bf16.mxu0 0
      %608 = vmatpush1.bf16.msra.mxu0 0
      %609 = vmatprep.subr.bf16.mxu0 0
      %610 = vmatpush1.bf16.msra.mxu0 0
      %611 = vmatprep.subr.bf16.mxu0 0
      %612 = vmatpush1.bf16.msra.mxu0 %v595
      %613 = vmatprep.subr.bf16.mxu0 0
      %614 = vmatpush2.bf16.msra.mxu0 0
      %615 = vmatprep.subr.bf16.mxu0 0
      %616 = vmatpush2.bf16.msra.mxu0 0
      %617 = vmatprep.subr.bf16.mxu0 0
      %618 = vmatpush2.bf16.msra.mxu0 0
      %619 = vmatprep.subr.bf16.mxu0 0
      %620 = vmatpush2.bf16.msra.mxu0 0
      %621 = vmatprep.subr.bf16.mxu0 0
      %622 = vmatpush2.bf16.msra.mxu0 0
      %623 = vmatprep.subr.bf16.mxu0 0
      %624 = vmatpush2.bf16.msra.mxu0 0
      %625 = vmatprep.subr.bf16.mxu0 0
      %626 = vmatpush2.bf16.msra.mxu0 0
      %627 = vmatprep.subr.bf16.mxu0 0
      %628 = vmatpush2.bf16.msra.mxu0 0
      %629 = vmatprep.mubr.bf16.mxu0 0
      %630 = vmatmul.mubr.bf16.gmra.mxu0 %v583
      %v631 = vpop.f32.mrf.mxu0
      %v632 = vadd.f32 %v532, %v631
      %v633 = vpop.f32.mrf.mxu0
      %v634 = vpop.f32.mrf.mxu0
      %v635 = vadd.f32 %v535, %v634
      %v636 = vpop.f32.mrf.mxu0
      %637 = vmatprep.mubr.bf16.mxu0 0
      %638 = vmatmul.mubr.bf16.gmra.mxu0 %v586
      %v639 = vpop.f32.mrf.mxu0
      %v640 = vadd.f32 %v540, %v639
      %v641 = vpop.f32.mrf.mxu0
      %v642 = vpop.f32.mrf.mxu0
      %v643 = vadd.f32 %v543, %v642
      %v644 = vpop.f32.mrf.mxu0
      %645 = vmatprep.mubr.bf16.mxu0 0
      %646 = vmatmul.mubr.bf16.gmra.mxu0 %v589
      %v647 = vpop.f32.mrf.mxu0
      %v648 = vadd.f32 %v548, %v647
      %v649 = vpop.f32.mrf.mxu0
      %v650 = vpop.f32.mrf.mxu0
      %v651 = vadd.f32 %v551, %v650
      %v652 = vpop.f32.mrf.mxu0
      %653 = vmatprep.mubr.bf16.mxu0 0
      %654 = vmatmul.mubr.bf16.gmra.mxu0 %v592
      %v655 = vpop.f32.mrf.mxu0
      %v656 = vadd.f32 %v556, %v655
      %v657 = vpop.f32.mrf.mxu0
      %v658 = vpop.f32.mrf.mxu0
      %v659 = vadd.f32 %v559, %v658
      %v660 = vpop.f32.mrf.mxu0
      %661 = vdwg.mxu0
      %vm666 = vcmask 1042432
      %vm667 = vcmask 1046532
      %vm668 = vmor %vm666, %vm667
      %v669 = vrot.slane %v348, 5
      %v670 = vrot.slane %v669, 4
      %v671 = vrot.slane %v349, 5
      %v672 = vsel %vm668, %v670, %v671
      %v673 = vrot.slane %v671, 4
      %v674 = vrot.slane %v350, 5
      %v675 = vsel %vm668, %v673, %v674
      %v676 = vrot.slane %v351, 5
      %v677 = vrot.slane %v676, 4
      %v678 = vrot.slane %v352, 5
      %v679 = vsel %vm668, %v677, %v678
      %v680 = vrot.slane %v678, 4
      %v681 = vrot.slane %v353, 5
      %v682 = vsel %vm668, %v680, %v681
      %v683 = vrot.slane %v354, 5
      %v684 = vrot.slane %v683, 4
      %v685 = vrot.slane %v355, 5
      %v686 = vsel %vm668, %v684, %v685
      %v687 = vrot.slane %v685, 4
      %v688 = vrot.slane %v356, 5
      %v689 = vsel %vm668, %v687, %v688
      %v690 = vrot.slane %v357, 5
      %v691 = vrot.slane %v690, 4
      %v692 = vrot.slane %v358, 5
      %v693 = vsel %vm668, %v691, %v692
      %v694 = vrot.slane %v692, 4
      %v695 = vrot.slane %v359, 5
      %v696 = vsel %vm668, %v694, %v695
      %s697 = scalar_lea.vmem %s2, 8
      %v698 = vld [vmem:[%s697] sm:$0xf]
      %v699 = vunpack.c.l.b16 %v672
      %v700 = vunpack.c.l.b16 %v675
      %v701 = vunpack.c.l.b16 %v679
      %v702 = vunpack.c.l.b16 %v682
      %v703 = vunpack.c.l.b16 %v686
      %v704 = vunpack.c.l.b16 %v689
      %v705 = vunpack.c.l.b16 %v693
      %v706 = vunpack.c.l.b16 %v696
      %v707 = vpack.c.b16 %v700, %v699
      %v708 = vpack.c.b16 %v702, %v701
      %v709 = vpack.c.b16 %v704, %v703
      %v710 = vpack.c.b16 %v706, %v705
      %v712 = vsel %vm480, %v707, 0
      %v715 = vsel %vm480, %v708, 0
      %v718 = vsel %vm480, %v709, 0
      %v721 = vsel %vm480, %v710, 0
      %v724 = vsel %vm493, %v698, 0
      %726 = vmatprep.subr.bf16.mxu0 0
      %727 = vmatpush1.bf16.msra.mxu0 0
      %728 = vmatprep.subr.bf16.mxu0 0
      %729 = vmatpush1.bf16.msra.mxu0 0
      %730 = vmatprep.subr.bf16.mxu0 0
      %731 = vmatpush1.bf16.msra.mxu0 0
      %732 = vmatprep.subr.bf16.mxu0 0
      %733 = vmatpush1.bf16.msra.mxu0 0
      %734 = vmatprep.subr.bf16.mxu0 0
      %735 = vmatpush1.bf16.msra.mxu0 0
      %736 = vmatprep.subr.bf16.mxu0 0
      %737 = vmatpush1.bf16.msra.mxu0 0
      %738 = vmatprep.subr.bf16.mxu0 0
      %739 = vmatpush1.bf16.msra.mxu0 0
      %740 = vmatprep.subr.bf16.mxu0 0
      %741 = vmatpush1.bf16.msra.mxu0 %v724
      %742 = vmatprep.subr.bf16.mxu0 0
      %743 = vmatpush2.bf16.msra.mxu0 0
      %744 = vmatprep.subr.bf16.mxu0 0
      %745 = vmatpush2.bf16.msra.mxu0 0
      %746 = vmatprep.subr.bf16.mxu0 0
      %747 = vmatpush2.bf16.msra.mxu0 0
      %748 = vmatprep.subr.bf16.mxu0 0
      %749 = vmatpush2.bf16.msra.mxu0 0
      %750 = vmatprep.subr.bf16.mxu0 0
      %751 = vmatpush2.bf16.msra.mxu0 0
      %752 = vmatprep.subr.bf16.mxu0 0
      %753 = vmatpush2.bf16.msra.mxu0 0
      %754 = vmatprep.subr.bf16.mxu0 0
      %755 = vmatpush2.bf16.msra.mxu0 0
      %756 = vmatprep.subr.bf16.mxu0 0
      %757 = vmatpush2.bf16.msra.mxu0 0
      %758 = vmatprep.mubr.bf16.mxu0 0
      %759 = vmatmul.mubr.bf16.gmra.mxu0 %v712
      %v760 = vpop.f32.mrf.mxu0
      %v761 = vadd.f32 0.0, %v760
      %v762 = vpop.f32.mrf.mxu0
      %v763 = vpop.f32.mrf.mxu0
      %v764 = vadd.f32 0.0, %v763
      %v765 = vpop.f32.mrf.mxu0
      %766 = vmatprep.mubr.bf16.mxu0 0
      %767 = vmatmul.mubr.bf16.gmra.mxu0 %v715
      %v768 = vpop.f32.mrf.mxu0
      %v769 = vadd.f32 0.0, %v768
      %v770 = vpop.f32.mrf.mxu0
      %v771 = vpop.f32.mrf.mxu0
      %v772 = vadd.f32 0.0, %v771
      %v773 = vpop.f32.mrf.mxu0
      %774 = vmatprep.mubr.bf16.mxu0 0
      %775 = vmatmul.mubr.bf16.gmra.mxu0 %v718
      %v776 = vpop.f32.mrf.mxu0
      %v777 = vadd.f32 0.0, %v776
      %v778 = vpop.f32.mrf.mxu0
      %v779 = vpop.f32.mrf.mxu0
      %v780 = vadd.f32 0.0, %v779
      %v781 = vpop.f32.mrf.mxu0
      %782 = vmatprep.mubr.bf16.mxu0 0
      %783 = vmatmul.mubr.bf16.gmra.mxu0 %v721
      %v784 = vpop.f32.mrf.mxu0
      %v785 = vadd.f32 0.0, %v784
      %v786 = vpop.f32.mrf.mxu0
      %v787 = vpop.f32.mrf.mxu0
      %v788 = vadd.f32 0.0, %v787
      %v789 = vpop.f32.mrf.mxu0
      %790 = vdwg.mxu0
      %v791 = vadd.f32 %v632, %v761
      %v792 = vadd.f32 %v635, %v764
      %v793 = vadd.f32 %v640, %v769
      %v794 = vadd.f32 %v643, %v772
      %v795 = vadd.f32 %v648, %v777
      %v796 = vadd.f32 %v651, %v780
      %v797 = vadd.f32 %v656, %v785
      %v798 = vadd.f32 %v659, %v788
      %s799 = scalar_lea.vmem %s2, 12
      %v800 = vld [vmem:[%s799] sm:$0xf]
      %v803 = vunpack.c.l.b16 %v360
      %v804 = vunpack.c.l.b16 %v361
      %v805 = vpack.c.b16 %v804, %v803
      %v807 = vsel %vm480, %v805, 0
      %v810 = vsel %vm493, %v800, 0
      %812 = vmatprep.subr.bf16.mxu0 0
      %813 = vmatpush1.bf16.msra.mxu0 0
      %814 = vmatprep.subr.bf16.mxu0 0
      %815 = vmatpush1.bf16.msra.mxu0 0
      %816 = vmatprep.subr.bf16.mxu0 0
      %817 = vmatpush1.bf16.msra.mxu0 0
      %818 = vmatprep.subr.bf16.mxu0 0
      %819 = vmatpush1.bf16.msra.mxu0 0
      %820 = vmatprep.subr.bf16.mxu0 0
      %821 = vmatpush1.bf16.msra.mxu0 0
      %822 = vmatprep.subr.bf16.mxu0 0
      %823 = vmatpush1.bf16.msra.mxu0 0
      %824 = vmatprep.subr.bf16.mxu0 0
      %825 = vmatpush1.bf16.msra.mxu0 0
      %826 = vmatprep.subr.bf16.mxu0 0
      %827 = vmatpush1.bf16.msra.mxu0 %v810
      %828 = vmatprep.subr.bf16.mxu0 0
      %829 = vmatpush2.bf16.msra.mxu0 0
      %830 = vmatprep.subr.bf16.mxu0 0
      %831 = vmatpush2.bf16.msra.mxu0 0
      %832 = vmatprep.subr.bf16.mxu0 0
      %833 = vmatpush2.bf16.msra.mxu0 0
      %834 = vmatprep.subr.bf16.mxu0 0
      %835 = vmatpush2.bf16.msra.mxu0 0
      %836 = vmatprep.subr.bf16.mxu0 0
      %837 = vmatpush2.bf16.msra.mxu0 0
      %838 = vmatprep.subr.bf16.mxu0 0
      %839 = vmatpush2.bf16.msra.mxu0 0
      %840 = vmatprep.subr.bf16.mxu0 0
      %841 = vmatpush2.bf16.msra.mxu0 0
      %842 = vmatprep.subr.bf16.mxu0 0
      %843 = vmatpush2.bf16.msra.mxu0 0
      %844 = vmatprep.mubr.bf16.mxu0 0
      %845 = vmatmul.mubr.bf16.gmra.mxu0 %v586
      %v846 = vpop.f32.mrf.mxu0
      %v847 = vadd.f32 0.0, %v846
      %v848 = vpop.f32.mrf.mxu0
      %v849 = vpop.f32.mrf.mxu0
      %v850 = vadd.f32 0.0, %v849
      %v851 = vpop.f32.mrf.mxu0
      %852 = vmatprep.mubr.bf16.mxu0 0
      %853 = vmatmul.mubr.bf16.gmra.mxu0 %v589
      %v854 = vpop.f32.mrf.mxu0
      %v855 = vadd.f32 0.0, %v854
      %v856 = vpop.f32.mrf.mxu0
      %v857 = vpop.f32.mrf.mxu0
      %v858 = vadd.f32 0.0, %v857
      %v859 = vpop.f32.mrf.mxu0
      %860 = vmatprep.mubr.bf16.mxu0 0
      %861 = vmatmul.mubr.bf16.gmra.mxu0 %v592
      %v862 = vpop.f32.mrf.mxu0
      %v863 = vadd.f32 0.0, %v862
      %v864 = vpop.f32.mrf.mxu0
      %v865 = vpop.f32.mrf.mxu0
      %v866 = vadd.f32 0.0, %v865
      %v867 = vpop.f32.mrf.mxu0
      %868 = vmatprep.mubr.bf16.mxu0 0
      %869 = vmatmul.mubr.bf16.gmra.mxu0 %v807
      %v870 = vpop.f32.mrf.mxu0
      %v871 = vadd.f32 0.0, %v870
      %v872 = vpop.f32.mrf.mxu0
      %v873 = vpop.f32.mrf.mxu0
      %v874 = vadd.f32 0.0, %v873
      %v875 = vpop.f32.mrf.mxu0
      %876 = vdwg.mxu0
      %v877 = vadd.f32 %v791, %v847
      %v878 = vadd.f32 %v792, %v850
      %v879 = vadd.f32 %v793, %v855
      %v880 = vadd.f32 %v794, %v858
      %v881 = vadd.f32 %v795, %v863
      %v882 = vadd.f32 %v796, %v866
      %v883 = vadd.f32 %v797, %v871
      %v884 = vadd.f32 %v798, %v874
      %v886 = vshrl.u32 %v360, 16
      %v888 = vrot.slane %v886, 4
      %v889 = vshll.u32 %v360, 16
      %v891 = vrot.slane %v889, 5
      %v892 = vor.u32 %v888, %v891
      %v893 = vrot.slane %v892, 4
      %v895 = vshll.u32 %v361, 16
      %v897 = vrot.slane %v895, 5
      %v898 = vsel %vm369, %v893, %v897
      %v899 = vshrl.u32 %v361, 16
      %v901 = vrot.slane %v899, 4
      %v902 = vor.u32 %v901, %v897
      %v903 = vrot.slane %v902, 4
      %v905 = vshll.u32 %v362, 16
      %v907 = vrot.slane %v905, 5
      %v908 = vsel %vm369, %v903, %v907
      %s909 = scalar_lea.vmem %s2, 16
      %v910 = vld [vmem:[%s909] sm:$0xf]
      %v911 = vunpack.c.l.b16 %v898
      %v912 = vunpack.c.l.b16 %v908
      %v913 = vpack.c.b16 %v912, %v911
      %v915 = vsel %vm480, %v913, 0
      %v918 = vsel %vm493, %v910, 0
      %920 = vmatprep.subr.bf16.mxu0 0
      %921 = vmatpush1.bf16.msra.mxu0 0
      %922 = vmatprep.subr.bf16.mxu0 0
      %923 = vmatpush1.bf16.msra.mxu0 0
      %924 = vmatprep.subr.bf16.mxu0 0
      %925 = vmatpush1.bf16.msra.mxu0 0
      %926 = vmatprep.subr.bf16.mxu0 0
      %927 = vmatpush1.bf16.msra.mxu0 0
      %928 = vmatprep.subr.bf16.mxu0 0
      %929 = vmatpush1.bf16.msra.mxu0 0
      %930 = vmatprep.subr.bf16.mxu0 0
      %931 = vmatpush1.bf16.msra.mxu0 0
      %932 = vmatprep.subr.bf16.mxu0 0
      %933 = vmatpush1.bf16.msra.mxu0 0
      %934 = vmatprep.subr.bf16.mxu0 0
      %935 = vmatpush1.bf16.msra.mxu0 %v918
      %936 = vmatprep.subr.bf16.mxu0 0
      %937 = vmatpush2.bf16.msra.mxu0 0
      %938 = vmatprep.subr.bf16.mxu0 0
      %939 = vmatpush2.bf16.msra.mxu0 0
      %940 = vmatprep.subr.bf16.mxu0 0
      %941 = vmatpush2.bf16.msra.mxu0 0
      %942 = vmatprep.subr.bf16.mxu0 0
      %943 = vmatpush2.bf16.msra.mxu0 0
      %944 = vmatprep.subr.bf16.mxu0 0
      %945 = vmatpush2.bf16.msra.mxu0 0
      %946 = vmatprep.subr.bf16.mxu0 0
      %947 = vmatpush2.bf16.msra.mxu0 0
      %948 = vmatprep.subr.bf16.mxu0 0
      %949 = vmatpush2.bf16.msra.mxu0 0
      %950 = vmatprep.subr.bf16.mxu0 0
      %951 = vmatpush2.bf16.msra.mxu0 0
      %952 = vmatprep.mubr.bf16.mxu0 0
      %953 = vmatmul.mubr.bf16.gmra.mxu0 %v485
      %v954 = vpop.f32.mrf.mxu0
      %v955 = vadd.f32 0.0, %v954
      %v956 = vpop.f32.mrf.mxu0
      %v957 = vpop.f32.mrf.mxu0
      %v958 = vadd.f32 0.0, %v957
      %v959 = vpop.f32.mrf.mxu0
      %960 = vmatprep.mubr.bf16.mxu0 0
      %961 = vmatmul.mubr.bf16.gmra.mxu0 %v488
      %v962 = vpop.f32.mrf.mxu0
      %v963 = vadd.f32 0.0, %v962
      %v964 = vpop.f32.mrf.mxu0
      %v965 = vpop.f32.mrf.mxu0
      %v966 = vadd.f32 0.0, %v965
      %v967 = vpop.f32.mrf.mxu0
      %968 = vmatprep.mubr.bf16.mxu0 0
      %969 = vmatmul.mubr.bf16.gmra.mxu0 %v491
      %v970 = vpop.f32.mrf.mxu0
      %v971 = vadd.f32 0.0, %v970
      %v972 = vpop.f32.mrf.mxu0
      %v973 = vpop.f32.mrf.mxu0
      %v974 = vadd.f32 0.0, %v973
      %v975 = vpop.f32.mrf.mxu0
      %976 = vmatprep.mubr.bf16.mxu0 0
      %977 = vmatmul.mubr.bf16.gmra.mxu0 %v915
      %v978 = vpop.f32.mrf.mxu0
      %v979 = vadd.f32 0.0, %v978
      %v980 = vpop.f32.mrf.mxu0
      %v981 = vpop.f32.mrf.mxu0
      %v982 = vadd.f32 0.0, %v981
      %v983 = vpop.f32.mrf.mxu0
      %984 = vdwg.mxu0
      %v985 = vadd.f32 %v877, %v955
      %v986 = vadd.f32 %v878, %v958
      %v987 = vadd.f32 %v879, %v963
      %v988 = vadd.f32 %v880, %v966
      %v989 = vadd.f32 %v881, %v971
      %v990 = vadd.f32 %v882, %v974
      %v991 = vadd.f32 %v883, %v979
      %v992 = vadd.f32 %v884, %v982
      %v994 = vrot.slane %v360, 5
      %v995 = vrot.slane %v994, 4
      %v996 = vrot.slane %v361, 5
      %v997 = vsel %vm668, %v995, %v996
      %v998 = vrot.slane %v996, 4
      %v999 = vrot.slane %v362, 5
      %v1000 = vsel %vm668, %v998, %v999
      %s1001 = scalar_lea.vmem %s2, 20
      %v1002 = vld [vmem:[%s1001] sm:$0xf]
      %v1003 = vunpack.c.l.b16 %v997
      %v1004 = vunpack.c.l.b16 %v1000
      %v1005 = vpack.c.b16 %v1004, %v1003
      %v1007 = vsel %vm480, %v1005, 0
      %v1010 = vsel %vm493, %v1002, 0
      %1012 = vmatprep.subr.bf16.mxu0 0
      %1013 = vmatpush1.bf16.msra.mxu0 0
      %1014 = vmatprep.subr.bf16.mxu0 0
      %1015 = vmatpush1.bf16.msra.mxu0 0
      %1016 = vmatprep.subr.bf16.mxu0 0
      %1017 = vmatpush1.bf16.msra.mxu0 0
      %1018 = vmatprep.subr.bf16.mxu0 0
      %1019 = vmatpush1.bf16.msra.mxu0 0
      %1020 = vmatprep.subr.bf16.mxu0 0
      %1021 = vmatpush1.bf16.msra.mxu0 0
      %1022 = vmatprep.subr.bf16.mxu0 0
      %1023 = vmatpush1.bf16.msra.mxu0 0
      %1024 = vmatprep.subr.bf16.mxu0 0
      %1025 = vmatpush1.bf16.msra.mxu0 0
      %1026 = vmatprep.subr.bf16.mxu0 0
      %1027 = vmatpush1.bf16.msra.mxu0 %v1010
      %1028 = vmatprep.subr.bf16.mxu0 0
      %1029 = vmatpush2.bf16.msra.mxu0 0
      %1030 = vmatprep.subr.bf16.mxu0 0
      %1031 = vmatpush2.bf16.msra.mxu0 0
      %1032 = vmatprep.subr.bf16.mxu0 0
      %1033 = vmatpush2.bf16.msra.mxu0 0
      %1034 = vmatprep.subr.bf16.mxu0 0
      %1035 = vmatpush2.bf16.msra.mxu0 0
      %1036 = vmatprep.subr.bf16.mxu0 0
      %1037 = vmatpush2.bf16.msra.mxu0 0
      %1038 = vmatprep.subr.bf16.mxu0 0
      %1039 = vmatpush2.bf16.msra.mxu0 0
      %1040 = vmatprep.subr.bf16.mxu0 0
      %1041 = vmatpush2.bf16.msra.mxu0 0
      %1042 = vmatprep.subr.bf16.mxu0 0
      %1043 = vmatpush2.bf16.msra.mxu0 0
      %1044 = vmatprep.mubr.bf16.mxu0 0
      %1045 = vmatmul.mubr.bf16.gmra.mxu0 %v715
      %v1046 = vpop.f32.mrf.mxu0
      %v1047 = vadd.f32 0.0, %v1046
      %v1048 = vpop.f32.mrf.mxu0
      %v1049 = vpop.f32.mrf.mxu0
      %v1050 = vadd.f32 0.0, %v1049
      %v1051 = vpop.f32.mrf.mxu0
      %1052 = vmatprep.mubr.bf16.mxu0 0
      %1053 = vmatmul.mubr.bf16.gmra.mxu0 %v718
      %v1054 = vpop.f32.mrf.mxu0
      %v1055 = vadd.f32 0.0, %v1054
      %v1056 = vpop.f32.mrf.mxu0
      %v1057 = vpop.f32.mrf.mxu0
      %v1058 = vadd.f32 0.0, %v1057
      %v1059 = vpop.f32.mrf.mxu0
      %1060 = vmatprep.mubr.bf16.mxu0 0
      %1061 = vmatmul.mubr.bf16.gmra.mxu0 %v721
      %v1062 = vpop.f32.mrf.mxu0
      %v1063 = vadd.f32 0.0, %v1062
      %v1064 = vpop.f32.mrf.mxu0
      %v1065 = vpop.f32.mrf.mxu0
      %v1066 = vadd.f32 0.0, %v1065
      %v1067 = vpop.f32.mrf.mxu0
      %1068 = vmatprep.mubr.bf16.mxu0 0
      %1069 = vmatmul.mubr.bf16.gmra.mxu0 %v1007
      %v1070 = vpop.f32.mrf.mxu0
      %v1071 = vadd.f32 0.0, %v1070
      %v1072 = vpop.f32.mrf.mxu0
      %v1073 = vpop.f32.mrf.mxu0
      %v1074 = vadd.f32 0.0, %v1073
      %v1075 = vpop.f32.mrf.mxu0
      %1076 = vdwg.mxu0
      %v1077 = vadd.f32 %v985, %v1047
      %v1078 = vadd.f32 %v986, %v1050
      %v1079 = vadd.f32 %v987, %v1055
      %v1080 = vadd.f32 %v988, %v1058
      %v1081 = vadd.f32 %v989, %v1063
      %v1082 = vadd.f32 %v990, %v1066
      %v1083 = vadd.f32 %v991, %v1071
      %v1084 = vadd.f32 %v992, %v1074
      %s1085 = scalar_lea.vmem %s2, 24
      %v1086 = vld [vmem:[%s1085] sm:$0xf]
      %v1089 = vunpack.c.l.b16 %v363
      %v1090 = vunpack.c.l.b16 %v364
      %v1091 = vpack.c.b16 %v1090, %v1089
      %v1093 = vsel %vm480, %v1091, 0
      %v1096 = vsel %vm493, %v1086, 0
      %1098 = vmatprep.subr.bf16.mxu0 0
      %1099 = vmatpush1.bf16.msra.mxu0 0
      %1100 = vmatprep.subr.bf16.mxu0 0
      %1101 = vmatpush1.bf16.msra.mxu0 0
      %1102 = vmatprep.subr.bf16.mxu0 0
      %1103 = vmatpush1.bf16.msra.mxu0 0
      %1104 = vmatprep.subr.bf16.mxu0 0
      %1105 = vmatpush1.bf16.msra.mxu0 0
      %1106 = vmatprep.subr.bf16.mxu0 0
      %1107 = vmatpush1.bf16.msra.mxu0 0
      %1108 = vmatprep.subr.bf16.mxu0 0
      %1109 = vmatpush1.bf16.msra.mxu0 0
      %1110 = vmatprep.subr.bf16.mxu0 0
      %1111 = vmatpush1.bf16.msra.mxu0 0
      %1112 = vmatprep.subr.bf16.mxu0 0
      %1113 = vmatpush1.bf16.msra.mxu0 %v1096
      %1114 = vmatprep.subr.bf16.mxu0 0
      %1115 = vmatpush2.bf16.msra.mxu0 0
      %1116 = vmatprep.subr.bf16.mxu0 0
      %1117 = vmatpush2.bf16.msra.mxu0 0
      %1118 = vmatprep.subr.bf16.mxu0 0
      %1119 = vmatpush2.bf16.msra.mxu0 0
      %1120 = vmatprep.subr.bf16.mxu0 0
      %1121 = vmatpush2.bf16.msra.mxu0 0
      %1122 = vmatprep.subr.bf16.mxu0 0
      %1123 = vmatpush2.bf16.msra.mxu0 0
      %1124 = vmatprep.subr.bf16.mxu0 0
      %1125 = vmatpush2.bf16.msra.mxu0 0
      %1126 = vmatprep.subr.bf16.mxu0 0
      %1127 = vmatpush2.bf16.msra.mxu0 0
      %1128 = vmatprep.subr.bf16.mxu0 0
      %1129 = vmatpush2.bf16.msra.mxu0 0
      %1130 = vmatprep.mubr.bf16.mxu0 0
      %1131 = vmatmul.mubr.bf16.gmra.mxu0 %v589
      %v1132 = vpop.f32.mrf.mxu0
      %v1133 = vadd.f32 0.0, %v1132
      %v1134 = vpop.f32.mrf.mxu0
      %v1135 = vpop.f32.mrf.mxu0
      %v1136 = vadd.f32 0.0, %v1135
      %v1137 = vpop.f32.mrf.mxu0
      %1138 = vmatprep.mubr.bf16.mxu0 0
      %1139 = vmatmul.mubr.bf16.gmra.mxu0 %v592
      %v1140 = vpop.f32.mrf.mxu0
      %v1141 = vadd.f32 0.0, %v1140
      %v1142 = vpop.f32.mrf.mxu0
      %v1143 = vpop.f32.mrf.mxu0
      %v1144 = vadd.f32 0.0, %v1143
      %v1145 = vpop.f32.mrf.mxu0
      %1146 = vmatprep.mubr.bf16.mxu0 0
      %1147 = vmatmul.mubr.bf16.gmra.mxu0 %v807
      %v1148 = vpop.f32.mrf.mxu0
      %v1149 = vadd.f32 0.0, %v1148
      %v1150 = vpop.f32.mrf.mxu0
      %v1151 = vpop.f32.mrf.mxu0
      %v1152 = vadd.f32 0.0, %v1151
      %v1153 = vpop.f32.mrf.mxu0
      %1154 = vmatprep.mubr.bf16.mxu0 0
      %1155 = vmatmul.mubr.bf16.gmra.mxu0 %v1093
      %v1156 = vpop.f32.mrf.mxu0
      %v1157 = vadd.f32 0.0, %v1156
      %v1158 = vpop.f32.mrf.mxu0
      %v1159 = vpop.f32.mrf.mxu0
      %v1160 = vadd.f32 0.0, %v1159
      %v1161 = vpop.f32.mrf.mxu0
      %1162 = vdwg.mxu0
      %v1163 = vadd.f32 %v1077, %v1133
      %v1164 = vadd.f32 %v1078, %v1136
      %v1165 = vadd.f32 %v1079, %v1141
      %v1166 = vadd.f32 %v1080, %v1144
      %v1167 = vadd.f32 %v1081, %v1149
      %v1168 = vadd.f32 %v1082, %v1152
      %v1169 = vadd.f32 %v1083, %v1157
      %v1170 = vadd.f32 %v1084, %v1160
      %v1172 = vshrl.u32 %v363, 16
      %v1174 = vrot.slane %v1172, 4
      %v1175 = vshll.u32 %v363, 16
      %v1177 = vrot.slane %v1175, 5
      %v1178 = vor.u32 %v1174, %v1177
      %v1179 = vrot.slane %v1178, 4
      %v1181 = vshll.u32 %v364, 16
      %v1183 = vrot.slane %v1181, 5
      %v1184 = vsel %vm369, %v1179, %v1183
      %v1185 = vshrl.u32 %v364, 16
      %v1187 = vrot.slane %v1185, 4
      %v1188 = vor.u32 %v1187, %v1183
      %v1189 = vrot.slane %v1188, 4
      %v1191 = vshll.u32 %v365, 16
      %v1193 = vrot.slane %v1191, 5
      %v1194 = vsel %vm369, %v1189, %v1193
      %s1195 = scalar_lea.vmem %s2, 28
      %v1196 = vld [vmem:[%s1195] sm:$0xf]
      %v1197 = vunpack.c.l.b16 %v1184
      %v1198 = vunpack.c.l.b16 %v1194
      %v1199 = vpack.c.b16 %v1198, %v1197
      %v1201 = vsel %vm480, %v1199, 0
      %v1204 = vsel %vm493, %v1196, 0
      %1206 = vmatprep.subr.bf16.mxu0 0
      %1207 = vmatpush1.bf16.msra.mxu0 0
      %1208 = vmatprep.subr.bf16.mxu0 0
      %1209 = vmatpush1.bf16.msra.mxu0 0
      %1210 = vmatprep.subr.bf16.mxu0 0
      %1211 = vmatpush1.bf16.msra.mxu0 0
      %1212 = vmatprep.subr.bf16.mxu0 0
      %1213 = vmatpush1.bf16.msra.mxu0 0
      %1214 = vmatprep.subr.bf16.mxu0 0
      %1215 = vmatpush1.bf16.msra.mxu0 0
      %1216 = vmatprep.subr.bf16.mxu0 0
      %1217 = vmatpush1.bf16.msra.mxu0 0
      %1218 = vmatprep.subr.bf16.mxu0 0
      %1219 = vmatpush1.bf16.msra.mxu0 0
      %1220 = vmatprep.subr.bf16.mxu0 0
      %1221 = vmatpush1.bf16.msra.mxu0 %v1204
      %1222 = vmatprep.subr.bf16.mxu0 0
      %1223 = vmatpush2.bf16.msra.mxu0 0
      %1224 = vmatprep.subr.bf16.mxu0 0
      %1225 = vmatpush2.bf16.msra.mxu0 0
      %1226 = vmatprep.subr.bf16.mxu0 0
      %1227 = vmatpush2.bf16.msra.mxu0 0
      %1228 = vmatprep.subr.bf16.mxu0 0
      %1229 = vmatpush2.bf16.msra.mxu0 0
      %1230 = vmatprep.subr.bf16.mxu0 0
      %1231 = vmatpush2.bf16.msra.mxu0 0
      %1232 = vmatprep.subr.bf16.mxu0 0
      %1233 = vmatpush2.bf16.msra.mxu0 0
      %1234 = vmatprep.subr.bf16.mxu0 0
      %1235 = vmatpush2.bf16.msra.mxu0 0
      %1236 = vmatprep.subr.bf16.mxu0 0
      %1237 = vmatpush2.bf16.msra.mxu0 0
      %1238 = vmatprep.mubr.bf16.mxu0 0
      %1239 = vmatmul.mubr.bf16.gmra.mxu0 %v488
      %v1240 = vpop.f32.mrf.mxu0
      %v1241 = vadd.f32 0.0, %v1240
      %v1242 = vpop.f32.mrf.mxu0
      %v1243 = vpop.f32.mrf.mxu0
      %v1244 = vadd.f32 0.0, %v1243
      %v1245 = vpop.f32.mrf.mxu0
      %1246 = vmatprep.mubr.bf16.mxu0 0
      %1247 = vmatmul.mubr.bf16.gmra.mxu0 %v491
      %v1248 = vpop.f32.mrf.mxu0
      %v1249 = vadd.f32 0.0, %v1248
      %v1250 = vpop.f32.mrf.mxu0
      %v1251 = vpop.f32.mrf.mxu0
      %v1252 = vadd.f32 0.0, %v1251
      %v1253 = vpop.f32.mrf.mxu0
      %1254 = vmatprep.mubr.bf16.mxu0 0
      %1255 = vmatmul.mubr.bf16.gmra.mxu0 %v915
      %v1256 = vpop.f32.mrf.mxu0
      %v1257 = vadd.f32 0.0, %v1256
      %v1258 = vpop.f32.mrf.mxu0
      %v1259 = vpop.f32.mrf.mxu0
      %v1260 = vadd.f32 0.0, %v1259
      %v1261 = vpop.f32.mrf.mxu0
      %1262 = vmatprep.mubr.bf16.mxu0 0
      %1263 = vmatmul.mubr.bf16.gmra.mxu0 %v1201
      %v1264 = vpop.f32.mrf.mxu0
      %v1265 = vadd.f32 0.0, %v1264
      %v1266 = vpop.f32.mrf.mxu0
      %v1267 = vpop.f32.mrf.mxu0
      %v1268 = vadd.f32 0.0, %v1267
      %v1269 = vpop.f32.mrf.mxu0
      %1270 = vdwg.mxu0
      %v1271 = vadd.f32 %v1163, %v1241
      %v1272 = vadd.f32 %v1164, %v1244
      %v1273 = vadd.f32 %v1165, %v1249
      %v1274 = vadd.f32 %v1166, %v1252
      %v1275 = vadd.f32 %v1167, %v1257
      %v1276 = vadd.f32 %v1168, %v1260
      %v1277 = vadd.f32 %v1169, %v1265
      %v1278 = vadd.f32 %v1170, %v1268
      %v1280 = vrot.slane %v363, 5
      %v1281 = vrot.slane %v1280, 4
      %v1282 = vrot.slane %v364, 5
      %v1283 = vsel %vm668, %v1281, %v1282
      %v1284 = vrot.slane %v1282, 4
      %v1285 = vrot.slane %v365, 5
      %v1286 = vsel %vm668, %v1284, %v1285
      %s1287 = scalar_lea.vmem %s2, 32
      %v1288 = vld [vmem:[%s1287] sm:$0xf]
      %v1289 = vunpack.c.l.b16 %v1283
      %v1290 = vunpack.c.l.b16 %v1286
      %v1291 = vpack.c.b16 %v1290, %v1289
      %v1293 = vsel %vm480, %v1291, 0
      %v1296 = vsel %vm493, %v1288, 0
      %1298 = vmatprep.subr.bf16.mxu0 0
      %1299 = vmatpush1.bf16.msra.mxu0 0
      %1300 = vmatprep.subr.bf16.mxu0 0
      %1301 = vmatpush1.bf16.msra.mxu0 0
      %1302 = vmatprep.subr.bf16.mxu0 0
      %1303 = vmatpush1.bf16.msra.mxu0 0
      %1304 = vmatprep.subr.bf16.mxu0 0
      %1305 = vmatpush1.bf16.msra.mxu0 0
      %1306 = vmatprep.subr.bf16.mxu0 0
      %1307 = vmatpush1.bf16.msra.mxu0 0
      %1308 = vmatprep.subr.bf16.mxu0 0
      %1309 = vmatpush1.bf16.msra.mxu0 0
      %1310 = vmatprep.subr.bf16.mxu0 0
      %1311 = vmatpush1.bf16.msra.mxu0 0
      %1312 = vmatprep.subr.bf16.mxu0 0
      %1313 = vmatpush1.bf16.msra.mxu0 %v1296
      %1314 = vmatprep.subr.bf16.mxu0 0
      %1315 = vmatpush2.bf16.msra.mxu0 0
      %1316 = vmatprep.subr.bf16.mxu0 0
      %1317 = vmatpush2.bf16.msra.mxu0 0
      %1318 = vmatprep.subr.bf16.mxu0 0
      %1319 = vmatpush2.bf16.msra.mxu0 0
      %1320 = vmatprep.subr.bf16.mxu0 0
      %1321 = vmatpush2.bf16.msra.mxu0 0
      %1322 = vmatprep.subr.bf16.mxu0 0
      %1323 = vmatpush2.bf16.msra.mxu0 0
      %1324 = vmatprep.subr.bf16.mxu0 0
      %1325 = vmatpush2.bf16.msra.mxu0 0
      %1326 = vmatprep.subr.bf16.mxu0 0
      %1327 = vmatpush2.bf16.msra.mxu0 0
      %1328 = vmatprep.subr.bf16.mxu0 0
      %1329 = vmatpush2.bf16.msra.mxu0 0
      %1330 = vmatprep.mubr.bf16.mxu0 0
      %1331 = vmatmul.mubr.bf16.gmra.mxu0 %v718
      %v1332 = vpop.f32.mrf.mxu0
      %v1333 = vadd.f32 0.0, %v1332
      %v1334 = vpop.f32.mrf.mxu0
      %v1335 = vpop.f32.mrf.mxu0
      %v1336 = vadd.f32 0.0, %v1335
      %v1337 = vpop.f32.mrf.mxu0
      %1338 = vmatprep.mubr.bf16.mxu0 0
      %1339 = vmatmul.mubr.bf16.gmra.mxu0 %v721
      %v1340 = vpop.f32.mrf.mxu0
      %v1341 = vadd.f32 0.0, %v1340
      %v1342 = vpop.f32.mrf.mxu0
      %v1343 = vpop.f32.mrf.mxu0
      %v1344 = vadd.f32 0.0, %v1343
      %v1345 = vpop.f32.mrf.mxu0
      %1346 = vmatprep.mubr.bf16.mxu0 0
      %1347 = vmatmul.mubr.bf16.gmra.mxu0 %v1007
      %v1348 = vpop.f32.mrf.mxu0
      %v1349 = vadd.f32 0.0, %v1348
      %v1350 = vpop.f32.mrf.mxu0
      %v1351 = vpop.f32.mrf.mxu0
      %v1352 = vadd.f32 0.0, %v1351
      %v1353 = vpop.f32.mrf.mxu0
      %1354 = vmatprep.mubr.bf16.mxu0 0
      %1355 = vmatmul.mubr.bf16.gmra.mxu0 %v1293
      %v1356 = vpop.f32.mrf.mxu0
      %v1357 = vadd.f32 0.0, %v1356
      %v1358 = vpop.f32.mrf.mxu0
      %v1359 = vpop.f32.mrf.mxu0
      %v1360 = vadd.f32 0.0, %v1359
      %v1361 = vpop.f32.mrf.mxu0
      %1362 = vdwg.mxu0
      %v1363 = vadd.f32 %v1271, %v1333
      %v1364 = vadd.f32 %v1272, %v1336
      %v1365 = vadd.f32 %v1273, %v1341
      %v1366 = vadd.f32 %v1274, %v1344
      %v1367 = vadd.f32 %v1275, %v1349
      %v1368 = vadd.f32 %v1276, %v1352
      %v1369 = vadd.f32 %v1277, %v1357
      %v1370 = vadd.f32 %v1278, %v1360
      %v1371 = vld [vmem:[%s3] sm:$0x1]
      %v1373 = vlaneseq
      %v1374 = vshrl.u32 %v1373, 7
      %v1375 = vsub.s32 0, %v1374
      %v1376 = vrot.slane %v1371, %v1375
      %v1378 = vmul.f32 %v1363, %v1376
      %v1379 = vmul.f32 %v1364, %v1376
      %v1380 = vmul.f32 %v1365, %v1376
      %v1381 = vmul.f32 %v1366, %v1376
      %v1382 = vmul.f32 %v1367, %v1376
      %v1383 = vmul.f32 %v1368, %v1376
      %v1384 = vmul.f32 %v1369, %v1376
      %v1385 = vmul.f32 %v1370, %v1376
      %v1386 = vld [vmem:[%s4] sm:$0x1]
      %v1388 = vlaneseq
      %v1389 = vshrl.u32 %v1388, 7
      %v1390 = vsub.s32 0, %v1389
      %v1391 = vrot.slane %v1386, %v1390
      %v1393 = vadd.f32 %v1378, %v1391
      %v1394 = vadd.f32 %v1379, %v1391
      %v1395 = vadd.f32 %v1380, %v1391
      %v1396 = vadd.f32 %v1381, %v1391
      %v1397 = vadd.f32 %v1382, %v1391
      %v1398 = vadd.f32 %v1383, %v1391
      %v1399 = vadd.f32 %v1384, %v1391
      %v1400 = vadd.f32 %v1385, %v1391
      %vm1401 = vcmp.gt.f32.partialorder %v1393, 0.0
      %vm1402 = vcmp.gt.f32.partialorder %v1394, 0.0
      %vm1403 = vcmp.gt.f32.partialorder %v1395, 0.0
      %vm1404 = vcmp.gt.f32.partialorder %v1396, 0.0
      %vm1405 = vcmp.gt.f32.partialorder %v1397, 0.0
      %vm1406 = vcmp.gt.f32.partialorder %v1398, 0.0
      %vm1407 = vcmp.gt.f32.partialorder %v1399, 0.0
      %vm1408 = vcmp.gt.f32.partialorder %v1400, 0.0
      %v1409 = vmin.f32 %v1393, 0.0
      %v1410 = vmin.f32 %v1394, 0.0
      %v1411 = vmin.f32 %v1395, 0.0
      %v1412 = vmin.f32 %v1396, 0.0
      %v1413 = vmin.f32 %v1397, 0.0
      %v1414 = vmin.f32 %v1398, 0.0
      %v1415 = vmin.f32 %v1399, 0.0
      %v1416 = vmin.f32 %v1400, 0.0
      %v1417 = vmul.f32 %v1409, 1.442695
      %v1418 = vpow.pop %v1417
      %v1419 = vmul.f32 %v1410, 1.442695
      %v1420 = vpow.pop %v1419
      %v1421 = vmul.f32 %v1411, 1.442695
      %v1422 = vpow.pop %v1421
      %v1423 = vmul.f32 %v1412, 1.442695
      %v1424 = vpow.pop %v1423
      %v1425 = vmul.f32 %v1413, 1.442695
      %v1426 = vpow.pop %v1425
      %v1427 = vmul.f32 %v1414, 1.442695
      %v1428 = vpow.pop %v1427
      %v1429 = vmul.f32 %v1415, 1.442695
      %v1430 = vpow.pop %v1429
      %v1431 = vmul.f32 %v1416, 1.442695
      %v1432 = vpow.pop %v1431
      %v1433 = vsub.f32 %v1418, 1.0
      %v1434 = vsub.f32 %v1420, 1.0
      %v1435 = vsub.f32 %v1422, 1.0
      %v1436 = vsub.f32 %v1424, 1.0
      %v1437 = vsub.f32 %v1426, 1.0
      %v1438 = vsub.f32 %v1428, 1.0
      %v1439 = vsub.f32 %v1430, 1.0
      %v1440 = vsub.f32 %v1432, 1.0
      %v1441 = vsel %vm1401, %v1393, %v1433
      %v1442 = vsel %vm1402, %v1394, %v1434
      %v1443 = vsel %vm1403, %v1395, %v1435
      %v1444 = vsel %vm1404, %v1396, %v1436
      %v1445 = vsel %vm1405, %v1397, %v1437
      %v1446 = vsel %vm1406, %v1398, %v1438
      %v1447 = vsel %vm1407, %v1399, %v1439
      %v1448 = vsel %vm1408, %v1400, %v1440
      %v1449 = vpack.c.bf16 %v1442, %v1441
      %v1450 = vpack.c.bf16 %v1444, %v1443
      %v1451 = vpack.c.bf16 %v1446, %v1445
      %v1452 = vpack.c.bf16 %v1448, %v1447
      %v1457 = vunpack.c.l.b16 %v1449
      %v1458 = vunpack.c.h.b16 %v1449
      %v1459 = vunpack.c.l.b16 %v1450
      %v1460 = vunpack.c.h.b16 %v1450
      %v1461 = vunpack.c.l.b16 %v1451
      %v1462 = vunpack.c.h.b16 %v1451
      %v1463 = vunpack.c.l.b16 %v1452
      %v1464 = vunpack.c.h.b16 %v1452
      %v1465 = vpack.c.b16 %v1457, %v1457
      %v1466 = vpack.c.b16 %v1458, %v1458
      %v1467 = vpack.c.b16 %v1459, %v1459
      %v1468 = vpack.c.b16 %v1460, %v1460
      %v1469 = vpack.c.b16 %v1461, %v1461
      %v1470 = vpack.c.b16 %v1462, %v1462
      %v1471 = vpack.c.b16 %v1463, %v1463
      %v1472 = vpack.c.b16 %v1464, %v1464
      %vm1481 = vcmask 27648
      %1482 = vst.msk [vmem:[%s345] sm:$0xf] %vm1481, %v1465
      %1483 = vst.msk [vmem:[%s345 + $0x4] sm:$0xf] %vm1481, %v1466
      %1484 = vst.msk [vmem:[%s345 + $0x8] sm:$0xf] %vm1481, %v1467
      %1485 = vst.msk [vmem:[%s345 + $0xc] sm:$0xf] %vm1481, %v1468
      %1486 = vst.msk [vmem:[%s345 + $0x10] sm:$0xf] %vm1481, %v1469
      %1487 = vst.msk [vmem:[%s345 + $0x14] sm:$0xf] %vm1481, %v1470
      %1488 = vst.msk [vmem:[%s345 + $0x18] sm:$0xf] %vm1481, %v1471
      %1489 = vst.msk [vmem:[%s345 + $0x1c] sm:$0xf] %vm1481, %v1472
      %s1490 = smul.u32 4, %s21
      %p1491 = scmp.lt.s32.totalorder %s20, 1
      %s1492 = scalar_select %p1491, %s20, 1
      %p1493 = scmp.lt.s32.totalorder %s1490, 15
      %s1494 = scalar_select %p1493, %s1490, 15
      %s1495 = smul.addr %s1494, 2
      %s1496 = smul.addr %s1492, 32
      %s1497 = sadd.s32 %s1495, %s1496
      %s1498 = smul.addr %s1497, 4
      %s1499 = scalar_lea.vmem %s5, %s1498
      // Predicated region
      $region41: #{_forward.4} parent=39 // pred_check
        %p1500 = pneg %p171
      $region42: #{_forward.4} parent=39 // pred_check_branch
        %1502 = sbr.rel (%p1500) target = $region44
      $region43: #{_forward.4} parent=39 // pred_region
        %s1503 = smul.u32 4, %s21
      $region44: #{_forward.4} parent=39 // pred_fallthru
        _
    $region40: #{_forward.4} parent=5 // pred_fallthru
      _
    %p1504 = scmp.le.s32.totalorder 2, %s11
    // Predicated region
    $region45: #{_forward.4} parent=5 // pred_check
      %p1505 = pneg %p1504
    $region46: #{_forward.4} parent=5 // pred_check_branch
      %1507 = sbr.rel (%p1505) target = $region48
    $region47: #{_forward.4} parent=5 // pred_region
      %s1508 = ssub.s32 %s11, 2
      // Predicated region
      $region49: #{_forward.4} parent=47 // pred_check
        %p1509 = pneg %p177
      $region50: #{_forward.4} parent=47 // pred_check_branch
        %1511 = sbr.rel (%p1509) target = $region52
      $region51: #{_forward.4} parent=47 // pred_region
        %s1512 = smul.u32 4, %s23
        %p1513 = scmp.lt.s32.totalorder %s22, 1
        %s1514 = scalar_select %p1513, %s22, 1
        %p1515 = scmp.lt.s32.totalorder %s1512, 15
        %s1516 = scalar_select %p1515, %s1512, 15
        %s1517 = smul.addr %s1516, 2
        %s1518 = smul.addr %s1514, 32
        %s1519 = sadd.s32 %s1517, %s1518
        %s1520 = smul.addr %s1519, 4
        %s1521 = scalar_lea.vmem %s5, %s1520
      $region52: #{_forward.4} parent=47 // pred_fallthru
        _
    $region48: #{_forward.4} parent=5 // pred_fallthru
      _
  $region6: #{_forward.4} parent=0 // loop_footer
    %s15 = sadd.s32 1, %s11
  $region7: #{_forward.4} parent=0 // loop_footer_branch
    %10 = sbr.rel target = $region3
  $region8: #{_forward.4} parent=0 // loop_exit
    _

// kernel: _forward.5
$region0: #{_forward.5}
  #allocation0 [shape = 'u32[]', space=smem, size = 0x4, offset = 0x4, fixed_abs, tag = 'smem constant byte address 0x4 - core index']
  #allocation1 [shape = 'u32[144,128]{1,0:T(1,128)}', space=vmem, size = 0x12000, scoped, tag = 'internal scratch']
  %s0 = inlined_call_operand.vmem [shape: bf16[2,18,18,4], index: 0, kind: input, shape index: {}, may-alias: {0,1}]
  %s1 = inlined_call_operand.vmem [shape: bf16[2,18,18,4], index: 1, kind: input, shape index: {}, may-alias: {0,1}]
  %s2 = inlined_call_operand.vmem [shape: bf16[9,4,4], index: 2, kind: input, shape index: {}]
  %s3 = inlined_call_operand.vmem [shape: f32[1,4], index: 3, kind: input, shape index: {}]
  %s4 = inlined_call_operand.vmem [shape: f32[1,4], index: 4, kind: input, shape index: {}]
  %s5 = inlined_call_operand.vmem [shape: f32[2,16,16,4], index: 5, kind: output, shape index: {}]
  %s6 = sld [smem:[#allocation0]]
  $region53: #{_forward.5} parent=0
    _
  %s8 = ssub.s32 1, %s6
  %s9 = scalar_select 0, %s8, %s6
  loop: start=0, step=1, limit=10
  $region2: #{_forward.5} parent=0 // loop_pre_header
    _
  $region3: #{_forward.5} parent=0 // loop_header
    %s11 = sphi 0, %s15
    %p12 = scmp.ge.s32.totalorder %s11, 10
    %s18 = sphi 0, %s30
    %s19 = sphi 0, %s26
    %s20 = sphi 0, %s18
    %s21 = sphi 0, %s19
    %s22 = sphi 0, %s20
    %s23 = sphi 0, %s21
    %s35 = sphi 0, %s37
    %s38 = sphi 0, %s35
    %s39 = sphi 0, %s38
    %s55 = sphi 0, %s39
    %s67 = sphi 0, %s69
    %s70 = sphi 0, %s67
    %s71 = sphi 0, %s70
    %s87 = sphi 0, %s71
    %s91 = sphi 0, %s91
    %s93 = sphi 0, %s91
    %s94 = sphi 0, %s93
    %s108 = sphi 0, %s94
    %s112 = sphi 0, %s112
    %s114 = sphi 0, %s112
    %s115 = sphi 0, %s114
    %s129 = sphi 0, %s115
    %s133 = sphi 0, %s133
    %s135 = sphi 0, %s133
    %s136 = sphi 0, %s135
    %s150 = sphi 0, %s136
    %s158 = sphi 0, %s160
    %s161 = sphi 0, %s158
    %s162 = sphi 0, %s161
    %s178 = sphi 0, %s162
  $region4: #{_forward.5} parent=0 // loop_header_branch
    %14 = sbr.rel (%p12) target = $region8
  $region5: #{_forward.5} parent=0 // loop_body
    %s16 = ssub.s32 %s11, 1
    %s17 = ssub.s32 %s11, 2
    %s24 = sadd.s32 1, %s19
    %p25 = scmp.ge.s32.totalorder %s24, 4
    %s26 = scalar_select %p25, 0, %s24
    %s27 = sadd.s32 1, %s18
    %s28 = scalar_select %p25, %s27, %s18
    %p29 = scmp.ge.s32.totalorder %s28, 2
    %s30 = scalar_select %p29, 0, %s28
    %s31 = ssub.s32 %s18, %s30
    %s32 = ssub.s32 %s19, %s26
    %s33 = sor.u32 %s31, %s32
    %p34 = scmp.eq.s32.totalorder %s33, 0
    %s36 = sadd.s32 %s35, 1
    %s37 = scalar_select %p34, %s35, %s36
    %p40 = pneg %p34
    %p41 = scmp.eq.s32.totalorder %s11, 7
    %p42 = por %p40, %p41
    %p43 = scmp.ne.s32.totalorder %s35, %s38
    %p44 = scmp.eq.s32.totalorder %s11, 0
    %p45 = por %p43, %p44
    %p46 = scmp.ne.s32.totalorder %s35, %s38
    %p47 = scmp.eq.s32.totalorder %s16, 7
    %p48 = por %p46, %p47
    %p49 = scmp.ne.s32.totalorder %s38, %s39
    %p50 = scmp.eq.s32.totalorder %s16, 0
    %p51 = por %p49, %p50
    %p52 = scmp.ne.s32.totalorder %s38, %s39
    %p53 = scmp.eq.s32.totalorder %s17, 7
    %p54 = por %p52, %p53
    %p56 = scmp.ne.s32.totalorder %s39, %s55
    %p57 = scmp.eq.s32.totalorder %s17, 0
    %p58 = por %p56, %p57
    %s59 = sadd.s32 %s19, 1
    %s60 = smul.u32 %s59, 2
    %s61 = sadd.s32 %s26, 1
    %s62 = smul.u32 %s61, 2
    %s63 = ssub.s32 %s18, %s30
    %s64 = ssub.s32 %s60, %s62
    %s65 = sor.u32 %s63, %s64
    %p66 = scmp.eq.s32.totalorder %s65, 0
    %s68 = sadd.s32 %s67, 1
    %s69 = scalar_select %p66, %s67, %s68
    %p72 = pneg %p66
    %p73 = scmp.eq.s32.totalorder %s11, 7
    %p74 = por %p72, %p73
    %p75 = scmp.ne.s32.totalorder %s67, %s70
    %p76 = scmp.eq.s32.totalorder %s11, 0
    %p77 = por %p75, %p76
    %p78 = scmp.ne.s32.totalorder %s67, %s70
    %p79 = scmp.eq.s32.totalorder %s16, 7
    %p80 = por %p78, %p79
    %p81 = scmp.ne.s32.totalorder %s70, %s71
    %p82 = scmp.eq.s32.totalorder %s16, 0
    %p83 = por %p81, %p82
    %p84 = scmp.ne.s32.totalorder %s70, %s71
    %p85 = scmp.eq.s32.totalorder %s17, 7
    %p86 = por %p84, %p85
    %p88 = scmp.ne.s32.totalorder %s71, %s87
    %p89 = scmp.eq.s32.totalorder %s17, 0
    %p90 = por %p88, %p89
    %s92 = sadd.s32 %s91, 1
    %p95 = scmp.eq.s32.totalorder %s11, 7
    %p96 = scmp.ne.s32.totalorder %s91, %s93
    %p97 = scmp.eq.s32.totalorder %s11, 0
    %p98 = por %p96, %p97
    %p99 = scmp.ne.s32.totalorder %s91, %s93
    %p100 = scmp.eq.s32.totalorder %s16, 7
    %p101 = por %p99, %p100
    %p102 = scmp.ne.s32.totalorder %s93, %s94
    %p103 = scmp.eq.s32.totalorder %s16, 0
    %p104 = por %p102, %p103
    %p105 = scmp.ne.s32.totalorder %s93, %s94
    %p106 = scmp.eq.s32.totalorder %s17, 7
    %p107 = por %p105, %p106
    %p109 = scmp.ne.s32.totalorder %s94, %s108
    %p110 = scmp.eq.s32.totalorder %s17, 0
    %p111 = por %p109, %p110
    %s113 = sadd.s32 %s112, 1
    %p116 = scmp.eq.s32.totalorder %s11, 7
    %p117 = scmp.ne.s32.totalorder %s112, %s114
    %p118 = scmp.eq.s32.totalorder %s11, 0
    %p119 = por %p117, %p118
    %p120 = scmp.ne.s32.totalorder %s112, %s114
    %p121 = scmp.eq.s32.totalorder %s16, 7
    %p122 = por %p120, %p121
    %p123 = scmp.ne.s32.totalorder %s114, %s115
    %p124 = scmp.eq.s32.totalorder %s16, 0
    %p125 = por %p123, %p124
    %p126 = scmp.ne.s32.totalorder %s114, %s115
    %p127 = scmp.eq.s32.totalorder %s17, 7
    %p128 = por %p126, %p127
    %p130 = scmp.ne.s32.totalorder %s115, %s129
    %p131 = scmp.eq.s32.totalorder %s17, 0
    %p132 = por %p130, %p131
    %s134 = sadd.s32 %s133, 1
    %p137 = scmp.eq.s32.totalorder %s11, 7
    %p138 = scmp.ne.s32.totalorder %s133, %s135
    %p139 = scmp.eq.s32.totalorder %s11, 0
    %p140 = por %p138, %p139
    %p141 = scmp.ne.s32.totalorder %s133, %s135
    %p142 = scmp.eq.s32.totalorder %s16, 7
    %p143 = por %p141, %p142
    %p144 = scmp.ne.s32.totalorder %s135, %s136
    %p145 = scmp.eq.s32.totalorder %s16, 0
    %p146 = por %p144, %p145
    %p147 = scmp.ne.s32.totalorder %s135, %s136
    %p148 = scmp.eq.s32.totalorder %s17, 7
    %p149 = por %p147, %p148
    %p151 = scmp.ne.s32.totalorder %s136, %s150
    %p152 = scmp.eq.s32.totalorder %s17, 0
    %p153 = por %p151, %p152
    %s154 = ssub.s32 %s18, %s30
    %s155 = ssub.s32 %s19, %s26
    %s156 = sor.u32 %s154, %s155
    %p157 = scmp.eq.s32.totalorder %s156, 0
    %s159 = sadd.s32 %s158, 1
    %s160 = scalar_select %p157, %s158, %s159
    %p163 = pneg %p157
    %p164 = scmp.eq.s32.totalorder %s11, 7
    %p165 = por %p163, %p164
    %p166 = scmp.ne.s32.totalorder %s158, %s161
    %p167 = scmp.eq.s32.totalorder %s11, 0
    %p168 = por %p166, %p167
    %p169 = scmp.ne.s32.totalorder %s158, %s161
    %p170 = scmp.eq.s32.totalorder %s16, 7
    %p171 = por %p169, %p170
    %p172 = scmp.ne.s32.totalorder %s161, %s162
    %p173 = scmp.eq.s32.totalorder %s16, 0
    %p174 = por %p172, %p173
    %p175 = scmp.ne.s32.totalorder %s161, %s162
    %p176 = scmp.eq.s32.totalorder %s17, 7
    %p177 = por %p175, %p176
    %p179 = scmp.ne.s32.totalorder %s162, %s178
    %p180 = scmp.eq.s32.totalorder %s17, 0
    %p181 = por %p179, %p180
    %p182 = scmp.le.s32.totalorder 1, %s11
    %p183 = scmp.lt.s32.totalorder %s11, 9
    %p184 = pnand %p182, %p183
    %p185 = pneg %p184
    // Predicated region
    $region9: #{_forward.5} parent=5 // pred_check
      _
    $region10: #{_forward.5} parent=5 // pred_check_branch
      %187 = sbr.rel (%p184) target = $region12
    $region11: #{_forward.5} parent=5 // pred_region
      %s188 = ssub.s32 %s11, 1
      // Predicated region
      $region13: #{_forward.5} parent=11 // pred_check
        %p189 = pneg %p104
      $region14: #{_forward.5} parent=11 // pred_check_branch
        %191 = sbr.rel (%p189) target = $region16
      $region15: #{_forward.5} parent=11 // pred_region
        _
      $region16: #{_forward.5} parent=11 // pred_fallthru
        _
      // Predicated region
      $region17: #{_forward.5} parent=11 // pred_check
        %p192 = pneg %p125
      $region18: #{_forward.5} parent=11 // pred_check_branch
        %194 = sbr.rel (%p192) target = $region20
      $region19: #{_forward.5} parent=11 // pred_region
        _
      $region20: #{_forward.5} parent=11 // pred_fallthru
        _
      // Predicated region
      $region21: #{_forward.5} parent=11 // pred_check
        %p195 = pneg %p146
      $region22: #{_forward.5} parent=11 // pred_check_branch
        %197 = sbr.rel (%p195) target = $region24
      $region23: #{_forward.5} parent=11 // pred_region
        _
      $region24: #{_forward.5} parent=11 // pred_fallthru
        _
    $region12: #{_forward.5} parent=5 // pred_fallthru
      _
    %p198 = scmp.lt.s32.totalorder %s11, 8
    // Predicated region
    $region25: #{_forward.5} parent=5 // pred_check
      %p199 = pneg %p198
    $region26: #{_forward.5} parent=5 // pred_check_branch
      %201 = sbr.rel (%p199) target = $region28
    $region27: #{_forward.5} parent=5 // pred_region
      // Predicated region
      $region29: #{_forward.5} parent=27 // pred_check
        %p202 = pneg %p45
      $region30: #{_forward.5} parent=27 // pred_check_branch
        %204 = sbr.rel (%p202) target = $region32
      $region31: #{_forward.5} parent=27 // pred_region
        %s205 = smul.u32 4, %s19
        %s206 = ssub.s32 18, %s205
        %p207 = scmp.lt.s32.totalorder %s206, 4
        %s208 = scalar_select %p207, %s206, 4
        %s209 = smul.u32 64, %s208
        %s210 = smul.u32 %s209, 3
        %p211 = scmp.lt.s32.totalorder %s18, 1
        %s212 = scalar_select %p211, %s18, 1
        %p213 = scmp.lt.s32.totalorder %s205, 17
        %s214 = scalar_select %p213, %s205, 17
        %s215 = smul.addr %s214, 3
        %s216 = smul.addr %s212, 54
        %s217 = sadd.s32 %s215, %s216
        %s218 = smul.addr %s217, 4
        %s219 = scalar_lea.vmem %s0, %s218
        %s220 = smul.u32 4, %s19
        %s221 = ssub.s32 18, %s220
        %p222 = scmp.lt.s32.totalorder %s221, 4
        %s223 = scalar_select %p222, %s221, 4
        %s224 = smul.u32 64, %s223
        %s225 = smul.u32 %s224, 3
      $region32: #{_forward.5} parent=27 // pred_fallthru
        _
      // Predicated region
      $region33: #{_forward.5} parent=27 // pred_check
        %p226 = pneg %p77
      $region34: #{_forward.5} parent=27 // pred_check_branch
        %228 = sbr.rel (%p226) target = $region36
      $region35: #{_forward.5} parent=27 // pred_region
        %s229 = sadd.s32 %s19, 1
        %s230 = smul.u32 %s229, 2
        %s231 = smul.u32 2, %s230
        %p232 = scmp.lt.s32.totalorder %s18, 1
        %s233 = scalar_select %p232, %s18, 1
        %p234 = scmp.lt.s32.totalorder %s231, 17
        %s235 = scalar_select %p234, %s231, 17
        %s236 = smul.addr %s235, 3
        %s237 = smul.addr %s233, 54
        %s238 = sadd.s32 %s236, %s237
        %s239 = smul.addr %s238, 4
        %s240 = scalar_lea.vmem %s1, %s239
        %s241 = sadd.s32 %s19, 1
        %s242 = smul.u32 %s241, 2
        %s243 = smul.u32 2, %s242
      $region36: #{_forward.5} parent=27 // pred_fallthru
        _
    $region28: #{_forward.5} parent=5 // pred_fallthru
      _
    %p244 = scmp.le.s32.totalorder 1, %s11
    %p245 = scmp.lt.s32.totalorder %s11, 9
    %p246 = pnand %p244, %p245
    %p247 = pneg %p246
    // Predicated region
    $region37: #{_forward.5} parent=5 // pred_check
      _
    $region38: #{_forward.5} parent=5 // pred_check_branch
      %249 = sbr.rel (%p246) target = $region40
    $region39: #{_forward.5} parent=5 // pred_region
      %s250 = ssub.s32 %s11, 1
      %s251 = smul.u32 4, %s21
      %s252 = ssub.s32 18, %s251
      %p253 = scmp.lt.s32.totalorder %s252, 4
      %s254 = scalar_select %p253, %s252, 4
      %s255 = smul.u32 64, %s254
      %s256 = smul.u32 %s255, 3
      %p257 = scmp.lt.s32.totalorder %s20, 1
      %s258 = scalar_select %p257, %s20, 1
      %p259 = scmp.lt.s32.totalorder %s251, 17
      %s260 = scalar_select %p259, %s251, 17
      %s261 = smul.addr %s260, 3
      %s262 = smul.addr %s258, 54
      %s263 = sadd.s32 %s261, %s262
      %s264 = smul.addr %s263, 4
      %s265 = scalar_lea.vmem %s0, %s264
      %p266 = pneg %p51
      %p267 = pneg %p48
      %s268 = sadd.s32 %s21, 1
      %s269 = smul.u32 %s268, 2
      %s270 = smul.u32 2, %s269
      %p271 = scmp.lt.s32.totalorder %s20, 1
      %s272 = scalar_select %p271, %s20, 1
      %p273 = scmp.lt.s32.totalorder %s270, 17
      %s274 = scalar_select %p273, %s270, 17
      %s275 = smul.addr %s274, 3
      %s276 = smul.addr %s272, 54
      %s277 = sadd.s32 %s275, %s276
      %s278 = smul.addr %s277, 4
      %s279 = scalar_lea.vmem %s1, %s278
      %p280 = pneg %p83
      %p281 = pneg %p80
      %p282 = pneg %p104
      %p283 = pneg %p101
      %p284 = pneg %p125
      %p285 = pneg %p122
      %p286 = pneg %p146
      %p287 = pneg %p143
      %p288 = pneg %p174
      %p289 = pneg %p171
      %s290 = smul.u32 4, %s21
      %p291 = scmp.lt.s32.totalorder %s20, 1
      %s292 = scalar_select %p291, %s20, 1
      %p293 = scmp.lt.s32.totalorder %s290, 15
      %s294 = scalar_select %p293, %s290, 15
      %s295 = smul.addr %s294, 2
      %s296 = smul.addr %s292, 32
      %s297 = sadd.s32 %s295, %s296
      %s298 = smul.addr %s297, 8
      %s299 = scalar_lea.vmem %s5, %s298
      %s300 = smul.u32 4, %s21
      %s301 = ssub.s32 18, %s300
      %p302 = scmp.lt.s32.totalorder %s301, 4
      %s303 = scalar_select %p302, %s301, 4
      %s304 = smul.u32 64, %s303
      %s305 = smul.u32 %s304, 3
      %p306 = scmp.lt.s32.totalorder %s20, 1
      %s307 = scalar_select %p306, %s20, 1
      %p308 = scmp.lt.s32.totalorder %s300, 17
      %s309 = scalar_select %p308, %s300, 17
      %s310 = smul.addr %s309, 3
      %s311 = smul.addr %s307, 54
      %s312 = sadd.s32 %s310, %s311
      %s313 = smul.addr %s312, 4
      %s314 = scalar_lea.vmem %s0, %s313
      %s315 = smul.u32 4, %s21
      %s316 = ssub.s32 18, %s315
      %p317 = scmp.lt.s32.totalorder %s316, 4
      %s318 = scalar_select %p317, %s316, 4
      %s319 = smul.u32 64, %s318
      %s320 = smul.u32 %s319, 3
      %s321 = sadd.s32 %s21, 1
      %s322 = smul.u32 %s321, 2
      %s323 = smul.u32 2, %s322
      %p324 = scmp.lt.s32.totalorder %s20, 1
      %s325 = scalar_select %p324, %s20, 1
      %p326 = scmp.lt.s32.totalorder %s323, 17
      %s327 = scalar_select %p326, %s323, 17
      %s328 = smul.addr %s327, 3
      %s329 = smul.addr %s325, 54
      %s330 = sadd.s32 %s328, %s329
      %s331 = smul.addr %s330, 4
      %s332 = scalar_lea.vmem %s1, %s331
      %s333 = sadd.s32 %s21, 1
      %s334 = smul.u32 %s333, 2
      %s335 = smul.u32 2, %s334
      %s336 = smul.u32 4, %s21
      %p337 = scmp.lt.s32.totalorder %s20, 1
      %s338 = scalar_select %p337, %s20, 1
      %p339 = scmp.lt.s32.totalorder %s336, 15
      %s340 = scalar_select %p339, %s336, 15
      %s341 = smul.addr %s340, 2
      %s342 = smul.addr %s338, 32
      %s343 = sadd.s32 %s341, %s342
      %s344 = smul.addr %s343, 8
      %s345 = scalar_lea.vmem %s5, %s344
      %s346 = smul.u32 4, %s21
      %v348 = vld [vmem:[%s314] sm:$0xf]
      %v349 = vld [vmem:[%s314 + $0x4] sm:$0xf]
      %v350 = vld [vmem:[%s314 + $0x8] sm:$0x1]
      %v351 = vld [vmem:[%s314 + $0xc] sm:$0xf]
      %v352 = vld [vmem:[%s314 + $0x10] sm:$0xf]
      %v353 = vld [vmem:[%s314 + $0x14] sm:$0x1]
      %v354 = vld [vmem:[%s314 + $0x18] sm:$0xf]
      %v355 = vld [vmem:[%s314 + $0x1c] sm:$0xf]
      %v356 = vld [vmem:[%s314 + $0x20] sm:$0x1]
      %v357 = vld [vmem:[%s314 + $0x24] sm:$0xf]
      %v358 = vld [vmem:[%s314 + $0x28] sm:$0xf]
      %v359 = vld [vmem:[%s314 + $0x2c] sm:$0x1]
      %v360 = vld [vmem:[%s332] sm:$0xf]
      %v361 = vld [vmem:[%s332 + $0x4] sm:$0xf]
      %v362 = vld [vmem:[%s332 + $0x8] sm:$0x1]
      %v363 = vld [vmem:[%s332 + $0xc] sm:$0xf]
      %v364 = vld [vmem:[%s332 + $0x10] sm:$0xf]
      %v365 = vld [vmem:[%s332 + $0x14] sm:$0x1]
      %v366 = vld [vmem:[%s2] sm:$0x3]
      %vm367 = vsmask.f32 3328
      %vm368 = vsmask.f32 7440
      %vm369 = vmor %vm367, %vm368
      %v371 = vshrl.u32 %v348, 16
      %v373 = vrot.slane %v371, 4
      %v374 = vshll.u32 %v348, 16
      %v376 = vrot.slane %v374, 5
      %v377 = vor.u32 %v373, %v376
      %v378 = vrot.slane %v377, 4
      %v380 = vshll.u32 %v349, 16
      %v382 = vrot.slane %v380, 5
      %v383 = vsel %vm369, %v378, %v382
      %v384 = vshrl.u32 %v349, 16
      %v386 = vrot.slane %v384, 4
      %v387 = vor.u32 %v386, %v382
      %v388 = vrot.slane %v387, 4
      %v390 = vshll.u32 %v350, 16
      %v392 = vrot.slane %v390, 5
      %v393 = vsel %vm369, %v388, %v392
      %v395 = vshrl.u32 %v351, 16
      %v397 = vrot.slane %v395, 4
      %v398 = vshll.u32 %v351, 16
      %v400 = vrot.slane %v398, 5
      %v401 = vor.u32 %v397, %v400
      %v402 = vrot.slane %v401, 4
      %v404 = vshll.u32 %v352, 16
      %v406 = vrot.slane %v404, 5
      %v407 = vsel %vm369, %v402, %v406
      %v408 = vshrl.u32 %v352, 16
      %v410 = vrot.slane %v408, 4
      %v411 = vor.u32 %v410, %v406
      %v412 = vrot.slane %v411, 4
      %v414 = vshll.u32 %v353, 16
      %v416 = vrot.slane %v414, 5
      %v417 = vsel %vm369, %v412, %v416
      %v419 = vshrl.u32 %v354, 16
      %v421 = vrot.slane %v419, 4
      %v422 = vshll.u32 %v354, 16
      %v424 = vrot.slane %v422, 5
      %v425 = vor.u32 %v421, %v424
      %v426 = vrot.slane %v425, 4
      %v428 = vshll.u32 %v355, 16
      %v430 = vrot.slane %v428, 5
      %v431 = vsel %vm369, %v426, %v430
      %v432 = vshrl.u32 %v355, 16
      %v434 = vrot.slane %v432, 4
      %v435 = vor.u32 %v434, %v430
      %v436 = vrot.slane %v435, 4
      %v438 = vshll.u32 %v356, 16
      %v440 = vrot.slane %v438, 5
      %v441 = vsel %vm369, %v436, %v440
      %v443 = vshrl.u32 %v357, 16
      %v445 = vrot.slane %v443, 4
      %v446 = vshll.u32 %v357, 16
      %v448 = vrot.slane %v446, 5
      %v449 = vor.u32 %v445, %v448
      %v450 = vrot.slane %v449, 4
      %v452 = vshll.u32 %v358, 16
      %v454 = vrot.slane %v452, 5
      %v455 = vsel %vm369, %v450, %v454
      %v456 = vshrl.u32 %v358, 16
      %v458 = vrot.slane %v456, 4
      %v459 = vor.u32 %v458, %v454
      %v460 = vrot.slane %v459, 4
      %v462 = vshll.u32 %v359, 16
      %v464 = vrot.slane %v462, 5
      %v465 = vsel %vm369, %v460, %v464
      %s466 = scalar_lea.vmem %s2, 2
      %v467 = vld [vmem:[%s466] sm:$0x3]
      %v468 = vunpack.c.l.b16 %v383
      %v469 = vunpack.c.l.b16 %v393
      %v470 = vunpack.c.l.b16 %v407
      %v471 = vunpack.c.l.b16 %v417
      %v472 = vunpack.c.l.b16 %v431
      %v473 = vunpack.c.l.b16 %v441
      %v474 = vunpack.c.l.b16 %v455
      %v475 = vunpack.c.l.b16 %v465
      %v476 = vpack.c.b16 %v469, %v468
      %v477 = vpack.c.b16 %v471, %v470
      %v478 = vpack.c.b16 %v473, %v472
      %v479 = vpack.c.b16 %v475, %v474
      %vm480 = vcmask 31744
      %v482 = vsel %vm480, %v476, 0
      %v485 = vsel %vm480, %v477, 0
      %v488 = vsel %vm480, %v478, 0
      %v491 = vsel %vm480, %v479, 0
      %vm493 = vcmask 1041408
      %v495 = vsel %vm493, %v467, 0
      %497 = vmatprep.subr.bf16.mxu0 0
      %498 = vmatpush1.bf16.msra.mxu0 0
      %499 = vmatprep.subr.bf16.mxu0 0
      %500 = vmatpush1.bf16.msra.mxu0 0
      %501 = vmatprep.subr.bf16.mxu0 0
      %502 = vmatpush1.bf16.msra.mxu0 0
      %503 = vmatprep.subr.bf16.mxu0 0
      %504 = vmatpush1.bf16.msra.mxu0 0
      %505 = vmatprep.subr.bf16.mxu0 0
      %506 = vmatpush1.bf16.msra.mxu0 0
      %507 = vmatprep.subr.bf16.mxu0 0
      %508 = vmatpush1.bf16.msra.mxu0 0
      %509 = vmatprep.subr.bf16.mxu0 0
      %510 = vmatpush1.bf16.msra.mxu0 0
      %511 = vmatprep.subr.bf16.mxu0 0
      %512 = vmatpush1.bf16.msra.mxu0 %v495
      %513 = vmatprep.subr.bf16.mxu0 0
      %514 = vmatpush2.bf16.msra.mxu0 0
      %515 = vmatprep.subr.bf16.mxu0 0
      %516 = vmatpush2.bf16.msra.mxu0 0
      %517 = vmatprep.subr.bf16.mxu0 0
      %518 = vmatpush2.bf16.msra.mxu0 0
      %519 = vmatprep.subr.bf16.mxu0 0
      %520 = vmatpush2.bf16.msra.mxu0 0
      %521 = vmatprep.subr.bf16.mxu0 0
      %522 = vmatpush2.bf16.msra.mxu0 0
      %523 = vmatprep.subr.bf16.mxu0 0
      %524 = vmatpush2.bf16.msra.mxu0 0
      %525 = vmatprep.subr.bf16.mxu0 0
      %526 = vmatpush2.bf16.msra.mxu0 0
      %527 = vmatprep.subr.bf16.mxu0 0
      %528 = vmatpush2.bf16.msra.mxu0 0
      %529 = vmatprep.mubr.bf16.mxu0 0
      %530 = vmatmul.mubr.bf16.gmra.mxu0 %v482
      %v531 = vpop.f32.mrf.mxu0
      %v532 = vadd.f32 0.0, %v531
      %v533 = vpop.f32.mrf.mxu0
      %v534 = vpop.f32.mrf.mxu0
      %v535 = vadd.f32 0.0, %v534
      %v536 = vpop.f32.mrf.mxu0
      %537 = vmatprep.mubr.bf16.mxu0 0
      %538 = vmatmul.mubr.bf16.gmra.mxu0 %v485
      %v539 = vpop.f32.mrf.mxu0
      %v540 = vadd.f32 0.0, %v539
      %v541 = vpop.f32.mrf.mxu0
      %v542 = vpop.f32.mrf.mxu0
      %v543 = vadd.f32 0.0, %v542
      %v544 = vpop.f32.mrf.mxu0
      %545 = vmatprep.mubr.bf16.mxu0 0
      %546 = vmatmul.mubr.bf16.gmra.mxu0 %v488
      %v547 = vpop.f32.mrf.mxu0
      %v548 = vadd.f32 0.0, %v547
      %v549 = vpop.f32.mrf.mxu0
      %v550 = vpop.f32.mrf.mxu0
      %v551 = vadd.f32 0.0, %v550
      %v552 = vpop.f32.mrf.mxu0
      %553 = vmatprep.mubr.bf16.mxu0 0
      %554 = vmatmul.mubr.bf16.gmra.mxu0 %v491
      %v555 = vpop.f32.mrf.mxu0
      %v556 = vadd.f32 0.0, %v555
      %v557 = vpop.f32.mrf.mxu0
      %v558 = vpop.f32.mrf.mxu0
      %v559 = vadd.f32 0.0, %v558
      %v560 = vpop.f32.mrf.mxu0
      %561 = vdwg.mxu0
      %v570 = vunpack.c.l.b16 %v348
      %v571 = vunpack.c.l.b16 %v349
      %v572 = vunpack.c.l.b16 %v351
      %v573 = vunpack.c.l.b16 %v352
      %v574 = vunpack.c.l.b16 %v354
      %v575 = vunpack.c.l.b16 %v355
      %v576 = vunpack.c.l.b16 %v357
      %v577 = vunpack.c.l.b16 %v358
      %v578 = vpack.c.b16 %v571, %v570
      %v579 = vpack.c.b16 %v573, %v572
      %v580 = vpack.c.b16 %v575, %v574
      %v581 = vpack.c.b16 %v577, %v576
      %v583 = vsel %vm480, %v578, 0
      %v586 = vsel %vm480, %v579, 0
      %v589 = vsel %vm480, %v580, 0
      %v592 = vsel %vm480, %v581, 0
      %v595 = vsel %vm493, %v366, 0
      %597 = vmatprep.subr.bf16.mxu0 0
      %598 = vmatpush1.bf16.msra.mxu0 0
      %599 = vmatprep.subr.bf16.mxu0 0
      %600 = vmatpush1.bf16.msra.mxu0 0
      %601 = vmatprep.subr.bf16.mxu0 0
      %602 = vmatpush1.bf16.msra.mxu0 0
      %603 = vmatprep.subr.bf16.mxu0 0
      %604 = vmatpush1.bf16.msra.mxu0 0
      %605 = vmatprep.subr.bf16.mxu0 0
      %606 = vmatpush1.bf16.msra.mxu0 0
      %607 = vmatprep.subr.bf16.mxu0 0
      %608 = vmatpush1.bf16.msra.mxu0 0
      %609 = vmatprep.subr.bf16.mxu0 0
      %610 = vmatpush1.bf16.msra.mxu0 0
      %611 = vmatprep.subr.bf16.mxu0 0
      %612 = vmatpush1.bf16.msra.mxu0 %v595
      %613 = vmatprep.subr.bf16.mxu0 0
      %614 = vmatpush2.bf16.msra.mxu0 0
      %615 = vmatprep.subr.bf16.mxu0 0
      %616 = vmatpush2.bf16.msra.mxu0 0
      %617 = vmatprep.subr.bf16.mxu0 0
      %618 = vmatpush2.bf16.msra.mxu0 0
      %619 = vmatprep.subr.bf16.mxu0 0
      %620 = vmatpush2.bf16.msra.mxu0 0
      %621 = vmatprep.subr.bf16.mxu0 0
      %622 = vmatpush2.bf16.msra.mxu0 0
      %623 = vmatprep.subr.bf16.mxu0 0
      %624 = vmatpush2.bf16.msra.mxu0 0
      %625 = vmatprep.subr.bf16.mxu0 0
      %626 = vmatpush2.bf16.msra.mxu0 0
      %627 = vmatprep.subr.bf16.mxu0 0
      %628 = vmatpush2.bf16.msra.mxu0 0
      %629 = vmatprep.mubr.bf16.mxu0 0
      %630 = vmatmul.mubr.bf16.gmra.mxu0 %v583
      %v631 = vpop.f32.mrf.mxu0
      %v632 = vadd.f32 %v532, %v631
      %v633 = vpop.f32.mrf.mxu0
      %v634 = vpop.f32.mrf.mxu0
      %v635 = vadd.f32 %v535, %v634
      %v636 = vpop.f32.mrf.mxu0
      %637 = vmatprep.mubr.bf16.mxu0 0
      %638 = vmatmul.mubr.bf16.gmra.mxu0 %v586
      %v639 = vpop.f32.mrf.mxu0
      %v640 = vadd.f32 %v540, %v639
      %v641 = vpop.f32.mrf.mxu0
      %v642 = vpop.f32.mrf.mxu0
      %v643 = vadd.f32 %v543, %v642
      %v644 = vpop.f32.mrf.mxu0
      %645 = vmatprep.mubr.bf16.mxu0 0
      %646 = vmatmul.mubr.bf16.gmra.mxu0 %v589
      %v647 = vpop.f32.mrf.mxu0
      %v648 = vadd.f32 %v548, %v647
      %v649 = vpop.f32.mrf.mxu0
      %v650 = vpop.f32.mrf.mxu0
      %v651 = vadd.f32 %v551, %v650
      %v652 = vpop.f32.mrf.mxu0
      %653 = vmatprep.mubr.bf16.mxu0 0
      %654 = vmatmul.mubr.bf16.gmra.mxu0 %v592
      %v655 = vpop.f32.mrf.mxu0
      %v656 = vadd.f32 %v556, %v655
      %v657 = vpop.f32.mrf.mxu0
      %v658 = vpop.f32.mrf.mxu0
      %v659 = vadd.f32 %v559, %v658
      %v660 = vpop.f32.mrf.mxu0
      %661 = vdwg.mxu0
      %vm666 = vcmask 1042432
      %vm667 = vcmask 1046532
      %vm668 = vmor %vm666, %vm667
      %v669 = vrot.slane %v348, 5
      %v670 = vrot.slane %v669, 4
      %v671 = vrot.slane %v349, 5
      %v672 = vsel %vm668, %v670, %v671
      %v673 = vrot.slane %v671, 4
      %v674 = vrot.slane %v350, 5
      %v675 = vsel %vm668, %v673, %v674
      %v676 = vrot.slane %v351, 5
      %v677 = vrot.slane %v676, 4
      %v678 = vrot.slane %v352, 5
      %v679 = vsel %vm668, %v677, %v678
      %v680 = vrot.slane %v678, 4
      %v681 = vrot.slane %v353, 5
      %v682 = vsel %vm668, %v680, %v681
      %v683 = vrot.slane %v354, 5
      %v684 = vrot.slane %v683, 4
      %v685 = vrot.slane %v355, 5
      %v686 = vsel %vm668, %v684, %v685
      %v687 = vrot.slane %v685, 4
      %v688 = vrot.slane %v356, 5
      %v689 = vsel %vm668, %v687, %v688
      %v690 = vrot.slane %v357, 5
      %v691 = vrot.slane %v690, 4
      %v692 = vrot.slane %v358, 5
      %v693 = vsel %vm668, %v691, %v692
      %v694 = vrot.slane %v692, 4
      %v695 = vrot.slane %v359, 5
      %v696 = vsel %vm668, %v694, %v695
      %s697 = scalar_lea.vmem %s2, 4
      %v698 = vld [vmem:[%s697] sm:$0x3]
      %v699 = vunpack.c.l.b16 %v672
      %v700 = vunpack.c.l.b16 %v675
      %v701 = vunpack.c.l.b16 %v679
      %v702 = vunpack.c.l.b16 %v682
      %v703 = vunpack.c.l.b16 %v686
      %v704 = vunpack.c.l.b16 %v689
      %v705 = vunpack.c.l.b16 %v693
      %v706 = vunpack.c.l.b16 %v696
      %v707 = vpack.c.b16 %v700, %v699
      %v708 = vpack.c.b16 %v702, %v701
      %v709 = vpack.c.b16 %v704, %v703
      %v710 = vpack.c.b16 %v706, %v705
      %v712 = vsel %vm480, %v707, 0
      %v715 = vsel %vm480, %v708, 0
      %v718 = vsel %vm480, %v709, 0
      %v721 = vsel %vm480, %v710, 0
      %v724 = vsel %vm493, %v698, 0
      %726 = vmatprep.subr.bf16.mxu0 0
      %727 = vmatpush1.bf16.msra.mxu0 0
      %728 = vmatprep.subr.bf16.mxu0 0
      %729 = vmatpush1.bf16.msra.mxu0 0
      %730 = vmatprep.subr.bf16.mxu0 0
      %731 = vmatpush1.bf16.msra.mxu0 0
      %732 = vmatprep.subr.bf16.mxu0 0
      %733 = vmatpush1.bf16.msra.mxu0 0
      %734 = vmatprep.subr.bf16.mxu0 0
      %735 = vmatpush1.bf16.msra.mxu0 0
      %736 = vmatprep.subr.bf16.mxu0 0
      %737 = vmatpush1.bf16.msra.mxu0 0
      %738 = vmatprep.subr.bf16.mxu0 0
      %739 = vmatpush1.bf16.msra.mxu0 0
      %740 = vmatprep.subr.bf16.mxu0 0
      %741 = vmatpush1.bf16.msra.mxu0 %v724
      %742 = vmatprep.subr.bf16.mxu0 0
      %743 = vmatpush2.bf16.msra.mxu0 0
      %744 = vmatprep.subr.bf16.mxu0 0
      %745 = vmatpush2.bf16.msra.mxu0 0
      %746 = vmatprep.subr.bf16.mxu0 0
      %747 = vmatpush2.bf16.msra.mxu0 0
      %748 = vmatprep.subr.bf16.mxu0 0
      %749 = vmatpush2.bf16.msra.mxu0 0
      %750 = vmatprep.subr.bf16.mxu0 0
      %751 = vmatpush2.bf16.msra.mxu0 0
      %752 = vmatprep.subr.bf16.mxu0 0
      %753 = vmatpush2.bf16.msra.mxu0 0
      %754 = vmatprep.subr.bf16.mxu0 0
      %755 = vmatpush2.bf16.msra.mxu0 0
      %756 = vmatprep.subr.bf16.mxu0 0
      %757 = vmatpush2.bf16.msra.mxu0 0
      %758 = vmatprep.mubr.bf16.mxu0 0
      %759 = vmatmul.mubr.bf16.gmra.mxu0 %v712
      %v760 = vpop.f32.mrf.mxu0
      %v761 = vadd.f32 0.0, %v760
      %v762 = vpop.f32.mrf.mxu0
      %v763 = vpop.f32.mrf.mxu0
      %v764 = vadd.f32 0.0, %v763
      %v765 = vpop.f32.mrf.mxu0
      %766 = vmatprep.mubr.bf16.mxu0 0
      %767 = vmatmul.mubr.bf16.gmra.mxu0 %v715
      %v768 = vpop.f32.mrf.mxu0
      %v769 = vadd.f32 0.0, %v768
      %v770 = vpop.f32.mrf.mxu0
      %v771 = vpop.f32.mrf.mxu0
      %v772 = vadd.f32 0.0, %v771
      %v773 = vpop.f32.mrf.mxu0
      %774 = vmatprep.mubr.bf16.mxu0 0
      %775 = vmatmul.mubr.bf16.gmra.mxu0 %v718
      %v776 = vpop.f32.mrf.mxu0
      %v777 = vadd.f32 0.0, %v776
      %v778 = vpop.f32.mrf.mxu0
      %v779 = vpop.f32.mrf.mxu0
      %v780 = vadd.f32 0.0, %v779
      %v781 = vpop.f32.mrf.mxu0
      %782 = vmatprep.mubr.bf16.mxu0 0
      %783 = vmatmul.mubr.bf16.gmra.mxu0 %v721
      %v784 = vpop.f32.mrf.mxu0
      %v785 = vadd.f32 0.0, %v784
      %v786 = vpop.f32.mrf.mxu0
      %v787 = vpop.f32.mrf.mxu0
      %v788 = vadd.f32 0.0, %v787
      %v789 = vpop.f32.mrf.mxu0
      %790 = vdwg.mxu0
      %v791 = vadd.f32 %v632, %v761
      %v792 = vadd.f32 %v635, %v764
      %v793 = vadd.f32 %v640, %v769
      %v794 = vadd.f32 %v643, %v772
      %v795 = vadd.f32 %v648, %v777
      %v796 = vadd.f32 %v651, %v780
      %v797 = vadd.f32 %v656, %v785
      %v798 = vadd.f32 %v659, %v788
      %s799 = scalar_lea.vmem %s2, 6
      %v800 = vld [vmem:[%s799] sm:$0x3]
      %v803 = vunpack.c.l.b16 %v360
      %v804 = vunpack.c.l.b16 %v361
      %v805 = vpack.c.b16 %v804, %v803
      %v807 = vsel %vm480, %v805, 0
      %v810 = vsel %vm493, %v800, 0
      %812 = vmatprep.subr.bf16.mxu0 0
      %813 = vmatpush1.bf16.msra.mxu0 0
      %814 = vmatprep.subr.bf16.mxu0 0
      %815 = vmatpush1.bf16.msra.mxu0 0
      %816 = vmatprep.subr.bf16.mxu0 0
      %817 = vmatpush1.bf16.msra.mxu0 0
      %818 = vmatprep.subr.bf16.mxu0 0
      %819 = vmatpush1.bf16.msra.mxu0 0
      %820 = vmatprep.subr.bf16.mxu0 0
      %821 = vmatpush1.bf16.msra.mxu0 0
      %822 = vmatprep.subr.bf16.mxu0 0
      %823 = vmatpush1.bf16.msra.mxu0 0
      %824 = vmatprep.subr.bf16.mxu0 0
      %825 = vmatpush1.bf16.msra.mxu0 0
      %826 = vmatprep.subr.bf16.mxu0 0
      %827 = vmatpush1.bf16.msra.mxu0 %v810
      %828 = vmatprep.subr.bf16.mxu0 0
      %829 = vmatpush2.bf16.msra.mxu0 0
      %830 = vmatprep.subr.bf16.mxu0 0
      %831 = vmatpush2.bf16.msra.mxu0 0
      %832 = vmatprep.subr.bf16.mxu0 0
      %833 = vmatpush2.bf16.msra.mxu0 0
      %834 = vmatprep.subr.bf16.mxu0 0
      %835 = vmatpush2.bf16.msra.mxu0 0
      %836 = vmatprep.subr.bf16.mxu0 0
      %837 = vmatpush2.bf16.msra.mxu0 0
      %838 = vmatprep.subr.bf16.mxu0 0
      %839 = vmatpush2.bf16.msra.mxu0 0
      %840 = vmatprep.subr.bf16.mxu0 0
      %841 = vmatpush2.bf16.msra.mxu0 0
      %842 = vmatprep.subr.bf16.mxu0 0
      %843 = vmatpush2.bf16.msra.mxu0 0
      %844 = vmatprep.mubr.bf16.mxu0 0
      %845 = vmatmul.mubr.bf16.gmra.mxu0 %v586
      %v846 = vpop.f32.mrf.mxu0
      %v847 = vadd.f32 0.0, %v846
      %v848 = vpop.f32.mrf.mxu0
      %v849 = vpop.f32.mrf.mxu0
      %v850 = vadd.f32 0.0, %v849
      %v851 = vpop.f32.mrf.mxu0
      %852 = vmatprep.mubr.bf16.mxu0 0
      %853 = vmatmul.mubr.bf16.gmra.mxu0 %v589
      %v854 = vpop.f32.mrf.mxu0
      %v855 = vadd.f32 0.0, %v854
      %v856 = vpop.f32.mrf.mxu0
      %v857 = vpop.f32.mrf.mxu0
      %v858 = vadd.f32 0.0, %v857
      %v859 = vpop.f32.mrf.mxu0
      %860 = vmatprep.mubr.bf16.mxu0 0
      %861 = vmatmul.mubr.bf16.gmra.mxu0 %v592
      %v862 = vpop.f32.mrf.mxu0
      %v863 = vadd.f32 0.0, %v862
      %v864 = vpop.f32.mrf.mxu0
      %v865 = vpop.f32.mrf.mxu0
      %v866 = vadd.f32 0.0, %v865
      %v867 = vpop.f32.mrf.mxu0
      %868 = vmatprep.mubr.bf16.mxu0 0
      %869 = vmatmul.mubr.bf16.gmra.mxu0 %v807
      %v870 = vpop.f32.mrf.mxu0
      %v871 = vadd.f32 0.0, %v870
      %v872 = vpop.f32.mrf.mxu0
      %v873 = vpop.f32.mrf.mxu0
      %v874 = vadd.f32 0.0, %v873
      %v875 = vpop.f32.mrf.mxu0
      %876 = vdwg.mxu0
      %v877 = vadd.f32 %v791, %v847
      %v878 = vadd.f32 %v792, %v850
      %v879 = vadd.f32 %v793, %v855
      %v880 = vadd.f32 %v794, %v858
      %v881 = vadd.f32 %v795, %v863
      %v882 = vadd.f32 %v796, %v866
      %v883 = vadd.f32 %v797, %v871
      %v884 = vadd.f32 %v798, %v874
      %v886 = vshrl.u32 %v360, 16
      %v888 = vrot.slane %v886, 4
      %v889 = vshll.u32 %v360, 16
      %v891 = vrot.slane %v889, 5
      %v892 = vor.u32 %v888, %v891
      %v893 = vrot.slane %v892, 4
      %v895 = vshll.u32 %v361, 16
      %v897 = vrot.slane %v895, 5
      %v898 = vsel %vm369, %v893, %v897
      %v899 = vshrl.u32 %v361, 16
      %v901 = vrot.slane %v899, 4
      %v902 = vor.u32 %v901, %v897
      %v903 = vrot.slane %v902, 4
      %v905 = vshll.u32 %v362, 16
      %v907 = vrot.slane %v905, 5
      %v908 = vsel %vm369, %v903, %v907
      %s909 = scalar_lea.vmem %s2, 8
      %v910 = vld [vmem:[%s909] sm:$0x3]
      %v911 = vunpack.c.l.b16 %v898
      %v912 = vunpack.c.l.b16 %v908
      %v913 = vpack.c.b16 %v912, %v911
      %v915 = vsel %vm480, %v913, 0
      %v918 = vsel %vm493, %v910, 0
      %920 = vmatprep.subr.bf16.mxu0 0
      %921 = vmatpush1.bf16.msra.mxu0 0
      %922 = vmatprep.subr.bf16.mxu0 0
      %923 = vmatpush1.bf16.msra.mxu0 0
      %924 = vmatprep.subr.bf16.mxu0 0
      %925 = vmatpush1.bf16.msra.mxu0 0
      %926 = vmatprep.subr.bf16.mxu0 0
      %927 = vmatpush1.bf16.msra.mxu0 0
      %928 = vmatprep.subr.bf16.mxu0 0
      %929 = vmatpush1.bf16.msra.mxu0 0
      %930 = vmatprep.subr.bf16.mxu0 0
      %931 = vmatpush1.bf16.msra.mxu0 0
      %932 = vmatprep.subr.bf16.mxu0 0
      %933 = vmatpush1.bf16.msra.mxu0 0
      %934 = vmatprep.subr.bf16.mxu0 0
      %935 = vmatpush1.bf16.msra.mxu0 %v918
      %936 = vmatprep.subr.bf16.mxu0 0
      %937 = vmatpush2.bf16.msra.mxu0 0
      %938 = vmatprep.subr.bf16.mxu0 0
      %939 = vmatpush2.bf16.msra.mxu0 0
      %940 = vmatprep.subr.bf16.mxu0 0
      %941 = vmatpush2.bf16.msra.mxu0 0
      %942 = vmatprep.subr.bf16.mxu0 0
      %943 = vmatpush2.bf16.msra.mxu0 0
      %944 = vmatprep.subr.bf16.mxu0 0
      %945 = vmatpush2.bf16.msra.mxu0 0
      %946 = vmatprep.subr.bf16.mxu0 0
      %947 = vmatpush2.bf16.msra.mxu0 0
      %948 = vmatprep.subr.bf16.mxu0 0
      %949 = vmatpush2.bf16.msra.mxu0 0
      %950 = vmatprep.subr.bf16.mxu0 0
      %951 = vmatpush2.bf16.msra.mxu0 0
      %952 = vmatprep.mubr.bf16.mxu0 0
      %953 = vmatmul.mubr.bf16.gmra.mxu0 %v485
      %v954 = vpop.f32.mrf.mxu0
      %v955 = vadd.f32 0.0, %v954
      %v956 = vpop.f32.mrf.mxu0
      %v957 = vpop.f32.mrf.mxu0
      %v958 = vadd.f32 0.0, %v957
      %v959 = vpop.f32.mrf.mxu0
      %960 = vmatprep.mubr.bf16.mxu0 0
      %961 = vmatmul.mubr.bf16.gmra.mxu0 %v488
      %v962 = vpop.f32.mrf.mxu0
      %v963 = vadd.f32 0.0, %v962
      %v964 = vpop.f32.mrf.mxu0
      %v965 = vpop.f32.mrf.mxu0
      %v966 = vadd.f32 0.0, %v965
      %v967 = vpop.f32.mrf.mxu0
      %968 = vmatprep.mubr.bf16.mxu0 0
      %969 = vmatmul.mubr.bf16.gmra.mxu0 %v491
      %v970 = vpop.f32.mrf.mxu0
      %v971 = vadd.f32 0.0, %v970
      %v972 = vpop.f32.mrf.mxu0
      %v973 = vpop.f32.mrf.mxu0
      %v974 = vadd.f32 0.0, %v973
      %v975 = vpop.f32.mrf.mxu0
      %976 = vmatprep.mubr.bf16.mxu0 0
      %977 = vmatmul.mubr.bf16.gmra.mxu0 %v915
      %v978 = vpop.f32.mrf.mxu0
      %v979 = vadd.f32 0.0, %v978
      %v980 = vpop.f32.mrf.mxu0
      %v981 = vpop.f32.mrf.mxu0
      %v982 = vadd.f32 0.0, %v981
      %v983 = vpop.f32.mrf.mxu0
      %984 = vdwg.mxu0
      %v985 = vadd.f32 %v877, %v955
      %v986 = vadd.f32 %v878, %v958
      %v987 = vadd.f32 %v879, %v963
      %v988 = vadd.f32 %v880, %v966
      %v989 = vadd.f32 %v881, %v971
      %v990 = vadd.f32 %v882, %v974
      %v991 = vadd.f32 %v883, %v979
      %v992 = vadd.f32 %v884, %v982
      %v994 = vrot.slane %v360, 5
      %v995 = vrot.slane %v994, 4
      %v996 = vrot.slane %v361, 5
      %v997 = vsel %vm668, %v995, %v996
      %v998 = vrot.slane %v996, 4
      %v999 = vrot.slane %v362, 5
      %v1000 = vsel %vm668, %v998, %v999
      %s1001 = scalar_lea.vmem %s2, 10
      %v1002 = vld [vmem:[%s1001] sm:$0x3]
      %v1003 = vunpack.c.l.b16 %v997
      %v1004 = vunpack.c.l.b16 %v1000
      %v1005 = vpack.c.b16 %v1004, %v1003
      %v1007 = vsel %vm480, %v1005, 0
      %v1010 = vsel %vm493, %v1002, 0
      %1012 = vmatprep.subr.bf16.mxu0 0
      %1013 = vmatpush1.bf16.msra.mxu0 0
      %1014 = vmatprep.subr.bf16.mxu0 0
      %1015 = vmatpush1.bf16.msra.mxu0 0
      %1016 = vmatprep.subr.bf16.mxu0 0
      %1017 = vmatpush1.bf16.msra.mxu0 0
      %1018 = vmatprep.subr.bf16.mxu0 0
      %1019 = vmatpush1.bf16.msra.mxu0 0
      %1020 = vmatprep.subr.bf16.mxu0 0
      %1021 = vmatpush1.bf16.msra.mxu0 0
      %1022 = vmatprep.subr.bf16.mxu0 0
      %1023 = vmatpush1.bf16.msra.mxu0 0
      %1024 = vmatprep.subr.bf16.mxu0 0
      %1025 = vmatpush1.bf16.msra.mxu0 0
      %1026 = vmatprep.subr.bf16.mxu0 0
      %1027 = vmatpush1.bf16.msra.mxu0 %v1010
      %1028 = vmatprep.subr.bf16.mxu0 0
      %1029 = vmatpush2.bf16.msra.mxu0 0
      %1030 = vmatprep.subr.bf16.mxu0 0
      %1031 = vmatpush2.bf16.msra.mxu0 0
      %1032 = vmatprep.subr.bf16.mxu0 0
      %1033 = vmatpush2.bf16.msra.mxu0 0
      %1034 = vmatprep.subr.bf16.mxu0 0
      %1035 = vmatpush2.bf16.msra.mxu0 0
      %1036 = vmatprep.subr.bf16.mxu0 0
      %1037 = vmatpush2.bf16.msra.mxu0 0
      %1038 = vmatprep.subr.bf16.mxu0 0
      %1039 = vmatpush2.bf16.msra.mxu0 0
      %1040 = vmatprep.subr.bf16.mxu0 0
      %1041 = vmatpush2.bf16.msra.mxu0 0
      %1042 = vmatprep.subr.bf16.mxu0 0
      %1043 = vmatpush2.bf16.msra.mxu0 0
      %1044 = vmatprep.mubr.bf16.mxu0 0
      %1045 = vmatmul.mubr.bf16.gmra.mxu0 %v715
      %v1046 = vpop.f32.mrf.mxu0
      %v1047 = vadd.f32 0.0, %v1046
      %v1048 = vpop.f32.mrf.mxu0
      %v1049 = vpop.f32.mrf.mxu0
      %v1050 = vadd.f32 0.0, %v1049
      %v1051 = vpop.f32.mrf.mxu0
      %1052 = vmatprep.mubr.bf16.mxu0 0
      %1053 = vmatmul.mubr.bf16.gmra.mxu0 %v718
      %v1054 = vpop.f32.mrf.mxu0
      %v1055 = vadd.f32 0.0, %v1054
      %v1056 = vpop.f32.mrf.mxu0
      %v1057 = vpop.f32.mrf.mxu0
      %v1058 = vadd.f32 0.0, %v1057
      %v1059 = vpop.f32.mrf.mxu0
      %1060 = vmatprep.mubr.bf16.mxu0 0
      %1061 = vmatmul.mubr.bf16.gmra.mxu0 %v721
      %v1062 = vpop.f32.mrf.mxu0
      %v1063 = vadd.f32 0.0, %v1062
      %v1064 = vpop.f32.mrf.mxu0
      %v1065 = vpop.f32.mrf.mxu0
      %v1066 = vadd.f32 0.0, %v1065
      %v1067 = vpop.f32.mrf.mxu0
      %1068 = vmatprep.mubr.bf16.mxu0 0
      %1069 = vmatmul.mubr.bf16.gmra.mxu0 %v1007
      %v1070 = vpop.f32.mrf.mxu0
      %v1071 = vadd.f32 0.0, %v1070
      %v1072 = vpop.f32.mrf.mxu0
      %v1073 = vpop.f32.mrf.mxu0
      %v1074 = vadd.f32 0.0, %v1073
      %v1075 = vpop.f32.mrf.mxu0
      %1076 = vdwg.mxu0
      %v1077 = vadd.f32 %v985, %v1047
      %v1078 = vadd.f32 %v986, %v1050
      %v1079 = vadd.f32 %v987, %v1055
      %v1080 = vadd.f32 %v988, %v1058
      %v1081 = vadd.f32 %v989, %v1063
      %v1082 = vadd.f32 %v990, %v1066
      %v1083 = vadd.f32 %v991, %v1071
      %v1084 = vadd.f32 %v992, %v1074
      %s1085 = scalar_lea.vmem %s2, 12
      %v1086 = vld [vmem:[%s1085] sm:$0x3]
      %v1089 = vunpack.c.l.b16 %v363
      %v1090 = vunpack.c.l.b16 %v364
      %v1091 = vpack.c.b16 %v1090, %v1089
      %v1093 = vsel %vm480, %v1091, 0
      %v1096 = vsel %vm493, %v1086, 0
      %1098 = vmatprep.subr.bf16.mxu0 0
      %1099 = vmatpush1.bf16.msra.mxu0 0
      %1100 = vmatprep.subr.bf16.mxu0 0
      %1101 = vmatpush1.bf16.msra.mxu0 0
      %1102 = vmatprep.subr.bf16.mxu0 0
      %1103 = vmatpush1.bf16.msra.mxu0 0
      %1104 = vmatprep.subr.bf16.mxu0 0
      %1105 = vmatpush1.bf16.msra.mxu0 0
      %1106 = vmatprep.subr.bf16.mxu0 0
      %1107 = vmatpush1.bf16.msra.mxu0 0
      %1108 = vmatprep.subr.bf16.mxu0 0
      %1109 = vmatpush1.bf16.msra.mxu0 0
      %1110 = vmatprep.subr.bf16.mxu0 0
      %1111 = vmatpush1.bf16.msra.mxu0 0
      %1112 = vmatprep.subr.bf16.mxu0 0
      %1113 = vmatpush1.bf16.msra.mxu0 %v1096
      %1114 = vmatprep.subr.bf16.mxu0 0
      %1115 = vmatpush2.bf16.msra.mxu0 0
      %1116 = vmatprep.subr.bf16.mxu0 0
      %1117 = vmatpush2.bf16.msra.mxu0 0
      %1118 = vmatprep.subr.bf16.mxu0 0
      %1119 = vmatpush2.bf16.msra.mxu0 0
      %1120 = vmatprep.subr.bf16.mxu0 0
      %1121 = vmatpush2.bf16.msra.mxu0 0
      %1122 = vmatprep.subr.bf16.mxu0 0
      %1123 = vmatpush2.bf16.msra.mxu0 0
      %1124 = vmatprep.subr.bf16.mxu0 0
      %1125 = vmatpush2.bf16.msra.mxu0 0
      %1126 = vmatprep.subr.bf16.mxu0 0
      %1127 = vmatpush2.bf16.msra.mxu0 0
      %1128 = vmatprep.subr.bf16.mxu0 0
      %1129 = vmatpush2.bf16.msra.mxu0 0
      %1130 = vmatprep.mubr.bf16.mxu0 0
      %1131 = vmatmul.mubr.bf16.gmra.mxu0 %v589
      %v1132 = vpop.f32.mrf.mxu0
      %v1133 = vadd.f32 0.0, %v1132
      %v1134 = vpop.f32.mrf.mxu0
      %v1135 = vpop.f32.mrf.mxu0
      %v1136 = vadd.f32 0.0, %v1135
      %v1137 = vpop.f32.mrf.mxu0
      %1138 = vmatprep.mubr.bf16.mxu0 0
      %1139 = vmatmul.mubr.bf16.gmra.mxu0 %v592
      %v1140 = vpop.f32.mrf.mxu0
      %v1141 = vadd.f32 0.0, %v1140
      %v1142 = vpop.f32.mrf.mxu0
      %v1143 = vpop.f32.mrf.mxu0
      %v1144 = vadd.f32 0.0, %v1143
      %v1145 = vpop.f32.mrf.mxu0
      %1146 = vmatprep.mubr.bf16.mxu0 0
      %1147 = vmatmul.mubr.bf16.gmra.mxu0 %v807
      %v1148 = vpop.f32.mrf.mxu0
      %v1149 = vadd.f32 0.0, %v1148
      %v1150 = vpop.f32.mrf.mxu0
      %v1151 = vpop.f32.mrf.mxu0
      %v1152 = vadd.f32 0.0, %v1151
      %v1153 = vpop.f32.mrf.mxu0
      %1154 = vmatprep.mubr.bf16.mxu0 0
      %1155 = vmatmul.mubr.bf16.gmra.mxu0 %v1093
      %v1156 = vpop.f32.mrf.mxu0
      %v1157 = vadd.f32 0.0, %v1156
      %v1158 = vpop.f32.mrf.mxu0
      %v1159 = vpop.f32.mrf.mxu0
      %v1160 = vadd.f32 0.0, %v1159
      %v1161 = vpop.f32.mrf.mxu0
      %1162 = vdwg.mxu0
      %v1163 = vadd.f32 %v1077, %v1133
      %v1164 = vadd.f32 %v1078, %v1136
      %v1165 = vadd.f32 %v1079, %v1141
      %v1166 = vadd.f32 %v1080, %v1144
      %v1167 = vadd.f32 %v1081, %v1149
      %v1168 = vadd.f32 %v1082, %v1152
      %v1169 = vadd.f32 %v1083, %v1157
      %v1170 = vadd.f32 %v1084, %v1160
      %v1172 = vshrl.u32 %v363, 16
      %v1174 = vrot.slane %v1172, 4
      %v1175 = vshll.u32 %v363, 16
      %v1177 = vrot.slane %v1175, 5
      %v1178 = vor.u32 %v1174, %v1177
      %v1179 = vrot.slane %v1178, 4
      %v1181 = vshll.u32 %v364, 16
      %v1183 = vrot.slane %v1181, 5
      %v1184 = vsel %vm369, %v1179, %v1183
      %v1185 = vshrl.u32 %v364, 16
      %v1187 = vrot.slane %v1185, 4
      %v1188 = vor.u32 %v1187, %v1183
      %v1189 = vrot.slane %v1188, 4
      %v1191 = vshll.u32 %v365, 16
      %v1193 = vrot.slane %v1191, 5
      %v1194 = vsel %vm369, %v1189, %v1193
      %s1195 = scalar_lea.vmem %s2, 14
      %v1196 = vld [vmem:[%s1195] sm:$0x3]
      %v1197 = vunpack.c.l.b16 %v1184
      %v1198 = vunpack.c.l.b16 %v1194
      %v1199 = vpack.c.b16 %v1198, %v1197
      %v1201 = vsel %vm480, %v1199, 0
      %v1204 = vsel %vm493, %v1196, 0
      %1206 = vmatprep.subr.bf16.mxu0 0
      %1207 = vmatpush1.bf16.msra.mxu0 0
      %1208 = vmatprep.subr.bf16.mxu0 0
      %1209 = vmatpush1.bf16.msra.mxu0 0
      %1210 = vmatprep.subr.bf16.mxu0 0
      %1211 = vmatpush1.bf16.msra.mxu0 0
      %1212 = vmatprep.subr.bf16.mxu0 0
      %1213 = vmatpush1.bf16.msra.mxu0 0
      %1214 = vmatprep.subr.bf16.mxu0 0
      %1215 = vmatpush1.bf16.msra.mxu0 0
      %1216 = vmatprep.subr.bf16.mxu0 0
      %1217 = vmatpush1.bf16.msra.mxu0 0
      %1218 = vmatprep.subr.bf16.mxu0 0
      %1219 = vmatpush1.bf16.msra.mxu0 0
      %1220 = vmatprep.subr.bf16.mxu0 0
      %1221 = vmatpush1.bf16.msra.mxu0 %v1204
      %1222 = vmatprep.subr.bf16.mxu0 0
      %1223 = vmatpush2.bf16.msra.mxu0 0
      %1224 = vmatprep.subr.bf16.mxu0 0
      %1225 = vmatpush2.bf16.msra.mxu0 0
      %1226 = vmatprep.subr.bf16.mxu0 0
      %1227 = vmatpush2.bf16.msra.mxu0 0
      %1228 = vmatprep.subr.bf16.mxu0 0
      %1229 = vmatpush2.bf16.msra.mxu0 0
      %1230 = vmatprep.subr.bf16.mxu0 0
      %1231 = vmatpush2.bf16.msra.mxu0 0
      %1232 = vmatprep.subr.bf16.mxu0 0
      %1233 = vmatpush2.bf16.msra.mxu0 0
      %1234 = vmatprep.subr.bf16.mxu0 0
      %1235 = vmatpush2.bf16.msra.mxu0 0
      %1236 = vmatprep.subr.bf16.mxu0 0
      %1237 = vmatpush2.bf16.msra.mxu0 0
      %1238 = vmatprep.mubr.bf16.mxu0 0
      %1239 = vmatmul.mubr.bf16.gmra.mxu0 %v488
      %v1240 = vpop.f32.mrf.mxu0
      %v1241 = vadd.f32 0.0, %v1240
      %v1242 = vpop.f32.mrf.mxu0
      %v1243 = vpop.f32.mrf.mxu0
      %v1244 = vadd.f32 0.0, %v1243
      %v1245 = vpop.f32.mrf.mxu0
      %1246 = vmatprep.mubr.bf16.mxu0 0
      %1247 = vmatmul.mubr.bf16.gmra.mxu0 %v491
      %v1248 = vpop.f32.mrf.mxu0
      %v1249 = vadd.f32 0.0, %v1248
      %v1250 = vpop.f32.mrf.mxu0
      %v1251 = vpop.f32.mrf.mxu0
      %v1252 = vadd.f32 0.0, %v1251
      %v1253 = vpop.f32.mrf.mxu0
      %1254 = vmatprep.mubr.bf16.mxu0 0
      %1255 = vmatmul.mubr.bf16.gmra.mxu0 %v915
      %v1256 = vpop.f32.mrf.mxu0
      %v1257 = vadd.f32 0.0, %v1256
      %v1258 = vpop.f32.mrf.mxu0
      %v1259 = vpop.f32.mrf.mxu0
      %v1260 = vadd.f32 0.0, %v1259
      %v1261 = vpop.f32.mrf.mxu0
      %1262 = vmatprep.mubr.bf16.mxu0 0
      %1263 = vmatmul.mubr.bf16.gmra.mxu0 %v1201
      %v1264 = vpop.f32.mrf.mxu0
      %v1265 = vadd.f32 0.0, %v1264
      %v1266 = vpop.f32.mrf.mxu0
      %v1267 = vpop.f32.mrf.mxu0
      %v1268 = vadd.f32 0.0, %v1267
      %v1269 = vpop.f32.mrf.mxu0
      %1270 = vdwg.mxu0
      %v1271 = vadd.f32 %v1163, %v1241
      %v1272 = vadd.f32 %v1164, %v1244
      %v1273 = vadd.f32 %v1165, %v1249
      %v1274 = vadd.f32 %v1166, %v1252
      %v1275 = vadd.f32 %v1167, %v1257
      %v1276 = vadd.f32 %v1168, %v1260
      %v1277 = vadd.f32 %v1169, %v1265
      %v1278 = vadd.f32 %v1170, %v1268
      %v1280 = vrot.slane %v363, 5
      %v1281 = vrot.slane %v1280, 4
      %v1282 = vrot.slane %v364, 5
      %v1283 = vsel %vm668, %v1281, %v1282
      %v1284 = vrot.slane %v1282, 4
      %v1285 = vrot.slane %v365, 5
      %v1286 = vsel %vm668, %v1284, %v1285
      %s1287 = scalar_lea.vmem %s2, 16
      %v1288 = vld [vmem:[%s1287] sm:$0x3]
      %v1289 = vunpack.c.l.b16 %v1283
      %v1290 = vunpack.c.l.b16 %v1286
      %v1291 = vpack.c.b16 %v1290, %v1289
      %v1293 = vsel %vm480, %v1291, 0
      %v1296 = vsel %vm493, %v1288, 0
      %1298 = vmatprep.subr.bf16.mxu0 0
      %1299 = vmatpush1.bf16.msra.mxu0 0
      %1300 = vmatprep.subr.bf16.mxu0 0
      %1301 = vmatpush1.bf16.msra.mxu0 0
      %1302 = vmatprep.subr.bf16.mxu0 0
      %1303 = vmatpush1.bf16.msra.mxu0 0
      %1304 = vmatprep.subr.bf16.mxu0 0
      %1305 = vmatpush1.bf16.msra.mxu0 0
      %1306 = vmatprep.subr.bf16.mxu0 0
      %1307 = vmatpush1.bf16.msra.mxu0 0
      %1308 = vmatprep.subr.bf16.mxu0 0
      %1309 = vmatpush1.bf16.msra.mxu0 0
      %1310 = vmatprep.subr.bf16.mxu0 0
      %1311 = vmatpush1.bf16.msra.mxu0 0
      %1312 = vmatprep.subr.bf16.mxu0 0
      %1313 = vmatpush1.bf16.msra.mxu0 %v1296
      %1314 = vmatprep.subr.bf16.mxu0 0
      %1315 = vmatpush2.bf16.msra.mxu0 0
      %1316 = vmatprep.subr.bf16.mxu0 0
      %1317 = vmatpush2.bf16.msra.mxu0 0
      %1318 = vmatprep.subr.bf16.mxu0 0
      %1319 = vmatpush2.bf16.msra.mxu0 0
      %1320 = vmatprep.subr.bf16.mxu0 0
      %1321 = vmatpush2.bf16.msra.mxu0 0
      %1322 = vmatprep.subr.bf16.mxu0 0
      %1323 = vmatpush2.bf16.msra.mxu0 0
      %1324 = vmatprep.subr.bf16.mxu0 0
      %1325 = vmatpush2.bf16.msra.mxu0 0
      %1326 = vmatprep.subr.bf16.mxu0 0
      %1327 = vmatpush2.bf16.msra.mxu0 0
      %1328 = vmatprep.subr.bf16.mxu0 0
      %1329 = vmatpush2.bf16.msra.mxu0 0
      %1330 = vmatprep.mubr.bf16.mxu0 0
      %1331 = vmatmul.mubr.bf16.gmra.mxu0 %v718
      %v1332 = vpop.f32.mrf.mxu0
      %v1333 = vadd.f32 0.0, %v1332
      %v1334 = vpop.f32.mrf.mxu0
      %v1335 = vpop.f32.mrf.mxu0
      %v1336 = vadd.f32 0.0, %v1335
      %v1337 = vpop.f32.mrf.mxu0
      %1338 = vmatprep.mubr.bf16.mxu0 0
      %1339 = vmatmul.mubr.bf16.gmra.mxu0 %v721
      %v1340 = vpop.f32.mrf.mxu0
      %v1341 = vadd.f32 0.0, %v1340
      %v1342 = vpop.f32.mrf.mxu0
      %v1343 = vpop.f32.mrf.mxu0
      %v1344 = vadd.f32 0.0, %v1343
      %v1345 = vpop.f32.mrf.mxu0
      %1346 = vmatprep.mubr.bf16.mxu0 0
      %1347 = vmatmul.mubr.bf16.gmra.mxu0 %v1007
      %v1348 = vpop.f32.mrf.mxu0
      %v1349 = vadd.f32 0.0, %v1348
      %v1350 = vpop.f32.mrf.mxu0
      %v1351 = vpop.f32.mrf.mxu0
      %v1352 = vadd.f32 0.0, %v1351
      %v1353 = vpop.f32.mrf.mxu0
      %1354 = vmatprep.mubr.bf16.mxu0 0
      %1355 = vmatmul.mubr.bf16.gmra.mxu0 %v1293
      %v1356 = vpop.f32.mrf.mxu0
      %v1357 = vadd.f32 0.0, %v1356
      %v1358 = vpop.f32.mrf.mxu0
      %v1359 = vpop.f32.mrf.mxu0
      %v1360 = vadd.f32 0.0, %v1359
      %v1361 = vpop.f32.mrf.mxu0
      %1362 = vdwg.mxu0
      %v1363 = vadd.f32 %v1271, %v1333
      %v1364 = vadd.f32 %v1272, %v1336
      %v1365 = vadd.f32 %v1273, %v1341
      %v1366 = vadd.f32 %v1274, %v1344
      %v1367 = vadd.f32 %v1275, %v1349
      %v1368 = vadd.f32 %v1276, %v1352
      %v1369 = vadd.f32 %v1277, %v1357
      %v1370 = vadd.f32 %v1278, %v1360
      %v1371 = vld [vmem:[%s3] sm:$0x1]
      %v1373 = vlaneseq
      %v1374 = vshrl.u32 %v1373, 7
      %v1375 = vsub.s32 0, %v1374
      %v1376 = vrot.slane %v1371, %v1375
      %v1378 = vmul.f32 %v1363, %v1376
      %v1379 = vmul.f32 %v1364, %v1376
      %v1380 = vmul.f32 %v1365, %v1376
      %v1381 = vmul.f32 %v1366, %v1376
      %v1382 = vmul.f32 %v1367, %v1376
      %v1383 = vmul.f32 %v1368, %v1376
      %v1384 = vmul.f32 %v1369, %v1376
      %v1385 = vmul.f32 %v1370, %v1376
      %v1386 = vld [vmem:[%s4] sm:$0x1]
      %v1388 = vlaneseq
      %v1389 = vshrl.u32 %v1388, 7
      %v1390 = vsub.s32 0, %v1389
      %v1391 = vrot.slane %v1386, %v1390
      %v1393 = vadd.f32 %v1378, %v1391
      %v1394 = vadd.f32 %v1379, %v1391
      %v1395 = vadd.f32 %v1380, %v1391
      %v1396 = vadd.f32 %v1381, %v1391
      %v1397 = vadd.f32 %v1382, %v1391
      %v1398 = vadd.f32 %v1383, %v1391
      %v1399 = vadd.f32 %v1384, %v1391
      %v1400 = vadd.f32 %v1385, %v1391
      %vm1401 = vcmp.gt.f32.partialorder %v1393, 0.0
      %vm1402 = vcmp.gt.f32.partialorder %v1394, 0.0
      %vm1403 = vcmp.gt.f32.partialorder %v1395, 0.0
      %vm1404 = vcmp.gt.f32.partialorder %v1396, 0.0
      %vm1405 = vcmp.gt.f32.partialorder %v1397, 0.0
      %vm1406 = vcmp.gt.f32.partialorder %v1398, 0.0
      %vm1407 = vcmp.gt.f32.partialorder %v1399, 0.0
      %vm1408 = vcmp.gt.f32.partialorder %v1400, 0.0
      %v1409 = vmin.f32 %v1393, 0.0
      %v1410 = vmin.f32 %v1394, 0.0
      %v1411 = vmin.f32 %v1395, 0.0
      %v1412 = vmin.f32 %v1396, 0.0
      %v1413 = vmin.f32 %v1397, 0.0
      %v1414 = vmin.f32 %v1398, 0.0
      %v1415 = vmin.f32 %v1399, 0.0
      %v1416 = vmin.f32 %v1400, 0.0
      %v1417 = vmul.f32 %v1409, 1.442695
      %v1418 = vpow.pop %v1417
      %v1419 = vmul.f32 %v1410, 1.442695
      %v1420 = vpow.pop %v1419
      %v1421 = vmul.f32 %v1411, 1.442695
      %v1422 = vpow.pop %v1421
      %v1423 = vmul.f32 %v1412, 1.442695
      %v1424 = vpow.pop %v1423
      %v1425 = vmul.f32 %v1413, 1.442695
      %v1426 = vpow.pop %v1425
      %v1427 = vmul.f32 %v1414, 1.442695
      %v1428 = vpow.pop %v1427
      %v1429 = vmul.f32 %v1415, 1.442695
      %v1430 = vpow.pop %v1429
      %v1431 = vmul.f32 %v1416, 1.442695
      %v1432 = vpow.pop %v1431
      %v1433 = vsub.f32 %v1418, 1.0
      %v1434 = vsub.f32 %v1420, 1.0
      %v1435 = vsub.f32 %v1422, 1.0
      %v1436 = vsub.f32 %v1424, 1.0
      %v1437 = vsub.f32 %v1426, 1.0
      %v1438 = vsub.f32 %v1428, 1.0
      %v1439 = vsub.f32 %v1430, 1.0
      %v1440 = vsub.f32 %v1432, 1.0
      %v1441 = vsel %vm1401, %v1393, %v1433
      %v1442 = vsel %vm1402, %v1394, %v1434
      %v1443 = vsel %vm1403, %v1395, %v1435
      %v1444 = vsel %vm1404, %v1396, %v1436
      %v1445 = vsel %vm1405, %v1397, %v1437
      %v1446 = vsel %vm1406, %v1398, %v1438
      %v1447 = vsel %vm1407, %v1399, %v1439
      %v1448 = vsel %vm1408, %v1400, %v1440
      %1449 = vst.msk [vmem:[%s345] sm:$0xff] %vm480, %v1441
      %1450 = vst.msk [vmem:[%s345 + $0x8] sm:$0xff] %vm480, %v1442
      %1451 = vst.msk [vmem:[%s345 + $0x10] sm:$0xff] %vm480, %v1443
      %1452 = vst.msk [vmem:[%s345 + $0x18] sm:$0xff] %vm480, %v1444
      %1453 = vst.msk [vmem:[%s345 + $0x20] sm:$0xff] %vm480, %v1445
      %1454 = vst.msk [vmem:[%s345 + $0x28] sm:$0xff] %vm480, %v1446
      %1455 = vst.msk [vmem:[%s345 + $0x30] sm:$0xff] %vm480, %v1447
      %1456 = vst.msk [vmem:[%s345 + $0x38] sm:$0xff] %vm480, %v1448
      %s1457 = smul.u32 4, %s21
      %p1458 = scmp.lt.s32.totalorder %s20, 1
      %s1459 = scalar_select %p1458, %s20, 1
      %p1460 = scmp.lt.s32.totalorder %s1457, 15
      %s1461 = scalar_select %p1460, %s1457, 15
      %s1462 = smul.addr %s1461, 2
      %s1463 = smul.addr %s1459, 32
      %s1464 = sadd.s32 %s1462, %s1463
      %s1465 = smul.addr %s1464, 8
      %s1466 = scalar_lea.vmem %s5, %s1465
      // Predicated region
      $region41: #{_forward.5} parent=39 // pred_check
        %p1467 = pneg %p171
      $region42: #{_forward.5} parent=39 // pred_check_branch
        %1469 = sbr.rel (%p1467) target = $region44
      $region43: #{_forward.5} parent=39 // pred_region
        %s1470 = smul.u32 4, %s21
      $region44: #{_forward.5} parent=39 // pred_fallthru
        _
    $region40: #{_forward.5} parent=5 // pred_fallthru
      _
    %p1471 = scmp.le.s32.totalorder 2, %s11
    // Predicated region
    $region45: #{_forward.5} parent=5 // pred_check
      %p1472 = pneg %p1471
    $region46: #{_forward.5} parent=5 // pred_check_branch
      %1474 = sbr.rel (%p1472) target = $region48
    $region47: #{_forward.5} parent=5 // pred_region
      %s1475 = ssub.s32 %s11, 2
      // Predicated region
      $region49: #{_forward.5} parent=47 // pred_check
        %p1476 = pneg %p177
      $region50: #{_forward.5} parent=47 // pred_check_branch
        %1478 = sbr.rel (%p1476) target = $region52
      $region51: #{_forward.5} parent=47 // pred_region
        %s1479 = smul.u32 4, %s23
        %p1480 = scmp.lt.s32.totalorder %s22, 1
        %s1481 = scalar_select %p1480, %s22, 1
        %p1482 = scmp.lt.s32.totalorder %s1479, 15
        %s1483 = scalar_select %p1482, %s1479, 15
        %s1484 = smul.addr %s1483, 2
        %s1485 = smul.addr %s1481, 32
        %s1486 = sadd.s32 %s1484, %s1485
        %s1487 = smul.addr %s1486, 8
        %s1488 = scalar_lea.vmem %s5, %s1487
      $region52: #{_forward.5} parent=47 // pred_fallthru
        _
    $region48: #{_forward.5} parent=5 // pred_fallthru
      _
  $region6: #{_forward.5} parent=0 // loop_footer
    %s15 = sadd.s32 1, %s11
  $region7: #{_forward.5} parent=0 // loop_footer_branch
    %10 = sbr.rel target = $region3
  $region8: #{_forward.5} parent=0 // loop_exit
    _

</llo_original>
